<compile_context>
chip_gen: v6e
topology: v6e:2x2x1
jax: 0.10.0
libtpu: 0.0.40
codegen_flags: <defaults>
</compile_context>

<pallas_src>
import functools

import jax
import jax.numpy as jnp
from jax.experimental import pallas as pl
from jax.experimental.pallas import tpu as pltpu

_BN_EPS = 1e-5
_LANE = 128


def _round_up(n, m):
    return ((n + m - 1) // m) * m


# ----------------------------------------------------------------------------
# Fused Pallas kernel: entire encoder (+ optional decoder) in one body, with
# manual double-buffered weight prefetch from HBM.
# ----------------------------------------------------------------------------
def _fused_autohash_kernel(*refs, n_w_slabs, n_out, enc_layers, dec_layers,
                           matmul_dtype):
    # refs layout: [x, w_slab_0..k (HBM), affine (VMEM), out..., wbuf, sem]
    x_ref = refs[0]
    w_hbm = refs[1:1 + n_w_slabs]
    aff_ref = refs[1 + n_w_slabs]
    out_refs = refs[2 + n_w_slabs:2 + n_w_slabs + n_out]
    wbuf = refs[2 + n_w_slabs + n_out]          # (2, max_din, max_dout) bf16
    sem = refs[3 + n_w_slabs + n_out]           # DMA semaphores, shape (2,)

    layers = list(enc_layers) + list(dec_layers)
    n_layers = len(layers)
    copies = [None] * n_layers                  # static (trace-time) bookkeeping

    def start_fetch(i, slot):
        _, slab, off, din, dout, _ = layers[i]
        cp = pltpu.make_async_copy(
            w_hbm[slab].at[off:off + din, :],           # (din, dout) HBM view
            wbuf.at[slot, :din, :dout],                 # (din, dout) VMEM view
            sem.at[slot])
        cp.start()
        copies[i] = cp

    start_fetch(0, 0)                            # prime slot 0

    inv_b = 1.0 / x_ref.shape[0]
    h = x_ref[...].astype(jnp.float32)

    for i in range(n_layers):                    # statically unrolled (<= 12)
        slot = i & 1
        copies[i].wait()                         # weights for layer i ready
        if i + 1 < n_layers:
            start_fetch(i + 1, 1 - slot)         # prefetch next layer's weights

        kind, _, _, din, dout, aff_row = layers[i]
        w = wbuf[slot, :din, :dout]
        y = jnp.dot(h.astype(matmul_dtype), w,
                    preferred_element_type=jnp.float32)

        if kind == "bn":
            # NOTE: Linear bias omitted — exactly cancelled by the batch-mean
            # subtraction of training-mode BatchNorm1d.
            gamma = aff_ref[aff_row:aff_row + 1, :dout]
            beta = aff_ref[aff_row + 1:aff_row + 2, :dout]
            mean = jnp.sum(y, axis=0, keepdims=True) * inv_b
            var = jnp.maximum(
                jnp.sum(y * y, axis=0, keepdims=True) * inv_b - mean * mean,
                0.0)                              # clamp: avoid rsqrt of -eps
            scale = gamma * jax.lax.rsqrt(var + _BN_EPS)
            shift = beta - mean * scale
            h = jnp.tanh(y * scale + shift)
        else:                                     # "lin" or "lin_tanh" (has bias)
            bias = aff_ref[aff_row:aff_row + 1, :dout]
            y = y + bias
            h = jnp.tanh(y) if kind == "lin_tanh" else y

        if i == len(enc_layers) - 1:
            out_refs[-1][...] = h                 # encoded, written early

    if dec_layers:
        out_refs[0][...] = h                      # decoded (lane-padded)


# ----------------------------------------------------------------------------
# Parameter construction (mirrors PyTorch module shapes, f32 canonical form)
# ----------------------------------------------------------------------------
def init_params(key, input_dim, encoding_dim, initial_position=0.0):
    enc_dims = [input_dim, 512, 256, 128, 64, 32, encoding_dim]
    dec_dims = [encoding_dim, 32, 64, 128, 256, 512, input_dim]

    def make_stack(key, dims):
        layers = []
        for i in range(len(dims) - 1):
            din, dout = dims[i], dims[i + 1]
            key, kw, kb, kg, kbe = jax.random.split(key, 5)
            w = jax.random.normal(kw, (dout, din), jnp.float32) * 0.05
            b = jax.random.normal(kb, (dout,), jnp.float32) * 0.05
            is_last = i == len(dims) - 2
            if is_last:
                gamma = beta = None   # final Linear of each stack has no BN
            else:
                gamma = 1.0 + 0.1 * jax.random.normal(kg, (dout,), jnp.float32)
                beta = 0.1 * jax.random.normal(kbe, (dout,), jnp.float32)
            layers.append(dict(w=w, b=b, gamma=gamma, beta=beta))
        return key, layers

    key, encoder = make_stack(key, enc_dims)
    key, decoder = make_stack(key, dec_dims)
    # margin_position is a learnable parameter of the module but unused in
    # forward(); kept for shape parity.
    margin_position = jnp.full((encoding_dim,), initial_position, jnp.float32)
    return dict(encoder=encoder, decoder=decoder, margin_position=margin_position)


# ----------------------------------------------------------------------------
# One-time prep: pre-transpose, lane-pad to 128, cast to bf16, and pack into
# width-grouped weight slabs + one affine slab.
# ----------------------------------------------------------------------------
def prepare_fused_params(params, matmul_dtype=jnp.bfloat16):
    all_layers = params["encoder"] + params["decoder"]
    max_dout = max(_round_up(l["w"].shape[0], _LANE) for l in all_layers)
    max_din = max(_round_up(l["w"].shape[1], _LANE) for l in all_layers)

    slab_blocks = {}    # width -> list of (din_p, width) bf16 blocks
    slab_rows = {}      # width -> rows used so far
    aff_rows = []       # list of (1, max_dout) f32 rows

    def pad_vec(v):
        row = jnp.zeros((1, max_dout), jnp.float32)
        return row.at[0, :v.shape[0]].set(v.astype(jnp.float32))

    def add_stack(layers, final_tanh):
        metas = []
        for i, layer in enumerate(layers):
            w = layer["w"]                        # (Dout, Din)
            dout, din = w.shape
            din_p, dout_p = _round_up(din, _LANE), _round_up(dout, _LANE)
            wt = jnp.zeros((din_p, dout_p), matmul_dtype)
            wt = wt.at[:din, :dout].set(w.T.astype(matmul_dtype))
            row_off = slab_rows.get(dout_p, 0)
            slab_blocks.setdefault(dout_p, []).append(wt)
            slab_rows[dout_p] = row_off + din_p

            aff_row = len(aff_rows)
            if layer["gamma"] is not None:        # Linear (bias dropped) + BN + Tanh
                kind = "bn"
                aff_rows.append(pad_vec(layer["gamma"]))
                aff_rows.append(pad_vec(layer["beta"]))
            else:                                 # final Linear of the stack
                is_last = i == len(layers) - 1
                kind = "lin_tanh" if (is_last and final_tanh) else "lin"
                aff_rows.append(pad_vec(layer["b"]))
            metas.append((kind, dout_p, row_off, din_p, dout_p, aff_row))
        return metas

    enc_metas = add_stack(params["encoder"], final_tanh=False)
    dec_metas = add_stack(params["decoder"], final_tanh=True)

    widths = sorted(slab_blocks)
    width_to_idx = {w: i for i, w in enumerate(widths)}
    w_slabs = [jnp.concatenate(slab_blocks[w], axis=0) for w in widths]
    affine = jnp.concatenate(aff_rows, axis=0)

    def finalize(metas):
        return tuple((k, width_to_idx[wd], off, din, dout, ar)
                     for (k, wd, off, din, dout, ar) in metas)

    input_dim = params["encoder"][0]["w"].shape[1]
    encoding_dim = params["encoder"][-1]["w"].shape[0]
    return dict(
        enc_layers=finalize(enc_metas), dec_layers=finalize(dec_metas),
        w_slabs=w_slabs, affine=affine,
        max_din=max_din, max_dout=max_dout,
        input_dim=input_dim, encoding_dim=encoding_dim,
        input_dim_pad=_round_up(input_dim, _LANE),
        encoding_dim_pad=_round_up(encoding_dim, _LANE),
        matmul_dtype=matmul_dtype,
    )


# ----------------------------------------------------------------------------
# Forward pass (matches AutoHash_Model.forward) — single pallas_call.
# ----------------------------------------------------------------------------
def autohash_forward(fused, x, encode_only=False):
    B, input_dim = x.shape
    din_p = fused["input_dim_pad"]
    enc_p = fused["encoding_dim_pad"]
    x = x.astype(jnp.float32)
    if input_dim != din_p:
        x = jnp.pad(x, ((0, 0), (0, din_p - input_dim)))

    enc_layers = fused["enc_layers"]
    dec_layers = () if encode_only else fused["dec_layers"]
    w_slabs = fused["w_slabs"]        # bf16 weight slabs, stay in HBM (pl.ANY)
    affine = fused["affine"]          # small f32 affine slab -> VMEM

    vmem = pl.BlockSpec(memory_space=pltpu.MemorySpace.VMEM)
    hbm = pl.BlockSpec(memory_space=pl.ANY)

    if encode_only:
        out_shape = jax.ShapeDtypeStruct((B, enc_p), jnp.float32)
        out_specs = vmem
        n_out = 1
    else:
        out_shape = (jax.ShapeDtypeStruct((B, din_p), jnp.float32),
                     jax.ShapeDtypeStruct((B, enc_p), jnp.float32))
        out_specs = (vmem, vmem)
        n_out = 2

    kernel = functools.partial(
        _fused_autohash_kernel,
        n_w_slabs=len(w_slabs), n_out=n_out,
        enc_layers=enc_layers, dec_layers=dec_layers,
        matmul_dtype=fused["matmul_dtype"])

    result = pl.pallas_call(
        kernel,
        out_shape=out_shape,
        in_specs=[vmem] + [hbm] * len(w_slabs) + [vmem],
        out_specs=out_specs,
        scratch_shapes=[
            pltpu.VMEM((2, fused["max_din"], fused["max_dout"]),
                       fused["matmul_dtype"]),          # double-buffered weights
            pltpu.SemaphoreType.DMA((2,)),
        ],
        # Real working set is ~1.2 MB (2-slot weight buffer + small slabs).
        compiler_params=pltpu.CompilerParams(vmem_limit_bytes=8 * 1024 * 1024),
    )(x, *w_slabs, affine)

    # Downstream consumers could use the lane-padded slabs directly; we slice
    # here only to match the PyTorch output shapes.
    if encode_only:
        return result[:, :fused["encoding_dim"]]
    decoded_p, encoded_p = result
    return decoded_p[:, :input_dim], encoded_p[:, :fused["encoding_dim"]]


# ----------------------------------------------------------------------------
# Pure-JAX reference (full PyTorch semantics incl. bias in BN layers, with the
# same bf16 matmul-operand casts so the tolerance check stays tight).
# ----------------------------------------------------------------------------
def _reference_forward(params, x, matmul_dtype=jnp.bfloat16):
    def dot(a, w):
        return jnp.dot(a.astype(matmul_dtype), w.T.astype(matmul_dtype),
                       preferred_element_type=jnp.float32)

    def bn(y, g, b):
        m = jnp.mean(y, axis=0, keepdims=True)
        v = jnp.mean((y - m) ** 2, axis=0, keepdims=True)
        return (y - m) * jax.lax.rsqrt(v + _BN_EPS) * g + b

    h = x.astype(jnp.float32)
    enc = params["encoder"]
    for i, l in enumerate(enc):
        y = dot(h, l["w"]) + l["b"]
        h = jnp.tanh(bn(y, l["gamma"], l["beta"])) if i < len(enc) - 1 else y
    encoded = h
    h = encoded
    dec = params["decoder"]
    for i, l in enumerate(dec):
        y = dot(h, l["w"]) + l["b"]
        h = jnp.tanh(bn(y, l["gamma"], l["beta"])) if i < len(dec) - 1 else jnp.tanh(y)
    return h, encoded


if __name__ == "__main__":
    key = jax.random.PRNGKey(0)
    k_params, k_x = jax.random.split(key)

    B, INPUT_DIM, ENCODING_DIM = 8, 64, 16
    params = init_params(k_params, INPUT_DIM, ENCODING_DIM, initial_position=0.0)
    fused = prepare_fused_params(params, matmul_dtype=jnp.bfloat16)
    x = jax.random.normal(k_x, (B, INPUT_DIM), jnp.float32)

    decoded, encoded = autohash_forward(fused, x)
    decoded = jax.block_until_ready(decoded)
    encoded = jax.block_until_ready(encoded)

    encoded_only = jax.block_until_ready(autohash_forward(fused, x, encode_only=True))

    ref_dec, ref_enc = _reference_forward(params, x)
    assert decoded.shape == (B, INPUT_DIM) and encoded.shape == (B, ENCODING_DIM)
    assert jnp.allclose(encoded, ref_enc, atol=5e-3, rtol=5e-3)
    assert jnp.allclose(decoded, ref_dec, atol=5e-3, rtol=5e-3)
    assert jnp.allclose(encoded_only, encoded, atol=1e-5, rtol=1e-5)

    print("KERNEL_OK")
</pallas_src>

<mosaic_0001>
module attributes {stable_mosaic.version = 11 : i64} {
  func.func @_fused_autohash_kernel(%arg0: memref<8x128xf32, #tpu.memory_space<vmem>>, %arg1: memref<1536x128xbf16, #tpu.memory_space<any>>, %arg2: memref<640x256xbf16, #tpu.memory_space<any>>, %arg3: memref<384x512xbf16, #tpu.memory_space<any>>, %arg4: memref<22x512xf32, #tpu.memory_space<vmem>>, %arg5: memref<8x128xf32, #tpu.memory_space<vmem>>, %arg6: memref<8x128xf32, #tpu.memory_space<vmem>>, %arg7: memref<2x512x512xbf16, #tpu.memory_space<vmem>>, %arg8: memref<2x!tpu.dma_semaphore, #tpu.memory_space<semaphore_mem>>) attributes {dimension_semantics = [], scalar_prefetch = 0 : i64, scratch_operands = 2 : i64, tpu.core_type = #tpu.core_type<tc>} {
    %c0_i32 = arith.constant 0 : i32
    %c0_i32_0 = arith.constant 0 : i32
    %c0_i32_1 = arith.constant 0 : i32
    %c0_i32_2 = arith.constant 0 : i32
    %0 = tpu.memref_slice %arg3[%c0_i32_1, %c0_i32_2] : memref<384x512xbf16, #tpu.memory_space<any>> -> memref<128x512xbf16, #tpu.memory_space<any>>
    %c0_i32_3 = arith.constant 0 : i32
    %c0_i32_4 = arith.constant 0 : i32
    %1 = tpu.memref_slice %arg7[%c0_i32, %c0_i32_3, %c0_i32_4] : memref<2x512x512xbf16, #tpu.memory_space<vmem>> -> memref<1x128x512xbf16, #tpu.memory_space<vmem>>
    %2 = tpu.memref_squeeze %1 : memref<1x128x512xbf16, #tpu.memory_space<vmem>> -> memref<128x512xbf16, #tpu.memory_space<vmem>>
    %3 = tpu.memref_slice %arg8[%c0_i32_0] : memref<2x!tpu.dma_semaphore, #tpu.memory_space<semaphore_mem>> -> memref<1x!tpu.dma_semaphore, #tpu.memory_space<semaphore_mem>>
    %4 = tpu.memref_squeeze %3 : memref<1x!tpu.dma_semaphore, #tpu.memory_space<semaphore_mem>> -> memref<!tpu.dma_semaphore, #tpu.memory_space<semaphore_mem>>
    tpu.enqueue_dma source(%0 : memref<128x512xbf16, #tpu.memory_space<any>>) target(%2 : memref<128x512xbf16, #tpu.memory_space<vmem>>) target_semaphore(%4 : memref<!tpu.dma_semaphore, #tpu.memory_space<semaphore_mem>>)
    %c0 = arith.constant 0 : index
    %c0_5 = arith.constant 0 : index
    %5 = vector.load %arg0[%c0, %c0_5] : memref<8x128xf32, #tpu.memory_space<vmem>>, vector<8x128xf32>
    %c0_i32_6 = arith.constant 0 : i32
    %c0_i32_7 = arith.constant 0 : i32
    %c0_i32_8 = arith.constant 0 : i32
    %c0_i32_9 = arith.constant 0 : i32
    %6 = tpu.memref_slice %arg3[%c0_i32_8, %c0_i32_9] : memref<384x512xbf16, #tpu.memory_space<any>> -> memref<128x512xbf16, #tpu.memory_space<any>>
    %c0_i32_10 = arith.constant 0 : i32
    %c0_i32_11 = arith.constant 0 : i32
    %7 = tpu.memref_slice %arg7[%c0_i32_6, %c0_i32_10, %c0_i32_11] : memref<2x512x512xbf16, #tpu.memory_space<vmem>> -> memref<1x128x512xbf16, #tpu.memory_space<vmem>>
    %8 = tpu.memref_squeeze %7 : memref<1x128x512xbf16, #tpu.memory_space<vmem>> -> memref<128x512xbf16, #tpu.memory_space<vmem>>
    %9 = tpu.memref_slice %arg8[%c0_i32_7] : memref<2x!tpu.dma_semaphore, #tpu.memory_space<semaphore_mem>> -> memref<1x!tpu.dma_semaphore, #tpu.memory_space<semaphore_mem>>
    %10 = tpu.memref_squeeze %9 : memref<1x!tpu.dma_semaphore, #tpu.memory_space<semaphore_mem>> -> memref<!tpu.dma_semaphore, #tpu.memory_space<semaphore_mem>>
    tpu.wait_dma2 semaphore(%10 : memref<!tpu.dma_semaphore, #tpu.memory_space<semaphore_mem>>) src(%6 : memref<128x512xbf16, #tpu.memory_space<any>>) dst(%8 : memref<128x512xbf16, #tpu.memory_space<vmem>>)
    %c1_i32 = arith.constant 1 : i32
    %c1_i32_12 = arith.constant 1 : i32
    %c0_i32_13 = arith.constant 0 : i32
    %c0_i32_14 = arith.constant 0 : i32
    %11 = tpu.memref_slice %arg2[%c0_i32_13, %c0_i32_14] : memref<640x256xbf16, #tpu.memory_space<any>> -> memref<512x256xbf16, #tpu.memory_space<any>>
    %c0_i32_15 = arith.constant 0 : i32
    %c0_i32_16 = arith.constant 0 : i32
    %12 = tpu.memref_slice %arg7[%c1_i32, %c0_i32_15, %c0_i32_16] : memref<2x512x512xbf16, #tpu.memory_space<vmem>> -> memref<1x512x256xbf16, #tpu.memory_space<vmem>>
    %13 = tpu.memref_squeeze %12 : memref<1x512x256xbf16, #tpu.memory_space<vmem>> -> memref<512x256xbf16, #tpu.memory_space<vmem>>
    %14 = tpu.memref_slice %arg8[%c1_i32_12] : memref<2x!tpu.dma_semaphore, #tpu.memory_space<semaphore_mem>> -> memref<1x!tpu.dma_semaphore, #tpu.memory_space<semaphore_mem>>
    %15 = tpu.memref_squeeze %14 : memref<1x!tpu.dma_semaphore, #tpu.memory_space<semaphore_mem>> -> memref<!tpu.dma_semaphore, #tpu.memory_space<semaphore_mem>>
    tpu.enqueue_dma source(%11 : memref<512x256xbf16, #tpu.memory_space<any>>) target(%13 : memref<512x256xbf16, #tpu.memory_space<vmem>>) target_semaphore(%15 : memref<!tpu.dma_semaphore, #tpu.memory_space<semaphore_mem>>)
    %c0_17 = arith.constant 0 : index
    %c0_18 = arith.constant 0 : index
    %c0_19 = arith.constant 0 : index
    %16 = vector.load %arg7[%c0_17, %c0_18, %c0_19] : memref<2x512x512xbf16, #tpu.memory_space<vmem>>, vector<1x128x512xbf16>
    %17 = vector.shape_cast %16 : vector<1x128x512xbf16> to vector<128x512xbf16>
    %18 = arith.truncf %5 : vector<8x128xf32> to vector<8x128xbf16>
    %cst = arith.constant dense<0.000000e+00> : vector<8x512xf32>
    %19 = tpu.matmul %18, %17, %cst {dimension_numbers = #tpu.dot_dimension_numbers<[1], [0], [0], [1], [0, 0, 1, 1], [], []>} : vector<8x128xbf16>, vector<128x512xbf16>, vector<8x512xf32> -> vector<8x512xf32>
    %c0_20 = arith.constant 0 : index
    %c0_21 = arith.constant 0 : index
    %20 = vector.load %arg4[%c0_20, %c0_21] : memref<22x512xf32, #tpu.memory_space<vmem>>, vector<1x512xf32>
    %c1 = arith.constant 1 : index
    %c0_22 = arith.constant 0 : index
    %21 = vector.load %arg4[%c1, %c0_22] : memref<22x512xf32, #tpu.memory_space<vmem>>, vector<1x512xf32>
    %cst_23 = arith.constant dense<0.000000e+00> : vector<512xf32>
    %22 = vector.multi_reduction <add>, %19, %cst_23 [0] : vector<8x512xf32> to vector<512xf32>
    %23 = vector.shape_cast %22 : vector<512xf32> to vector<1x512xf32>
    %cst_24 = arith.constant 1.250000e-01 : f32
    %24 = vector.broadcast %cst_24 : f32 to vector<1x512xf32>
    %25 = arith.mulf %23, %24 : vector<1x512xf32>
    %26 = arith.mulf %19, %19 : vector<8x512xf32>
    %cst_25 = arith.constant dense<0.000000e+00> : vector<512xf32>
    %27 = vector.multi_reduction <add>, %26, %cst_25 [0] : vector<8x512xf32> to vector<512xf32>
    %28 = vector.shape_cast %27 : vector<512xf32> to vector<1x512xf32>
    %cst_26 = arith.constant 1.250000e-01 : f32
    %29 = vector.broadcast %cst_26 : f32 to vector<1x512xf32>
    %30 = arith.mulf %28, %29 : vector<1x512xf32>
    %31 = arith.mulf %25, %25 : vector<1x512xf32>
    %32 = arith.subf %30, %31 : vector<1x512xf32>
    %cst_27 = arith.constant 0.000000e+00 : f32
    %33 = vector.broadcast %cst_27 : f32 to vector<1x512xf32>
    %34 = arith.maximumf %32, %33 : vector<1x512xf32>
    %cst_28 = arith.constant 9.99999974E-6 : f32
    %35 = vector.broadcast %cst_28 : f32 to vector<1x512xf32>
    %36 = arith.addf %34, %35 : vector<1x512xf32>
    %37 = math.rsqrt %36 : vector<1x512xf32>
    %38 = arith.mulf %20, %37 : vector<1x512xf32>
    %39 = arith.mulf %25, %38 : vector<1x512xf32>
    %40 = arith.subf %21, %39 : vector<1x512xf32>
    %41 = vector.broadcast %38 : vector<1x512xf32> to vector<8x512xf32>
    %42 = arith.mulf %19, %41 : vector<8x512xf32>
    %43 = vector.broadcast %40 : vector<1x512xf32> to vector<8x512xf32>
    %44 = arith.addf %42, %43 : vector<8x512xf32>
    %45 = math.tanh %44 : vector<8x512xf32>
    %c1_i32_29 = arith.constant 1 : i32
    %c1_i32_30 = arith.constant 1 : i32
    %c0_i32_31 = arith.constant 0 : i32
    %c0_i32_32 = arith.constant 0 : i32
    %46 = tpu.memref_slice %arg2[%c0_i32_31, %c0_i32_32] : memref<640x256xbf16, #tpu.memory_space<any>> -> memref<512x256xbf16, #tpu.memory_space<any>>
    %c0_i32_33 = arith.constant 0 : i32
    %c0_i32_34 = arith.constant 0 : i32
    %47 = tpu.memref_slice %arg7[%c1_i32_29, %c0_i32_33, %c0_i32_34] : memref<2x512x512xbf16, #tpu.memory_space<vmem>> -> memref<1x512x256xbf16, #tpu.memory_space<vmem>>
    %48 = tpu.memref_squeeze %47 : memref<1x512x256xbf16, #tpu.memory_space<vmem>> -> memref<512x256xbf16, #tpu.memory_space<vmem>>
    %49 = tpu.memref_slice %arg8[%c1_i32_30] : memref<2x!tpu.dma_semaphore, #tpu.memory_space<semaphore_mem>> -> memref<1x!tpu.dma_semaphore, #tpu.memory_space<semaphore_mem>>
    %50 = tpu.memref_squeeze %49 : memref<1x!tpu.dma_semaphore, #tpu.memory_space<semaphore_mem>> -> memref<!tpu.dma_semaphore, #tpu.memory_space<semaphore_mem>>
    tpu.wait_dma2 semaphore(%50 : memref<!tpu.dma_semaphore, #tpu.memory_space<semaphore_mem>>) src(%46 : memref<512x256xbf16, #tpu.memory_space<any>>) dst(%48 : memref<512x256xbf16, #tpu.memory_space<vmem>>)
    %c0_i32_35 = arith.constant 0 : i32
    %c0_i32_36 = arith.constant 0 : i32
    %c0_i32_37 = arith.constant 0 : i32
    %c0_i32_38 = arith.constant 0 : i32
    %51 = tpu.memref_slice %arg1[%c0_i32_37, %c0_i32_38] : memref<1536x128xbf16, #tpu.memory_space<any>> -> memref<256x128xbf16, #tpu.memory_space<any>>
    %c0_i32_39 = arith.constant 0 : i32
    %c0_i32_40 = arith.constant 0 : i32
    %52 = tpu.memref_slice %arg7[%c0_i32_35, %c0_i32_39, %c0_i32_40] : memref<2x512x512xbf16, #tpu.memory_space<vmem>> -> memref<1x256x128xbf16, #tpu.memory_space<vmem>>
    %53 = tpu.memref_squeeze %52 : memref<1x256x128xbf16, #tpu.memory_space<vmem>> -> memref<256x128xbf16, #tpu.memory_space<vmem>>
    %54 = tpu.memref_slice %arg8[%c0_i32_36] : memref<2x!tpu.dma_semaphore, #tpu.memory_space<semaphore_mem>> -> memref<1x!tpu.dma_semaphore, #tpu.memory_space<semaphore_mem>>
    %55 = tpu.memref_squeeze %54 : memref<1x!tpu.dma_semaphore, #tpu.memory_space<semaphore_mem>> -> memref<!tpu.dma_semaphore, #tpu.memory_space<semaphore_mem>>
    tpu.enqueue_dma source(%51 : memref<256x128xbf16, #tpu.memory_space<any>>) target(%53 : memref<256x128xbf16, #tpu.memory_space<vmem>>) target_semaphore(%55 : memref<!tpu.dma_semaphore, #tpu.memory_space<semaphore_mem>>)
    %c1_41 = arith.constant 1 : index
    %c0_42 = arith.constant 0 : index
    %c0_43 = arith.constant 0 : index
    %56 = vector.load %arg7[%c1_41, %c0_42, %c0_43] : memref<2x512x512xbf16, #tpu.memory_space<vmem>>, vector<1x512x256xbf16>
    %57 = vector.shape_cast %56 : vector<1x512x256xbf16> to vector<512x256xbf16>
    %58 = arith.truncf %45 : vector<8x512xf32> to vector<8x512xbf16>
    %cst_44 = arith.constant dense<0.000000e+00> : vector<8x256xf32>
    %59 = tpu.matmul %58, %57, %cst_44 {dimension_numbers = #tpu.dot_dimension_numbers<[1], [0], [0], [1], [0, 0, 1, 1], [], []>} : vector<8x512xbf16>, vector<512x256xbf16>, vector<8x256xf32> -> vector<8x256xf32>
    %c2 = arith.constant 2 : index
    %c0_45 = arith.constant 0 : index
    %60 = vector.load %arg4[%c2, %c0_45] : memref<22x512xf32, #tpu.memory_space<vmem>>, vector<1x256xf32>
    %c3 = arith.constant 3 : index
    %c0_46 = arith.constant 0 : index
    %61 = vector.load %arg4[%c3, %c0_46] : memref<22x512xf32, #tpu.memory_space<vmem>>, vector<1x256xf32>
    %cst_47 = arith.constant dense<0.000000e+00> : vector<256xf32>
    %62 = vector.multi_reduction <add>, %59, %cst_47 [0] : vector<8x256xf32> to vector<256xf32>
    %63 = vector.shape_cast %62 : vector<256xf32> to vector<1x256xf32>
    %cst_48 = arith.constant 1.250000e-01 : f32
    %64 = vector.broadcast %cst_48 : f32 to vector<1x256xf32>
    %65 = arith.mulf %63, %64 : vector<1x256xf32>
    %66 = arith.mulf %59, %59 : vector<8x256xf32>
    %cst_49 = arith.constant dense<0.000000e+00> : vector<256xf32>
    %67 = vector.multi_reduction <add>, %66, %cst_49 [0] : vector<8x256xf32> to vector<256xf32>
    %68 = vector.shape_cast %67 : vector<256xf32> to vector<1x256xf32>
    %cst_50 = arith.constant 1.250000e-01 : f32
    %69 = vector.broadcast %cst_50 : f32 to vector<1x256xf32>
    %70 = arith.mulf %68, %69 : vector<1x256xf32>
    %71 = arith.mulf %65, %65 : vector<1x256xf32>
    %72 = arith.subf %70, %71 : vector<1x256xf32>
    %cst_51 = arith.constant 0.000000e+00 : f32
    %73 = vector.broadcast %cst_51 : f32 to vector<1x256xf32>
    %74 = arith.maximumf %72, %73 : vector<1x256xf32>
    %cst_52 = arith.constant 9.99999974E-6 : f32
    %75 = vector.broadcast %cst_52 : f32 to vector<1x256xf32>
    %76 = arith.addf %74, %75 : vector<1x256xf32>
    %77 = math.rsqrt %76 : vector<1x256xf32>
    %78 = arith.mulf %60, %77 : vector<1x256xf32>
    %79 = arith.mulf %65, %78 : vector<1x256xf32>
    %80 = arith.subf %61, %79 : vector<1x256xf32>
    %81 = vector.broadcast %78 : vector<1x256xf32> to vector<8x256xf32>
    %82 = arith.mulf %59, %81 : vector<8x256xf32>
    %83 = vector.broadcast %80 : vector<1x256xf32> to vector<8x256xf32>
    %84 = arith.addf %82, %83 : vector<8x256xf32>
    %85 = math.tanh %84 : vector<8x256xf32>
    %c0_i32_53 = arith.constant 0 : i32
    %c0_i32_54 = arith.constant 0 : i32
    %c0_i32_55 = arith.constant 0 : i32
    %c0_i32_56 = arith.constant 0 : i32
    %86 = tpu.memref_slice %arg1[%c0_i32_55, %c0_i32_56] : memref<1536x128xbf16, #tpu.memory_space<any>> -> memref<256x128xbf16, #tpu.memory_space<any>>
    %c0_i32_57 = arith.constant 0 : i32
    %c0_i32_58 = arith.constant 0 : i32
    %87 = tpu.memref_slice %arg7[%c0_i32_53, %c0_i32_57, %c0_i32_58] : memref<2x512x512xbf16, #tpu.memory_space<vmem>> -> memref<1x256x128xbf16, #tpu.memory_space<vmem>>
    %88 = tpu.memref_squeeze %87 : memref<1x256x128xbf16, #tpu.memory_space<vmem>> -> memref<256x128xbf16, #tpu.memory_space<vmem>>
    %89 = tpu.memref_slice %arg8[%c0_i32_54] : memref<2x!tpu.dma_semaphore, #tpu.memory_space<semaphore_mem>> -> memref<1x!tpu.dma_semaphore, #tpu.memory_space<semaphore_mem>>
    %90 = tpu.memref_squeeze %89 : memref<1x!tpu.dma_semaphore, #tpu.memory_space<semaphore_mem>> -> memref<!tpu.dma_semaphore, #tpu.memory_space<semaphore_mem>>
    tpu.wait_dma2 semaphore(%90 : memref<!tpu.dma_semaphore, #tpu.memory_space<semaphore_mem>>) src(%86 : memref<256x128xbf16, #tpu.memory_space<any>>) dst(%88 : memref<256x128xbf16, #tpu.memory_space<vmem>>)
    %c1_i32_59 = arith.constant 1 : i32
    %c1_i32_60 = arith.constant 1 : i32
    %c256_i32 = arith.constant 256 : i32
    %c0_i32_61 = arith.constant 0 : i32
    %91 = tpu.memref_slice %arg1[%c256_i32, %c0_i32_61] : memref<1536x128xbf16, #tpu.memory_space<any>> -> memref<128x128xbf16, #tpu.memory_space<any>>
    %c0_i32_62 = arith.constant 0 : i32
    %c0_i32_63 = arith.constant 0 : i32
    %92 = tpu.memref_slice %arg7[%c1_i32_59, %c0_i32_62, %c0_i32_63] : memref<2x512x512xbf16, #tpu.memory_space<vmem>> -> memref<1x128x128xbf16, #tpu.memory_space<vmem>>
    %93 = tpu.memref_squeeze %92 : memref<1x128x128xbf16, #tpu.memory_space<vmem>> -> memref<128x128xbf16, #tpu.memory_space<vmem>>
    %94 = tpu.memref_slice %arg8[%c1_i32_60] : memref<2x!tpu.dma_semaphore, #tpu.memory_space<semaphore_mem>> -> memref<1x!tpu.dma_semaphore, #tpu.memory_space<semaphore_mem>>
    %95 = tpu.memref_squeeze %94 : memref<1x!tpu.dma_semaphore, #tpu.memory_space<semaphore_mem>> -> memref<!tpu.dma_semaphore, #tpu.memory_space<semaphore_mem>>
    tpu.enqueue_dma source(%91 : memref<128x128xbf16, #tpu.memory_space<any>>) target(%93 : memref<128x128xbf16, #tpu.memory_space<vmem>>) target_semaphore(%95 : memref<!tpu.dma_semaphore, #tpu.memory_space<semaphore_mem>>)
    %c0_64 = arith.constant 0 : index
    %c0_65 = arith.constant 0 : index
    %c0_66 = arith.constant 0 : index
    %96 = vector.load %arg7[%c0_64, %c0_65, %c0_66] : memref<2x512x512xbf16, #tpu.memory_space<vmem>>, vector<1x256x128xbf16>
    %97 = vector.shape_cast %96 : vector<1x256x128xbf16> to vector<256x128xbf16>
    %98 = arith.truncf %85 : vector<8x256xf32> to vector<8x256xbf16>
    %cst_67 = arith.constant dense<0.000000e+00> : vector<8x128xf32>
    %99 = tpu.matmul %98, %97, %cst_67 {dimension_numbers = #tpu.dot_dimension_numbers<[1], [0], [0], [1], [0, 0, 1, 1], [], []>} : vector<8x256xbf16>, vector<256x128xbf16>, vector<8x128xf32> -> vector<8x128xf32>
    %c4 = arith.constant 4 : index
    %c0_68 = arith.constant 0 : index
    %100 = vector.load %arg4[%c4, %c0_68] : memref<22x512xf32, #tpu.memory_space<vmem>>, vector<1x128xf32>
    %c5 = arith.constant 5 : index
    %c0_69 = arith.constant 0 : index
    %101 = vector.load %arg4[%c5, %c0_69] : memref<22x512xf32, #tpu.memory_space<vmem>>, vector<1x128xf32>
    %cst_70 = arith.constant dense<0.000000e+00> : vector<128xf32>
    %102 = vector.multi_reduction <add>, %99, %cst_70 [0] : vector<8x128xf32> to vector<128xf32>
    %103 = vector.shape_cast %102 : vector<128xf32> to vector<1x128xf32>
    %cst_71 = arith.constant 1.250000e-01 : f32
    %104 = vector.broadcast %cst_71 : f32 to vector<1x128xf32>
    %105 = arith.mulf %103, %104 : vector<1x128xf32>
    %106 = arith.mulf %99, %99 : vector<8x128xf32>
    %cst_72 = arith.constant dense<0.000000e+00> : vector<128xf32>
    %107 = vector.multi_reduction <add>, %106, %cst_72 [0] : vector<8x128xf32> to vector<128xf32>
    %108 = vector.shape_cast %107 : vector<128xf32> to vector<1x128xf32>
    %cst_73 = arith.constant 1.250000e-01 : f32
    %109 = vector.broadcast %cst_73 : f32 to vector<1x128xf32>
    %110 = arith.mulf %108, %109 : vector<1x128xf32>
    %111 = arith.mulf %105, %105 : vector<1x128xf32>
    %112 = arith.subf %110, %111 : vector<1x128xf32>
    %cst_74 = arith.constant 0.000000e+00 : f32
    %113 = vector.broadcast %cst_74 : f32 to vector<1x128xf32>
    %114 = arith.maximumf %112, %113 : vector<1x128xf32>
    %cst_75 = arith.constant 9.99999974E-6 : f32
    %115 = vector.broadcast %cst_75 : f32 to vector<1x128xf32>
    %116 = arith.addf %114, %115 : vector<1x128xf32>
    %117 = math.rsqrt %116 : vector<1x128xf32>
    %118 = arith.mulf %100, %117 : vector<1x128xf32>
    %119 = arith.mulf %105, %118 : vector<1x128xf32>
    %120 = arith.subf %101, %119 : vector<1x128xf32>
    %121 = vector.broadcast %118 : vector<1x128xf32> to vector<8x128xf32>
    %122 = arith.mulf %99, %121 : vector<8x128xf32>
    %123 = vector.broadcast %120 : vector<1x128xf32> to vector<8x128xf32>
    %124 = arith.addf %122, %123 : vector<8x128xf32>
    %125 = math.tanh %124 : vector<8x128xf32>
    %c1_i32_76 = arith.constant 1 : i32
    %c1_i32_77 = arith.constant 1 : i32
    %c256_i32_78 = arith.constant 256 : i32
    %c0_i32_79 = arith.constant 0 : i32
    %126 = tpu.memref_slice %arg1[%c256_i32_78, %c0_i32_79] : memref<1536x128xbf16, #tpu.memory_space<any>> -> memref<128x128xbf16, #tpu.memory_space<any>>
    %c0_i32_80 = arith.constant 0 : i32
    %c0_i32_81 = arith.constant 0 : i32
    %127 = tpu.memref_slice %arg7[%c1_i32_76, %c0_i32_80, %c0_i32_81] : memref<2x512x512xbf16, #tpu.memory_space<vmem>> -> memref<1x128x128xbf16, #tpu.memory_space<vmem>>
    %128 = tpu.memref_squeeze %127 : memref<1x128x128xbf16, #tpu.memory_space<vmem>> -> memref<128x128xbf16, #tpu.memory_space<vmem>>
    %129 = tpu.memref_slice %arg8[%c1_i32_77] : memref<2x!tpu.dma_semaphore, #tpu.memory_space<semaphore_mem>> -> memref<1x!tpu.dma_semaphore, #tpu.memory_space<semaphore_mem>>
    %130 = tpu.memref_squeeze %129 : memref<1x!tpu.dma_semaphore, #tpu.memory_space<semaphore_mem>> -> memref<!tpu.dma_semaphore, #tpu.memory_space<semaphore_mem>>
    tpu.wait_dma2 semaphore(%130 : memref<!tpu.dma_semaphore, #tpu.memory_space<semaphore_mem>>) src(%126 : memref<128x128xbf16, #tpu.memory_space<any>>) dst(%128 : memref<128x128xbf16, #tpu.memory_space<vmem>>)
    %c0_i32_82 = arith.constant 0 : i32
    %c0_i32_83 = arith.constant 0 : i32
    %c384_i32 = arith.constant 384 : i32
    %c0_i32_84 = arith.constant 0 : i32
    %131 = tpu.memref_slice %arg1[%c384_i32, %c0_i32_84] : memref<1536x128xbf16, #tpu.memory_space<any>> -> memref<128x128xbf16, #tpu.memory_space<any>>
    %c0_i32_85 = arith.constant 0 : i32
    %c0_i32_86 = arith.constant 0 : i32
    %132 = tpu.memref_slice %arg7[%c0_i32_82, %c0_i32_85, %c0_i32_86] : memref<2x512x512xbf16, #tpu.memory_space<vmem>> -> memref<1x128x128xbf16, #tpu.memory_space<vmem>>
    %133 = tpu.memref_squeeze %132 : memref<1x128x128xbf16, #tpu.memory_space<vmem>> -> memref<128x128xbf16, #tpu.memory_space<vmem>>
    %134 = tpu.memref_slice %arg8[%c0_i32_83] : memref<2x!tpu.dma_semaphore, #tpu.memory_space<semaphore_mem>> -> memref<1x!tpu.dma_semaphore, #tpu.memory_space<semaphore_mem>>
    %135 = tpu.memref_squeeze %134 : memref<1x!tpu.dma_semaphore, #tpu.memory_space<semaphore_mem>> -> memref<!tpu.dma_semaphore, #tpu.memory_space<semaphore_mem>>
    tpu.enqueue_dma source(%131 : memref<128x128xbf16, #tpu.memory_space<any>>) target(%133 : memref<128x128xbf16, #tpu.memory_space<vmem>>) target_semaphore(%135 : memref<!tpu.dma_semaphore, #tpu.memory_space<semaphore_mem>>)
    %c1_87 = arith.constant 1 : index
    %c0_88 = arith.constant 0 : index
    %c0_89 = arith.constant 0 : index
    %136 = vector.load %arg7[%c1_87, %c0_88, %c0_89] : memref<2x512x512xbf16, #tpu.memory_space<vmem>>, vector<1x128x128xbf16>
    %137 = vector.shape_cast %136 : vector<1x128x128xbf16> to vector<128x128xbf16>
    %138 = arith.truncf %125 : vector<8x128xf32> to vector<8x128xbf16>
    %cst_90 = arith.constant dense<0.000000e+00> : vector<8x128xf32>
    %139 = tpu.matmul %138, %137, %cst_90 {dimension_numbers = #tpu.dot_dimension_numbers<[1], [0], [0], [1], [0, 0, 1, 1], [], []>} : vector<8x128xbf16>, vector<128x128xbf16>, vector<8x128xf32> -> vector<8x128xf32>
    %c6 = arith.constant 6 : index
    %c0_91 = arith.constant 0 : index
    %140 = vector.load %arg4[%c6, %c0_91] : memref<22x512xf32, #tpu.memory_space<vmem>>, vector<1x128xf32>
    %c7 = arith.constant 7 : index
    %c0_92 = arith.constant 0 : index
    %141 = vector.load %arg4[%c7, %c0_92] : memref<22x512xf32, #tpu.memory_space<vmem>>, vector<1x128xf32>
    %cst_93 = arith.constant dense<0.000000e+00> : vector<128xf32>
    %142 = vector.multi_reduction <add>, %139, %cst_93 [0] : vector<8x128xf32> to vector<128xf32>
    %143 = vector.shape_cast %142 : vector<128xf32> to vector<1x128xf32>
    %cst_94 = arith.constant 1.250000e-01 : f32
    %144 = vector.broadcast %cst_94 : f32 to vector<1x128xf32>
    %145 = arith.mulf %143, %144 : vector<1x128xf32>
    %146 = arith.mulf %139, %139 : vector<8x128xf32>
    %cst_95 = arith.constant dense<0.000000e+00> : vector<128xf32>
    %147 = vector.multi_reduction <add>, %146, %cst_95 [0] : vector<8x128xf32> to vector<128xf32>
    %148 = vector.shape_cast %147 : vector<128xf32> to vector<1x128xf32>
    %cst_96 = arith.constant 1.250000e-01 : f32
    %149 = vector.broadcast %cst_96 : f32 to vector<1x128xf32>
    %150 = arith.mulf %148, %149 : vector<1x128xf32>
    %151 = arith.mulf %145, %145 : vector<1x128xf32>
    %152 = arith.subf %150, %151 : vector<1x128xf32>
    %cst_97 = arith.constant 0.000000e+00 : f32
    %153 = vector.broadcast %cst_97 : f32 to vector<1x128xf32>
    %154 = arith.maximumf %152, %153 : vector<1x128xf32>
    %cst_98 = arith.constant 9.99999974E-6 : f32
    %155 = vector.broadcast %cst_98 : f32 to vector<1x128xf32>
    %156 = arith.addf %154, %155 : vector<1x128xf32>
    %157 = math.rsqrt %156 : vector<1x128xf32>
    %158 = arith.mulf %140, %157 : vector<1x128xf32>
    %159 = arith.mulf %145, %158 : vector<1x128xf32>
    %160 = arith.subf %141, %159 : vector<1x128xf32>
    %161 = vector.broadcast %158 : vector<1x128xf32> to vector<8x128xf32>
    %162 = arith.mulf %139, %161 : vector<8x128xf32>
    %163 = vector.broadcast %160 : vector<1x128xf32> to vector<8x128xf32>
    %164 = arith.addf %162, %163 : vector<8x128xf32>
    %165 = math.tanh %164 : vector<8x128xf32>
    %c0_i32_99 = arith.constant 0 : i32
    %c0_i32_100 = arith.constant 0 : i32
    %c384_i32_101 = arith.constant 384 : i32
    %c0_i32_102 = arith.constant 0 : i32
    %166 = tpu.memref_slice %arg1[%c384_i32_101, %c0_i32_102] : memref<1536x128xbf16, #tpu.memory_space<any>> -> memref<128x128xbf16, #tpu.memory_space<any>>
    %c0_i32_103 = arith.constant 0 : i32
    %c0_i32_104 = arith.constant 0 : i32
    %167 = tpu.memref_slice %arg7[%c0_i32_99, %c0_i32_103, %c0_i32_104] : memref<2x512x512xbf16, #tpu.memory_space<vmem>> -> memref<1x128x128xbf16, #tpu.memory_space<vmem>>
    %168 = tpu.memref_squeeze %167 : memref<1x128x128xbf16, #tpu.memory_space<vmem>> -> memref<128x128xbf16, #tpu.memory_space<vmem>>
    %169 = tpu.memref_slice %arg8[%c0_i32_100] : memref<2x!tpu.dma_semaphore, #tpu.memory_space<semaphore_mem>> -> memref<1x!tpu.dma_semaphore, #tpu.memory_space<semaphore_mem>>
    %170 = tpu.memref_squeeze %169 : memref<1x!tpu.dma_semaphore, #tpu.memory_space<semaphore_mem>> -> memref<!tpu.dma_semaphore, #tpu.memory_space<semaphore_mem>>
    tpu.wait_dma2 semaphore(%170 : memref<!tpu.dma_semaphore, #tpu.memory_space<semaphore_mem>>) src(%166 : memref<128x128xbf16, #tpu.memory_space<any>>) dst(%168 : memref<128x128xbf16, #tpu.memory_space<vmem>>)
    %c1_i32_105 = arith.constant 1 : i32
    %c1_i32_106 = arith.constant 1 : i32
    %c512_i32 = arith.constant 512 : i32
    %c0_i32_107 = arith.constant 0 : i32
    %171 = tpu.memref_slice %arg1[%c512_i32, %c0_i32_107] : memref<1536x128xbf16, #tpu.memory_space<any>> -> memref<128x128xbf16, #tpu.memory_space<any>>
    %c0_i32_108 = arith.constant 0 : i32
    %c0_i32_109 = arith.constant 0 : i32
    %172 = tpu.memref_slice %arg7[%c1_i32_105, %c0_i32_108, %c0_i32_109] : memref<2x512x512xbf16, #tpu.memory_space<vmem>> -> memref<1x128x128xbf16, #tpu.memory_space<vmem>>
    %173 = tpu.memref_squeeze %172 : memref<1x128x128xbf16, #tpu.memory_space<vmem>> -> memref<128x128xbf16, #tpu.memory_space<vmem>>
    %174 = tpu.memref_slice %arg8[%c1_i32_106] : memref<2x!tpu.dma_semaphore, #tpu.memory_space<semaphore_mem>> -> memref<1x!tpu.dma_semaphore, #tpu.memory_space<semaphore_mem>>
    %175 = tpu.memref_squeeze %174 : memref<1x!tpu.dma_semaphore, #tpu.memory_space<semaphore_mem>> -> memref<!tpu.dma_semaphore, #tpu.memory_space<semaphore_mem>>
    tpu.enqueue_dma source(%171 : memref<128x128xbf16, #tpu.memory_space<any>>) target(%173 : memref<128x128xbf16, #tpu.memory_space<vmem>>) target_semaphore(%175 : memref<!tpu.dma_semaphore, #tpu.memory_space<semaphore_mem>>)
    %c0_110 = arith.constant 0 : index
    %c0_111 = arith.constant 0 : index
    %c0_112 = arith.constant 0 : index
    %176 = vector.load %arg7[%c0_110, %c0_111, %c0_112] : memref<2x512x512xbf16, #tpu.memory_space<vmem>>, vector<1x128x128xbf16>
    %177 = vector.shape_cast %176 : vector<1x128x128xbf16> to vector<128x128xbf16>
    %178 = arith.truncf %165 : vector<8x128xf32> to vector<8x128xbf16>
    %cst_113 = arith.constant dense<0.000000e+00> : vector<8x128xf32>
    %179 = tpu.matmul %178, %177, %cst_113 {dimension_numbers = #tpu.dot_dimension_numbers<[1], [0], [0], [1], [0, 0, 1, 1], [], []>} : vector<8x128xbf16>, vector<128x128xbf16>, vector<8x128xf32> -> vector<8x128xf32>
    %c8 = arith.constant 8 : index
    %c0_114 = arith.constant 0 : index
    %180 = vector.load %arg4[%c8, %c0_114] : memref<22x512xf32, #tpu.memory_space<vmem>>, vector<1x128xf32>
    %c9 = arith.constant 9 : index
    %c0_115 = arith.constant 0 : index
    %181 = vector.load %arg4[%c9, %c0_115] : memref<22x512xf32, #tpu.memory_space<vmem>>, vector<1x128xf32>
    %cst_116 = arith.constant dense<0.000000e+00> : vector<128xf32>
    %182 = vector.multi_reduction <add>, %179, %cst_116 [0] : vector<8x128xf32> to vector<128xf32>
    %183 = vector.shape_cast %182 : vector<128xf32> to vector<1x128xf32>
    %cst_117 = arith.constant 1.250000e-01 : f32
    %184 = vector.broadcast %cst_117 : f32 to vector<1x128xf32>
    %185 = arith.mulf %183, %184 : vector<1x128xf32>
    %186 = arith.mulf %179, %179 : vector<8x128xf32>
    %cst_118 = arith.constant dense<0.000000e+00> : vector<128xf32>
    %187 = vector.multi_reduction <add>, %186, %cst_118 [0] : vector<8x128xf32> to vector<128xf32>
    %188 = vector.shape_cast %187 : vector<128xf32> to vector<1x128xf32>
    %cst_119 = arith.constant 1.250000e-01 : f32
    %189 = vector.broadcast %cst_119 : f32 to vector<1x128xf32>
    %190 = arith.mulf %188, %189 : vector<1x128xf32>
    %191 = arith.mulf %185, %185 : vector<1x128xf32>
    %192 = arith.subf %190, %191 : vector<1x128xf32>
    %cst_120 = arith.constant 0.000000e+00 : f32
    %193 = vector.broadcast %cst_120 : f32 to vector<1x128xf32>
    %194 = arith.maximumf %192, %193 : vector<1x128xf32>
    %cst_121 = arith.constant 9.99999974E-6 : f32
    %195 = vector.broadcast %cst_121 : f32 to vector<1x128xf32>
    %196 = arith.addf %194, %195 : vector<1x128xf32>
    %197 = math.rsqrt %196 : vector<1x128xf32>
    %198 = arith.mulf %180, %197 : vector<1x128xf32>
    %199 = arith.mulf %185, %198 : vector<1x128xf32>
    %200 = arith.subf %181, %199 : vector<1x128xf32>
    %201 = vector.broadcast %198 : vector<1x128xf32> to vector<8x128xf32>
    %202 = arith.mulf %179, %201 : vector<8x128xf32>
    %203 = vector.broadcast %200 : vector<1x128xf32> to vector<8x128xf32>
    %204 = arith.addf %202, %203 : vector<8x128xf32>
    %205 = math.tanh %204 : vector<8x128xf32>
    %c1_i32_122 = arith.constant 1 : i32
    %c1_i32_123 = arith.constant 1 : i32
    %c512_i32_124 = arith.constant 512 : i32
    %c0_i32_125 = arith.constant 0 : i32
    %206 = tpu.memref_slice %arg1[%c512_i32_124, %c0_i32_125] : memref<1536x128xbf16, #tpu.memory_space<any>> -> memref<128x128xbf16, #tpu.memory_space<any>>
    %c0_i32_126 = arith.constant 0 : i32
    %c0_i32_127 = arith.constant 0 : i32
    %207 = tpu.memref_slice %arg7[%c1_i32_122, %c0_i32_126, %c0_i32_127] : memref<2x512x512xbf16, #tpu.memory_space<vmem>> -> memref<1x128x128xbf16, #tpu.memory_space<vmem>>
    %208 = tpu.memref_squeeze %207 : memref<1x128x128xbf16, #tpu.memory_space<vmem>> -> memref<128x128xbf16, #tpu.memory_space<vmem>>
    %209 = tpu.memref_slice %arg8[%c1_i32_123] : memref<2x!tpu.dma_semaphore, #tpu.memory_space<semaphore_mem>> -> memref<1x!tpu.dma_semaphore, #tpu.memory_space<semaphore_mem>>
    %210 = tpu.memref_squeeze %209 : memref<1x!tpu.dma_semaphore, #tpu.memory_space<semaphore_mem>> -> memref<!tpu.dma_semaphore, #tpu.memory_space<semaphore_mem>>
    tpu.wait_dma2 semaphore(%210 : memref<!tpu.dma_semaphore, #tpu.memory_space<semaphore_mem>>) src(%206 : memref<128x128xbf16, #tpu.memory_space<any>>) dst(%208 : memref<128x128xbf16, #tpu.memory_space<vmem>>)
    %c0_i32_128 = arith.constant 0 : i32
    %c0_i32_129 = arith.constant 0 : i32
    %c640_i32 = arith.constant 640 : i32
    %c0_i32_130 = arith.constant 0 : i32
    %211 = tpu.memref_slice %arg1[%c640_i32, %c0_i32_130] : memref<1536x128xbf16, #tpu.memory_space<any>> -> memref<128x128xbf16, #tpu.memory_space<any>>
    %c0_i32_131 = arith.constant 0 : i32
    %c0_i32_132 = arith.constant 0 : i32
    %212 = tpu.memref_slice %arg7[%c0_i32_128, %c0_i32_131, %c0_i32_132] : memref<2x512x512xbf16, #tpu.memory_space<vmem>> -> memref<1x128x128xbf16, #tpu.memory_space<vmem>>
    %213 = tpu.memref_squeeze %212 : memref<1x128x128xbf16, #tpu.memory_space<vmem>> -> memref<128x128xbf16, #tpu.memory_space<vmem>>
    %214 = tpu.memref_slice %arg8[%c0_i32_129] : memref<2x!tpu.dma_semaphore, #tpu.memory_space<semaphore_mem>> -> memref<1x!tpu.dma_semaphore, #tpu.memory_space<semaphore_mem>>
    %215 = tpu.memref_squeeze %214 : memref<1x!tpu.dma_semaphore, #tpu.memory_space<semaphore_mem>> -> memref<!tpu.dma_semaphore, #tpu.memory_space<semaphore_mem>>
    tpu.enqueue_dma source(%211 : memref<128x128xbf16, #tpu.memory_space<any>>) target(%213 : memref<128x128xbf16, #tpu.memory_space<vmem>>) target_semaphore(%215 : memref<!tpu.dma_semaphore, #tpu.memory_space<semaphore_mem>>)
    %c1_133 = arith.constant 1 : index
    %c0_134 = arith.constant 0 : index
    %c0_135 = arith.constant 0 : index
    %216 = vector.load %arg7[%c1_133, %c0_134, %c0_135] : memref<2x512x512xbf16, #tpu.memory_space<vmem>>, vector<1x128x128xbf16>
    %217 = vector.shape_cast %216 : vector<1x128x128xbf16> to vector<128x128xbf16>
    %218 = arith.truncf %205 : vector<8x128xf32> to vector<8x128xbf16>
    %cst_136 = arith.constant dense<0.000000e+00> : vector<8x128xf32>
    %219 = tpu.matmul %218, %217, %cst_136 {dimension_numbers = #tpu.dot_dimension_numbers<[1], [0], [0], [1], [0, 0, 1, 1], [], []>} : vector<8x128xbf16>, vector<128x128xbf16>, vector<8x128xf32> -> vector<8x128xf32>
    %c10 = arith.constant 10 : index
    %c0_137 = arith.constant 0 : index
    %220 = vector.load %arg4[%c10, %c0_137] : memref<22x512xf32, #tpu.memory_space<vmem>>, vector<1x128xf32>
    %221 = vector.broadcast %220 : vector<1x128xf32> to vector<8x128xf32>
    %222 = arith.addf %219, %221 : vector<8x128xf32>
    %c0_138 = arith.constant 0 : index
    %c0_139 = arith.constant 0 : index
    %223 = vector.load %arg6[%c0_138, %c0_139] : memref<8x128xf32, #tpu.memory_space<vmem>>, vector<8x128xf32>
    tpu.vector_store %arg6[%c0_138, %c0_139], %222 {strides = array<i32>} : memref<8x128xf32, #tpu.memory_space<vmem>>, vector<8x128xf32>,
    %c0_i32_140 = arith.constant 0 : i32
    %c0_i32_141 = arith.constant 0 : i32
    %c640_i32_142 = arith.constant 640 : i32
    %c0_i32_143 = arith.constant 0 : i32
    %224 = tpu.memref_slice %arg1[%c640_i32_142, %c0_i32_143] : memref<1536x128xbf16, #tpu.memory_space<any>> -> memref<128x128xbf16, #tpu.memory_space<any>>
    %c0_i32_144 = arith.constant 0 : i32
    %c0_i32_145 = arith.constant 0 : i32
    %225 = tpu.memref_slice %arg7[%c0_i32_140, %c0_i32_144, %c0_i32_145] : memref<2x512x512xbf16, #tpu.memory_space<vmem>> -> memref<1x128x128xbf16, #tpu.memory_space<vmem>>
    %226 = tpu.memref_squeeze %225 : memref<1x128x128xbf16, #tpu.memory_space<vmem>> -> memref<128x128xbf16, #tpu.memory_space<vmem>>
    %227 = tpu.memref_slice %arg8[%c0_i32_141] : memref<2x!tpu.dma_semaphore, #tpu.memory_space<semaphore_mem>> -> memref<1x!tpu.dma_semaphore, #tpu.memory_space<semaphore_mem>>
    %228 = tpu.memref_squeeze %227 : memref<1x!tpu.dma_semaphore, #tpu.memory_space<semaphore_mem>> -> memref<!tpu.dma_semaphore, #tpu.memory_space<semaphore_mem>>
    tpu.wait_dma2 semaphore(%228 : memref<!tpu.dma_semaphore, #tpu.memory_space<semaphore_mem>>) src(%224 : memref<128x128xbf16, #tpu.memory_space<any>>) dst(%226 : memref<128x128xbf16, #tpu.memory_space<vmem>>)
    %c1_i32_146 = arith.constant 1 : i32
    %c1_i32_147 = arith.constant 1 : i32
    %c768_i32 = arith.constant 768 : i32
    %c0_i32_148 = arith.constant 0 : i32
    %229 = tpu.memref_slice %arg1[%c768_i32, %c0_i32_148] : memref<1536x128xbf16, #tpu.memory_space<any>> -> memref<128x128xbf16, #tpu.memory_space<any>>
    %c0_i32_149 = arith.constant 0 : i32
    %c0_i32_150 = arith.constant 0 : i32
    %230 = tpu.memref_slice %arg7[%c1_i32_146, %c0_i32_149, %c0_i32_150] : memref<2x512x512xbf16, #tpu.memory_space<vmem>> -> memref<1x128x128xbf16, #tpu.memory_space<vmem>>
    %231 = tpu.memref_squeeze %230 : memref<1x128x128xbf16, #tpu.memory_space<vmem>> -> memref<128x128xbf16, #tpu.memory_space<vmem>>
    %232 = tpu.memref_slice %arg8[%c1_i32_147] : memref<2x!tpu.dma_semaphore, #tpu.memory_space<semaphore_mem>> -> memref<1x!tpu.dma_semaphore, #tpu.memory_space<semaphore_mem>>
    %233 = tpu.memref_squeeze %232 : memref<1x!tpu.dma_semaphore, #tpu.memory_space<semaphore_mem>> -> memref<!tpu.dma_semaphore, #tpu.memory_space<semaphore_mem>>
    tpu.enqueue_dma source(%229 : memref<128x128xbf16, #tpu.memory_space<any>>) target(%231 : memref<128x128xbf16, #tpu.memory_space<vmem>>) target_semaphore(%233 : memref<!tpu.dma_semaphore, #tpu.memory_space<semaphore_mem>>)
    %c0_151 = arith.constant 0 : index
    %c0_152 = arith.constant 0 : index
    %c0_153 = arith.constant 0 : index
    %234 = vector.load %arg7[%c0_151, %c0_152, %c0_153] : memref<2x512x512xbf16, #tpu.memory_space<vmem>>, vector<1x128x128xbf16>
    %235 = vector.shape_cast %234 : vector<1x128x128xbf16> to vector<128x128xbf16>
    %236 = arith.truncf %222 : vector<8x128xf32> to vector<8x128xbf16>
    %cst_154 = arith.constant dense<0.000000e+00> : vector<8x128xf32>
    %237 = tpu.matmul %236, %235, %cst_154 {dimension_numbers = #tpu.dot_dimension_numbers<[1], [0], [0], [1], [0, 0, 1, 1], [], []>} : vector<8x128xbf16>, vector<128x128xbf16>, vector<8x128xf32> -> vector<8x128xf32>
    %c11 = arith.constant 11 : index
    %c0_155 = arith.constant 0 : index
    %238 = vector.load %arg4[%c11, %c0_155] : memref<22x512xf32, #tpu.memory_space<vmem>>, vector<1x128xf32>
    %c12 = arith.constant 12 : index
    %c0_156 = arith.constant 0 : index
    %239 = vector.load %arg4[%c12, %c0_156] : memref<22x512xf32, #tpu.memory_space<vmem>>, vector<1x128xf32>
    %cst_157 = arith.constant dense<0.000000e+00> : vector<128xf32>
    %240 = vector.multi_reduction <add>, %237, %cst_157 [0] : vector<8x128xf32> to vector<128xf32>
    %241 = vector.shape_cast %240 : vector<128xf32> to vector<1x128xf32>
    %cst_158 = arith.constant 1.250000e-01 : f32
    %242 = vector.broadcast %cst_158 : f32 to vector<1x128xf32>
    %243 = arith.mulf %241, %242 : vector<1x128xf32>
    %244 = arith.mulf %237, %237 : vector<8x128xf32>
    %cst_159 = arith.constant dense<0.000000e+00> : vector<128xf32>
    %245 = vector.multi_reduction <add>, %244, %cst_159 [0] : vector<8x128xf32> to vector<128xf32>
    %246 = vector.shape_cast %245 : vector<128xf32> to vector<1x128xf32>
    %cst_160 = arith.constant 1.250000e-01 : f32
    %247 = vector.broadcast %cst_160 : f32 to vector<1x128xf32>
    %248 = arith.mulf %246, %247 : vector<1x128xf32>
    %249 = arith.mulf %243, %243 : vector<1x128xf32>
    %250 = arith.subf %248, %249 : vector<1x128xf32>
    %cst_161 = arith.constant 0.000000e+00 : f32
    %251 = vector.broadcast %cst_161 : f32 to vector<1x128xf32>
    %252 = arith.maximumf %250, %251 : vector<1x128xf32>
    %cst_162 = arith.constant 9.99999974E-6 : f32
    %253 = vector.broadcast %cst_162 : f32 to vector<1x128xf32>
    %254 = arith.addf %252, %253 : vector<1x128xf32>
    %255 = math.rsqrt %254 : vector<1x128xf32>
    %256 = arith.mulf %238, %255 : vector<1x128xf32>
    %257 = arith.mulf %243, %256 : vector<1x128xf32>
    %258 = arith.subf %239, %257 : vector<1x128xf32>
    %259 = vector.broadcast %256 : vector<1x128xf32> to vector<8x128xf32>
    %260 = arith.mulf %237, %259 : vector<8x128xf32>
    %261 = vector.broadcast %258 : vector<1x128xf32> to vector<8x128xf32>
    %262 = arith.addf %260, %261 : vector<8x128xf32>
    %263 = math.tanh %262 : vector<8x128xf32>
    %c1_i32_163 = arith.constant 1 : i32
    %c1_i32_164 = arith.constant 1 : i32
    %c768_i32_165 = arith.constant 768 : i32
    %c0_i32_166 = arith.constant 0 : i32
    %264 = tpu.memref_slice %arg1[%c768_i32_165, %c0_i32_166] : memref<1536x128xbf16, #tpu.memory_space<any>> -> memref<128x128xbf16, #tpu.memory_space<any>>
    %c0_i32_167 = arith.constant 0 : i32
    %c0_i32_168 = arith.constant 0 : i32
    %265 = tpu.memref_slice %arg7[%c1_i32_163, %c0_i32_167, %c0_i32_168] : memref<2x512x512xbf16, #tpu.memory_space<vmem>> -> memref<1x128x128xbf16, #tpu.memory_space<vmem>>
    %266 = tpu.memref_squeeze %265 : memref<1x128x128xbf16, #tpu.memory_space<vmem>> -> memref<128x128xbf16, #tpu.memory_space<vmem>>
    %267 = tpu.memref_slice %arg8[%c1_i32_164] : memref<2x!tpu.dma_semaphore, #tpu.memory_space<semaphore_mem>> -> memref<1x!tpu.dma_semaphore, #tpu.memory_space<semaphore_mem>>
    %268 = tpu.memref_squeeze %267 : memref<1x!tpu.dma_semaphore, #tpu.memory_space<semaphore_mem>> -> memref<!tpu.dma_semaphore, #tpu.memory_space<semaphore_mem>>
    tpu.wait_dma2 semaphore(%268 : memref<!tpu.dma_semaphore, #tpu.memory_space<semaphore_mem>>) src(%264 : memref<128x128xbf16, #tpu.memory_space<any>>) dst(%266 : memref<128x128xbf16, #tpu.memory_space<vmem>>)
    %c0_i32_169 = arith.constant 0 : i32
    %c0_i32_170 = arith.constant 0 : i32
    %c896_i32 = arith.constant 896 : i32
    %c0_i32_171 = arith.constant 0 : i32
    %269 = tpu.memref_slice %arg1[%c896_i32, %c0_i32_171] : memref<1536x128xbf16, #tpu.memory_space<any>> -> memref<128x128xbf16, #tpu.memory_space<any>>
    %c0_i32_172 = arith.constant 0 : i32
    %c0_i32_173 = arith.constant 0 : i32
    %270 = tpu.memref_slice %arg7[%c0_i32_169, %c0_i32_172, %c0_i32_173] : memref<2x512x512xbf16, #tpu.memory_space<vmem>> -> memref<1x128x128xbf16, #tpu.memory_space<vmem>>
    %271 = tpu.memref_squeeze %270 : memref<1x128x128xbf16, #tpu.memory_space<vmem>> -> memref<128x128xbf16, #tpu.memory_space<vmem>>
    %272 = tpu.memref_slice %arg8[%c0_i32_170] : memref<2x!tpu.dma_semaphore, #tpu.memory_space<semaphore_mem>> -> memref<1x!tpu.dma_semaphore, #tpu.memory_space<semaphore_mem>>
    %273 = tpu.memref_squeeze %272 : memref<1x!tpu.dma_semaphore, #tpu.memory_space<semaphore_mem>> -> memref<!tpu.dma_semaphore, #tpu.memory_space<semaphore_mem>>
    tpu.enqueue_dma source(%269 : memref<128x128xbf16, #tpu.memory_space<any>>) target(%271 : memref<128x128xbf16, #tpu.memory_space<vmem>>) target_semaphore(%273 : memref<!tpu.dma_semaphore, #tpu.memory_space<semaphore_mem>>)
    %c1_174 = arith.constant 1 : index
    %c0_175 = arith.constant 0 : index
    %c0_176 = arith.constant 0 : index
    %274 = vector.load %arg7[%c1_174, %c0_175, %c0_176] : memref<2x512x512xbf16, #tpu.memory_space<vmem>>, vector<1x128x128xbf16>
    %275 = vector.shape_cast %274 : vector<1x128x128xbf16> to vector<128x128xbf16>
    %276 = arith.truncf %263 : vector<8x128xf32> to vector<8x128xbf16>
    %cst_177 = arith.constant dense<0.000000e+00> : vector<8x128xf32>
    %277 = tpu.matmul %276, %275, %cst_177 {dimension_numbers = #tpu.dot_dimension_numbers<[1], [0], [0], [1], [0, 0, 1, 1], [], []>} : vector<8x128xbf16>, vector<128x128xbf16>, vector<8x128xf32> -> vector<8x128xf32>
    %c13 = arith.constant 13 : index
    %c0_178 = arith.constant 0 : index
    %278 = vector.load %arg4[%c13, %c0_178] : memref<22x512xf32, #tpu.memory_space<vmem>>, vector<1x128xf32>
    %c14 = arith.constant 14 : index
    %c0_179 = arith.constant 0 : index
    %279 = vector.load %arg4[%c14, %c0_179] : memref<22x512xf32, #tpu.memory_space<vmem>>, vector<1x128xf32>
    %cst_180 = arith.constant dense<0.000000e+00> : vector<128xf32>
    %280 = vector.multi_reduction <add>, %277, %cst_180 [0] : vector<8x128xf32> to vector<128xf32>
    %281 = vector.shape_cast %280 : vector<128xf32> to vector<1x128xf32>
    %cst_181 = arith.constant 1.250000e-01 : f32
    %282 = vector.broadcast %cst_181 : f32 to vector<1x128xf32>
    %283 = arith.mulf %281, %282 : vector<1x128xf32>
    %284 = arith.mulf %277, %277 : vector<8x128xf32>
    %cst_182 = arith.constant dense<0.000000e+00> : vector<128xf32>
    %285 = vector.multi_reduction <add>, %284, %cst_182 [0] : vector<8x128xf32> to vector<128xf32>
    %286 = vector.shape_cast %285 : vector<128xf32> to vector<1x128xf32>
    %cst_183 = arith.constant 1.250000e-01 : f32
    %287 = vector.broadcast %cst_183 : f32 to vector<1x128xf32>
    %288 = arith.mulf %286, %287 : vector<1x128xf32>
    %289 = arith.mulf %283, %283 : vector<1x128xf32>
    %290 = arith.subf %288, %289 : vector<1x128xf32>
    %cst_184 = arith.constant 0.000000e+00 : f32
    %291 = vector.broadcast %cst_184 : f32 to vector<1x128xf32>
    %292 = arith.maximumf %290, %291 : vector<1x128xf32>
    %cst_185 = arith.constant 9.99999974E-6 : f32
    %293 = vector.broadcast %cst_185 : f32 to vector<1x128xf32>
    %294 = arith.addf %292, %293 : vector<1x128xf32>
    %295 = math.rsqrt %294 : vector<1x128xf32>
    %296 = arith.mulf %278, %295 : vector<1x128xf32>
    %297 = arith.mulf %283, %296 : vector<1x128xf32>
    %298 = arith.subf %279, %297 : vector<1x128xf32>
    %299 = vector.broadcast %296 : vector<1x128xf32> to vector<8x128xf32>
    %300 = arith.mulf %277, %299 : vector<8x128xf32>
    %301 = vector.broadcast %298 : vector<1x128xf32> to vector<8x128xf32>
    %302 = arith.addf %300, %301 : vector<8x128xf32>
    %303 = math.tanh %302 : vector<8x128xf32>
    %c0_i32_186 = arith.constant 0 : i32
    %c0_i32_187 = arith.constant 0 : i32
    %c896_i32_188 = arith.constant 896 : i32
    %c0_i32_189 = arith.constant 0 : i32
    %304 = tpu.memref_slice %arg1[%c896_i32_188, %c0_i32_189] : memref<1536x128xbf16, #tpu.memory_space<any>> -> memref<128x128xbf16, #tpu.memory_space<any>>
    %c0_i32_190 = arith.constant 0 : i32
    %c0_i32_191 = arith.constant 0 : i32
    %305 = tpu.memref_slice %arg7[%c0_i32_186, %c0_i32_190, %c0_i32_191] : memref<2x512x512xbf16, #tpu.memory_space<vmem>> -> memref<1x128x128xbf16, #tpu.memory_space<vmem>>
    %306 = tpu.memref_squeeze %305 : memref<1x128x128xbf16, #tpu.memory_space<vmem>> -> memref<128x128xbf16, #tpu.memory_space<vmem>>
    %307 = tpu.memref_slice %arg8[%c0_i32_187] : memref<2x!tpu.dma_semaphore, #tpu.memory_space<semaphore_mem>> -> memref<1x!tpu.dma_semaphore, #tpu.memory_space<semaphore_mem>>
    %308 = tpu.memref_squeeze %307 : memref<1x!tpu.dma_semaphore, #tpu.memory_space<semaphore_mem>> -> memref<!tpu.dma_semaphore, #tpu.memory_space<semaphore_mem>>
    tpu.wait_dma2 semaphore(%308 : memref<!tpu.dma_semaphore, #tpu.memory_space<semaphore_mem>>) src(%304 : memref<128x128xbf16, #tpu.memory_space<any>>) dst(%306 : memref<128x128xbf16, #tpu.memory_space<vmem>>)
    %c1_i32_192 = arith.constant 1 : i32
    %c1_i32_193 = arith.constant 1 : i32
    %c512_i32_194 = arith.constant 512 : i32
    %c0_i32_195 = arith.constant 0 : i32
    %309 = tpu.memref_slice %arg2[%c512_i32_194, %c0_i32_195] : memref<640x256xbf16, #tpu.memory_space<any>> -> memref<128x256xbf16, #tpu.memory_space<any>>
    %c0_i32_196 = arith.constant 0 : i32
    %c0_i32_197 = arith.constant 0 : i32
    %310 = tpu.memref_slice %arg7[%c1_i32_192, %c0_i32_196, %c0_i32_197] : memref<2x512x512xbf16, #tpu.memory_space<vmem>> -> memref<1x128x256xbf16, #tpu.memory_space<vmem>>
    %311 = tpu.memref_squeeze %310 : memref<1x128x256xbf16, #tpu.memory_space<vmem>> -> memref<128x256xbf16, #tpu.memory_space<vmem>>
    %312 = tpu.memref_slice %arg8[%c1_i32_193] : memref<2x!tpu.dma_semaphore, #tpu.memory_space<semaphore_mem>> -> memref<1x!tpu.dma_semaphore, #tpu.memory_space<semaphore_mem>>
    %313 = tpu.memref_squeeze %312 : memref<1x!tpu.dma_semaphore, #tpu.memory_space<semaphore_mem>> -> memref<!tpu.dma_semaphore, #tpu.memory_space<semaphore_mem>>
    tpu.enqueue_dma source(%309 : memref<128x256xbf16, #tpu.memory_space<any>>) target(%311 : memref<128x256xbf16, #tpu.memory_space<vmem>>) target_semaphore(%313 : memref<!tpu.dma_semaphore, #tpu.memory_space<semaphore_mem>>)
    %c0_198 = arith.constant 0 : index
    %c0_199 = arith.constant 0 : index
    %c0_200 = arith.constant 0 : index
    %314 = vector.load %arg7[%c0_198, %c0_199, %c0_200] : memref<2x512x512xbf16, #tpu.memory_space<vmem>>, vector<1x128x128xbf16>
    %315 = vector.shape_cast %314 : vector<1x128x128xbf16> to vector<128x128xbf16>
    %316 = arith.truncf %303 : vector<8x128xf32> to vector<8x128xbf16>
    %cst_201 = arith.constant dense<0.000000e+00> : vector<8x128xf32>
    %317 = tpu.matmul %316, %315, %cst_201 {dimension_numbers = #tpu.dot_dimension_numbers<[1], [0], [0], [1], [0, 0, 1, 1], [], []>} : vector<8x128xbf16>, vector<128x128xbf16>, vector<8x128xf32> -> vector<8x128xf32>
    %c15 = arith.constant 15 : index
    %c0_202 = arith.constant 0 : index
    %318 = vector.load %arg4[%c15, %c0_202] : memref<22x512xf32, #tpu.memory_space<vmem>>, vector<1x128xf32>
    %c16 = arith.constant 16 : index
    %c0_203 = arith.constant 0 : index
    %319 = vector.load %arg4[%c16, %c0_203] : memref<22x512xf32, #tpu.memory_space<vmem>>, vector<1x128xf32>
    %cst_204 = arith.constant dense<0.000000e+00> : vector<128xf32>
    %320 = vector.multi_reduction <add>, %317, %cst_204 [0] : vector<8x128xf32> to vector<128xf32>
    %321 = vector.shape_cast %320 : vector<128xf32> to vector<1x128xf32>
    %cst_205 = arith.constant 1.250000e-01 : f32
    %322 = vector.broadcast %cst_205 : f32 to vector<1x128xf32>
    %323 = arith.mulf %321, %322 : vector<1x128xf32>
    %324 = arith.mulf %317, %317 : vector<8x128xf32>
    %cst_206 = arith.constant dense<0.000000e+00> : vector<128xf32>
    %325 = vector.multi_reduction <add>, %324, %cst_206 [0] : vector<8x128xf32> to vector<128xf32>
    %326 = vector.shape_cast %325 : vector<128xf32> to vector<1x128xf32>
    %cst_207 = arith.constant 1.250000e-01 : f32
    %327 = vector.broadcast %cst_207 : f32 to vector<1x128xf32>
    %328 = arith.mulf %326, %327 : vector<1x128xf32>
    %329 = arith.mulf %323, %323 : vector<1x128xf32>
    %330 = arith.subf %328, %329 : vector<1x128xf32>
    %cst_208 = arith.constant 0.000000e+00 : f32
    %331 = vector.broadcast %cst_208 : f32 to vector<1x128xf32>
    %332 = arith.maximumf %330, %331 : vector<1x128xf32>
    %cst_209 = arith.constant 9.99999974E-6 : f32
    %333 = vector.broadcast %cst_209 : f32 to vector<1x128xf32>
    %334 = arith.addf %332, %333 : vector<1x128xf32>
    %335 = math.rsqrt %334 : vector<1x128xf32>
    %336 = arith.mulf %318, %335 : vector<1x128xf32>
    %337 = arith.mulf %323, %336 : vector<1x128xf32>
    %338 = arith.subf %319, %337 : vector<1x128xf32>
    %339 = vector.broadcast %336 : vector<1x128xf32> to vector<8x128xf32>
    %340 = arith.mulf %317, %339 : vector<8x128xf32>
    %341 = vector.broadcast %338 : vector<1x128xf32> to vector<8x128xf32>
    %342 = arith.addf %340, %341 : vector<8x128xf32>
    %343 = math.tanh %342 : vector<8x128xf32>
    %c1_i32_210 = arith.constant 1 : i32
    %c1_i32_211 = arith.constant 1 : i32
    %c512_i32_212 = arith.constant 512 : i32
    %c0_i32_213 = arith.constant 0 : i32
    %344 = tpu.memref_slice %arg2[%c512_i32_212, %c0_i32_213] : memref<640x256xbf16, #tpu.memory_space<any>> -> memref<128x256xbf16, #tpu.memory_space<any>>
    %c0_i32_214 = arith.constant 0 : i32
    %c0_i32_215 = arith.constant 0 : i32
    %345 = tpu.memref_slice %arg7[%c1_i32_210, %c0_i32_214, %c0_i32_215] : memref<2x512x512xbf16, #tpu.memory_space<vmem>> -> memref<1x128x256xbf16, #tpu.memory_space<vmem>>
    %346 = tpu.memref_squeeze %345 : memref<1x128x256xbf16, #tpu.memory_space<vmem>> -> memref<128x256xbf16, #tpu.memory_space<vmem>>
    %347 = tpu.memref_slice %arg8[%c1_i32_211] : memref<2x!tpu.dma_semaphore, #tpu.memory_space<semaphore_mem>> -> memref<1x!tpu.dma_semaphore, #tpu.memory_space<semaphore_mem>>
    %348 = tpu.memref_squeeze %347 : memref<1x!tpu.dma_semaphore, #tpu.memory_space<semaphore_mem>> -> memref<!tpu.dma_semaphore, #tpu.memory_space<semaphore_mem>>
    tpu.wait_dma2 semaphore(%348 : memref<!tpu.dma_semaphore, #tpu.memory_space<semaphore_mem>>) src(%344 : memref<128x256xbf16, #tpu.memory_space<any>>) dst(%346 : memref<128x256xbf16, #tpu.memory_space<vmem>>)
    %c0_i32_216 = arith.constant 0 : i32
    %c0_i32_217 = arith.constant 0 : i32
    %c128_i32 = arith.constant 128 : i32
    %c0_i32_218 = arith.constant 0 : i32
    %349 = tpu.memref_slice %arg3[%c128_i32, %c0_i32_218] : memref<384x512xbf16, #tpu.memory_space<any>> -> memref<256x512xbf16, #tpu.memory_space<any>>
    %c0_i32_219 = arith.constant 0 : i32
    %c0_i32_220 = arith.constant 0 : i32
    %350 = tpu.memref_slice %arg7[%c0_i32_216, %c0_i32_219, %c0_i32_220] : memref<2x512x512xbf16, #tpu.memory_space<vmem>> -> memref<1x256x512xbf16, #tpu.memory_space<vmem>>
    %351 = tpu.memref_squeeze %350 : memref<1x256x512xbf16, #tpu.memory_space<vmem>> -> memref<256x512xbf16, #tpu.memory_space<vmem>>
    %352 = tpu.memref_slice %arg8[%c0_i32_217] : memref<2x!tpu.dma_semaphore, #tpu.memory_space<semaphore_mem>> -> memref<1x!tpu.dma_semaphore, #tpu.memory_space<semaphore_mem>>
    %353 = tpu.memref_squeeze %352 : memref<1x!tpu.dma_semaphore, #tpu.memory_space<semaphore_mem>> -> memref<!tpu.dma_semaphore, #tpu.memory_space<semaphore_mem>>
    tpu.enqueue_dma source(%349 : memref<256x512xbf16, #tpu.memory_space<any>>) target(%351 : memref<256x512xbf16, #tpu.memory_space<vmem>>) target_semaphore(%353 : memref<!tpu.dma_semaphore, #tpu.memory_space<semaphore_mem>>)
    %c1_221 = arith.constant 1 : index
    %c0_222 = arith.constant 0 : index
    %c0_223 = arith.constant 0 : index
    %354 = vector.load %arg7[%c1_221, %c0_222, %c0_223] : memref<2x512x512xbf16, #tpu.memory_space<vmem>>, vector<1x128x256xbf16>
    %355 = vector.shape_cast %354 : vector<1x128x256xbf16> to vector<128x256xbf16>
    %356 = arith.truncf %343 : vector<8x128xf32> to vector<8x128xbf16>
    %cst_224 = arith.constant dense<0.000000e+00> : vector<8x256xf32>
    %357 = tpu.matmul %356, %355, %cst_224 {dimension_numbers = #tpu.dot_dimension_numbers<[1], [0], [0], [1], [0, 0, 1, 1], [], []>} : vector<8x128xbf16>, vector<128x256xbf16>, vector<8x256xf32> -> vector<8x256xf32>
    %c17 = arith.constant 17 : index
    %c0_225 = arith.constant 0 : index
    %358 = vector.load %arg4[%c17, %c0_225] : memref<22x512xf32, #tpu.memory_space<vmem>>, vector<1x256xf32>
    %c18 = arith.constant 18 : index
    %c0_226 = arith.constant 0 : index
    %359 = vector.load %arg4[%c18, %c0_226] : memref<22x512xf32, #tpu.memory_space<vmem>>, vector<1x256xf32>
    %cst_227 = arith.constant dense<0.000000e+00> : vector<256xf32>
    %360 = vector.multi_reduction <add>, %357, %cst_227 [0] : vector<8x256xf32> to vector<256xf32>
    %361 = vector.shape_cast %360 : vector<256xf32> to vector<1x256xf32>
    %cst_228 = arith.constant 1.250000e-01 : f32
    %362 = vector.broadcast %cst_228 : f32 to vector<1x256xf32>
    %363 = arith.mulf %361, %362 : vector<1x256xf32>
    %364 = arith.mulf %357, %357 : vector<8x256xf32>
    %cst_229 = arith.constant dense<0.000000e+00> : vector<256xf32>
    %365 = vector.multi_reduction <add>, %364, %cst_229 [0] : vector<8x256xf32> to vector<256xf32>
    %366 = vector.shape_cast %365 : vector<256xf32> to vector<1x256xf32>
    %cst_230 = arith.constant 1.250000e-01 : f32
    %367 = vector.broadcast %cst_230 : f32 to vector<1x256xf32>
    %368 = arith.mulf %366, %367 : vector<1x256xf32>
    %369 = arith.mulf %363, %363 : vector<1x256xf32>
    %370 = arith.subf %368, %369 : vector<1x256xf32>
    %cst_231 = arith.constant 0.000000e+00 : f32
    %371 = vector.broadcast %cst_231 : f32 to vector<1x256xf32>
    %372 = arith.maximumf %370, %371 : vector<1x256xf32>
    %cst_232 = arith.constant 9.99999974E-6 : f32
    %373 = vector.broadcast %cst_232 : f32 to vector<1x256xf32>
    %374 = arith.addf %372, %373 : vector<1x256xf32>
    %375 = math.rsqrt %374 : vector<1x256xf32>
    %376 = arith.mulf %358, %375 : vector<1x256xf32>
    %377 = arith.mulf %363, %376 : vector<1x256xf32>
    %378 = arith.subf %359, %377 : vector<1x256xf32>
    %379 = vector.broadcast %376 : vector<1x256xf32> to vector<8x256xf32>
    %380 = arith.mulf %357, %379 : vector<8x256xf32>
    %381 = vector.broadcast %378 : vector<1x256xf32> to vector<8x256xf32>
    %382 = arith.addf %380, %381 : vector<8x256xf32>
    %383 = math.tanh %382 : vector<8x256xf32>
    %c0_i32_233 = arith.constant 0 : i32
    %c0_i32_234 = arith.constant 0 : i32
    %c128_i32_235 = arith.constant 128 : i32
    %c0_i32_236 = arith.constant 0 : i32
    %384 = tpu.memref_slice %arg3[%c128_i32_235, %c0_i32_236] : memref<384x512xbf16, #tpu.memory_space<any>> -> memref<256x512xbf16, #tpu.memory_space<any>>
    %c0_i32_237 = arith.constant 0 : i32
    %c0_i32_238 = arith.constant 0 : i32
    %385 = tpu.memref_slice %arg7[%c0_i32_233, %c0_i32_237, %c0_i32_238] : memref<2x512x512xbf16, #tpu.memory_space<vmem>> -> memref<1x256x512xbf16, #tpu.memory_space<vmem>>
    %386 = tpu.memref_squeeze %385 : memref<1x256x512xbf16, #tpu.memory_space<vmem>> -> memref<256x512xbf16, #tpu.memory_space<vmem>>
    %387 = tpu.memref_slice %arg8[%c0_i32_234] : memref<2x!tpu.dma_semaphore, #tpu.memory_space<semaphore_mem>> -> memref<1x!tpu.dma_semaphore, #tpu.memory_space<semaphore_mem>>
    %388 = tpu.memref_squeeze %387 : memref<1x!tpu.dma_semaphore, #tpu.memory_space<semaphore_mem>> -> memref<!tpu.dma_semaphore, #tpu.memory_space<semaphore_mem>>
    tpu.wait_dma2 semaphore(%388 : memref<!tpu.dma_semaphore, #tpu.memory_space<semaphore_mem>>) src(%384 : memref<256x512xbf16, #tpu.memory_space<any>>) dst(%386 : memref<256x512xbf16, #tpu.memory_space<vmem>>)
    %c1_i32_239 = arith.constant 1 : i32
    %c1_i32_240 = arith.constant 1 : i32
    %c1024_i32 = arith.constant 1024 : i32
    %c0_i32_241 = arith.constant 0 : i32
    %389 = tpu.memref_slice %arg1[%c1024_i32, %c0_i32_241] : memref<1536x128xbf16, #tpu.memory_space<any>> -> memref<512x128xbf16, #tpu.memory_space<any>>
    %c0_i32_242 = arith.constant 0 : i32
    %c0_i32_243 = arith.constant 0 : i32
    %390 = tpu.memref_slice %arg7[%c1_i32_239, %c0_i32_242, %c0_i32_243] : memref<2x512x512xbf16, #tpu.memory_space<vmem>> -> memref<1x512x128xbf16, #tpu.memory_space<vmem>>
    %391 = tpu.memref_squeeze %390 : memref<1x512x128xbf16, #tpu.memory_space<vmem>> -> memref<512x128xbf16, #tpu.memory_space<vmem>>
    %392 = tpu.memref_slice %arg8[%c1_i32_240] : memref<2x!tpu.dma_semaphore, #tpu.memory_space<semaphore_mem>> -> memref<1x!tpu.dma_semaphore, #tpu.memory_space<semaphore_mem>>
    %393 = tpu.memref_squeeze %392 : memref<1x!tpu.dma_semaphore, #tpu.memory_space<semaphore_mem>> -> memref<!tpu.dma_semaphore, #tpu.memory_space<semaphore_mem>>
    tpu.enqueue_dma source(%389 : memref<512x128xbf16, #tpu.memory_space<any>>) target(%391 : memref<512x128xbf16, #tpu.memory_space<vmem>>) target_semaphore(%393 : memref<!tpu.dma_semaphore, #tpu.memory_space<semaphore_mem>>)
    %c0_244 = arith.constant 0 : index
    %c0_245 = arith.constant 0 : index
    %c0_246 = arith.constant 0 : index
    %394 = vector.load %arg7[%c0_244, %c0_245, %c0_246] : memref<2x512x512xbf16, #tpu.memory_space<vmem>>, vector<1x256x512xbf16>
    %395 = vector.shape_cast %394 : vector<1x256x512xbf16> to vector<256x512xbf16>
    %396 = arith.truncf %383 : vector<8x256xf32> to vector<8x256xbf16>
    %cst_247 = arith.constant dense<0.000000e+00> : vector<8x512xf32>
    %397 = tpu.matmul %396, %395, %cst_247 {dimension_numbers = #tpu.dot_dimension_numbers<[1], [0], [0], [1], [0, 0, 1, 1], [], []>} : vector<8x256xbf16>, vector<256x512xbf16>, vector<8x512xf32> -> vector<8x512xf32>
    %c19 = arith.constant 19 : index
    %c0_248 = arith.constant 0 : index
    %398 = vector.load %arg4[%c19, %c0_248] : memref<22x512xf32, #tpu.memory_space<vmem>>, vector<1x512xf32>
    %c20 = arith.constant 20 : index
    %c0_249 = arith.constant 0 : index
    %399 = vector.load %arg4[%c20, %c0_249] : memref<22x512xf32, #tpu.memory_space<vmem>>, vector<1x512xf32>
    %cst_250 = arith.constant dense<0.000000e+00> : vector<512xf32>
    %400 = vector.multi_reduction <add>, %397, %cst_250 [0] : vector<8x512xf32> to vector<512xf32>
    %401 = vector.shape_cast %400 : vector<512xf32> to vector<1x512xf32>
    %cst_251 = arith.constant 1.250000e-01 : f32
    %402 = vector.broadcast %cst_251 : f32 to vector<1x512xf32>
    %403 = arith.mulf %401, %402 : vector<1x512xf32>
    %404 = arith.mulf %397, %397 : vector<8x512xf32>
    %cst_252 = arith.constant dense<0.000000e+00> : vector<512xf32>
    %405 = vector.multi_reduction <add>, %404, %cst_252 [0] : vector<8x512xf32> to vector<512xf32>
    %406 = vector.shape_cast %405 : vector<512xf32> to vector<1x512xf32>
    %cst_253 = arith.constant 1.250000e-01 : f32
    %407 = vector.broadcast %cst_253 : f32 to vector<1x512xf32>
    %408 = arith.mulf %406, %407 : vector<1x512xf32>
    %409 = arith.mulf %403, %403 : vector<1x512xf32>
    %410 = arith.subf %408, %409 : vector<1x512xf32>
    %cst_254 = arith.constant 0.000000e+00 : f32
    %411 = vector.broadcast %cst_254 : f32 to vector<1x512xf32>
    %412 = arith.maximumf %410, %411 : vector<1x512xf32>
    %cst_255 = arith.constant 9.99999974E-6 : f32
    %413 = vector.broadcast %cst_255 : f32 to vector<1x512xf32>
    %414 = arith.addf %412, %413 : vector<1x512xf32>
    %415 = math.rsqrt %414 : vector<1x512xf32>
    %416 = arith.mulf %398, %415 : vector<1x512xf32>
    %417 = arith.mulf %403, %416 : vector<1x512xf32>
    %418 = arith.subf %399, %417 : vector<1x512xf32>
    %419 = vector.broadcast %416 : vector<1x512xf32> to vector<8x512xf32>
    %420 = arith.mulf %397, %419 : vector<8x512xf32>
    %421 = vector.broadcast %418 : vector<1x512xf32> to vector<8x512xf32>
    %422 = arith.addf %420, %421 : vector<8x512xf32>
    %423 = math.tanh %422 : vector<8x512xf32>
    %c1_i32_256 = arith.constant 1 : i32
    %c1_i32_257 = arith.constant 1 : i32
    %c1024_i32_258 = arith.constant 1024 : i32
    %c0_i32_259 = arith.constant 0 : i32
    %424 = tpu.memref_slice %arg1[%c1024_i32_258, %c0_i32_259] : memref<1536x128xbf16, #tpu.memory_space<any>> -> memref<512x128xbf16, #tpu.memory_space<any>>
    %c0_i32_260 = arith.constant 0 : i32
    %c0_i32_261 = arith.constant 0 : i32
    %425 = tpu.memref_slice %arg7[%c1_i32_256, %c0_i32_260, %c0_i32_261] : memref<2x512x512xbf16, #tpu.memory_space<vmem>> -> memref<1x512x128xbf16, #tpu.memory_space<vmem>>
    %426 = tpu.memref_squeeze %425 : memref<1x512x128xbf16, #tpu.memory_space<vmem>> -> memref<512x128xbf16, #tpu.memory_space<vmem>>
    %427 = tpu.memref_slice %arg8[%c1_i32_257] : memref<2x!tpu.dma_semaphore, #tpu.memory_space<semaphore_mem>> -> memref<1x!tpu.dma_semaphore, #tpu.memory_space<semaphore_mem>>
    %428 = tpu.memref_squeeze %427 : memref<1x!tpu.dma_semaphore, #tpu.memory_space<semaphore_mem>> -> memref<!tpu.dma_semaphore, #tpu.memory_space<semaphore_mem>>
    tpu.wait_dma2 semaphore(%428 : memref<!tpu.dma_semaphore, #tpu.memory_space<semaphore_mem>>) src(%424 : memref<512x128xbf16, #tpu.memory_space<any>>) dst(%426 : memref<512x128xbf16, #tpu.memory_space<vmem>>)
    %c1_262 = arith.constant 1 : index
    %c0_263 = arith.constant 0 : index
    %c0_264 = arith.constant 0 : index
    %429 = vector.load %arg7[%c1_262, %c0_263, %c0_264] : memref<2x512x512xbf16, #tpu.memory_space<vmem>>, vector<1x512x128xbf16>
    %430 = vector.shape_cast %429 : vector<1x512x128xbf16> to vector<512x128xbf16>
    %431 = arith.truncf %423 : vector<8x512xf32> to vector<8x512xbf16>
    %cst_265 = arith.constant dense<0.000000e+00> : vector<8x128xf32>
    %432 = tpu.matmul %431, %430, %cst_265 {dimension_numbers = #tpu.dot_dimension_numbers<[1], [0], [0], [1], [0, 0, 1, 1], [], []>} : vector<8x512xbf16>, vector<512x128xbf16>, vector<8x128xf32> -> vector<8x128xf32>
    %c21 = arith.constant 21 : index
    %c0_266 = arith.constant 0 : index
    %433 = vector.load %arg4[%c21, %c0_266] : memref<22x512xf32, #tpu.memory_space<vmem>>, vector<1x128xf32>
    %434 = vector.broadcast %433 : vector<1x128xf32> to vector<8x128xf32>
    %435 = arith.addf %432, %434 : vector<8x128xf32>
    %436 = math.tanh %435 : vector<8x128xf32>
    %c0_267 = arith.constant 0 : index
    %c0_268 = arith.constant 0 : index
    %437 = vector.load %arg5[%c0_267, %c0_268] : memref<8x128xf32, #tpu.memory_space<vmem>>, vector<8x128xf32>
    tpu.vector_store %arg5[%c0_267, %c0_268], %436 {strides = array<i32>} : memref<8x128xf32, #tpu.memory_space<vmem>>, vector<8x128xf32>,
    return
  }
}

</mosaic_0001>

<llo_original>
// kernel: tpu_custom_call.1
$region0: #{tpu_custom_call.1}
  #allocation0 [shape = 'u32[]', space=smem, size = 0x4, offset = 0x4, fixed_abs, tag = 'smem constant byte address 0x4 - core index']
  #allocation1 [shape = 'u32[144,128]{1,0:T(1,128)}', space=vmem, size = 0x12000, scoped, tag = 'internal scratch']
  #allocation2 [shape = 'bf16[2,512,512]{2,1,0:T(8,128)(2,1)}', space=vmem, size = 0x100000, scoped, tag = 'scratch operand']
  #allocation3 [shape = 's32[2]{0}', space=sflag, size = 0x8, scoped, tag = 'scratch operand']
  #allocation12 [shape = 's32[]', space=sflag, size = 0x4, offset = 0, fixed_abs, tag = 'sflag constant byte address 0x0 - dummy sync flag']
  #allocation13 [shape = 's32[]', space=sflag, size = 0x4, offset = 0, fixed_abs, tag = 'sflag constant byte address 0x0 - dummy sync flag']
  #allocation14 [shape = 'u32[]', space=smem, size = 0x4, offset = 0x44, fixed_abs, tag = 'smem constant byte address 0x44 - assertion arg 0']
  #allocation15 [shape = 'u32[]', space=smem, size = 0x4, offset = 0x48, fixed_abs, tag = 'smem constant byte address 0x48 - assertion arg 1']
  #allocation16 [shape = 's32[]', space=sflag, size = 0x4, offset = 0, fixed_abs, tag = 'sflag constant byte address 0x0 - dummy sync flag']
  #allocation17 [shape = 's32[]', space=sflag, size = 0x4, offset = 0, fixed_abs, tag = 'sflag constant byte address 0x0 - dummy sync flag']
  #allocation18 [shape = 's32[]', space=sflag, size = 0x4, offset = 0, fixed_abs, tag = 'sflag constant byte address 0x0 - dummy sync flag']
  #allocation19 [shape = 's32[]', space=sflag, size = 0x4, offset = 0, fixed_abs, tag = 'sflag constant byte address 0x0 - dummy sync flag']
  #allocation20 [shape = 's32[]', space=sflag, size = 0x4, offset = 0, fixed_abs, tag = 'sflag constant byte address 0x0 - dummy sync flag']
  #allocation21 [shape = 's32[]', space=sflag, size = 0x4, offset = 0, fixed_abs, tag = 'sflag constant byte address 0x0 - dummy sync flag']
  #allocation22 [shape = 's32[]', space=sflag, size = 0x4, offset = 0, fixed_abs, tag = 'sflag constant byte address 0x0 - dummy sync flag']
  #allocation23 [shape = 's32[]', space=sflag, size = 0x4, offset = 0, fixed_abs, tag = 'sflag constant byte address 0x0 - dummy sync flag']
  #allocation24 [shape = 's32[]', space=sflag, size = 0x4, offset = 0, fixed_abs, tag = 'sflag constant byte address 0x0 - dummy sync flag']
  #allocation25 [shape = 's32[]', space=sflag, size = 0x4, offset = 0, fixed_abs, tag = 'sflag constant byte address 0x0 - dummy sync flag']
  #allocation26 [shape = 's32[]', space=sflag, size = 0x4, offset = 0, fixed_abs, tag = 'sflag constant byte address 0x0 - dummy sync flag']
  #allocation27 [shape = 's32[]', space=sflag, size = 0x4, offset = 0, fixed_abs, tag = 'sflag constant byte address 0x0 - dummy sync flag']
  %s0 = inlined_call_operand.hbm [shape: f32[8,128], index: 0, kind: input, shape index: {}]
  %s1 = inlined_call_operand.hbm [shape: bf16[1536,128], index: 1, kind: input, shape index: {}]
  %s2 = inlined_call_operand.hbm [shape: bf16[640,256], index: 2, kind: input, shape index: {}]
  %s3 = inlined_call_operand.hbm [shape: bf16[384,512], index: 3, kind: input, shape index: {}]
  %s4 = inlined_call_operand.hbm [shape: f32[22,512], index: 4, kind: input, shape index: {}]
  %s5 = inlined_call_operand.hbm [shape: f32[8,128], index: 5, kind: output, shape index: {0}]
  %s6 = inlined_call_operand.hbm [shape: f32[8,128], index: 6, kind: output, shape index: {1}]
  %7 = xla_tuple %s5, %s6
  %s8 = sld [smem:[#allocation0]]
  $region42: #{tpu_custom_call.1} parent=0
    _
  %s10 = ssub.s32 1, %s8
  %s11 = scalar_select 0, %s10, %s8
  $region1: #{tpu_custom_call.1} parent=0
    #allocation4 [shape = 'u8[4096]{0}', space=vmem, size = 0x1000, scoped, tag = 'input window, operand 0, single buffered']
    #allocation5 [shape = 's32[1]{0}', space=sflag, size = 0x4, scoped, tag = 'scoped memory for tpu_custom_call.1']
    #allocation6 [shape = 's32[1]{0}', space=sflag, size = 0x4, scoped, tag = 'scoped memory for tpu_custom_call.1']
    #allocation7 [shape = 'u8[49152]{0}', space=vmem, size = 0xc000, scoped, tag = 'input window, operand 4, single buffered']
    #allocation8 [shape = 's32[1]{0}', space=sflag, size = 0x4, scoped, tag = 'scoped memory for tpu_custom_call.1']
    #allocation9 [shape = 'u8[4096]{0}', space=vmem, size = 0x1000, scoped, tag = 'output window, operand 0, single buffered']
    #allocation10 [shape = 'u8[4096]{0}', space=vmem, size = 0x1000, scoped, tag = 'output window, operand 1, single buffered']
    #allocation11 [shape = 's32[1]{0}', space=sflag, size = 0x4, scoped, tag = 'scoped memory for tpu_custom_call.1']
    %12 = vsyncpa [#allocation5], 0
    %13 = vsyncpa [#allocation8], 0
    %14 = vsyncpa [#allocation6], 0
    %15 = vsyncpa [#allocation11], 0
    // Predicated region
    $region2: #{tpu_custom_call.1} parent=1 // pred_check
      _
    $region3: #{tpu_custom_call.1} parent=1 // pred_check_branch
      %17 = sbr.rel (0) target = $region5
    $region4: #{tpu_custom_call.1} parent=1 // pred_region
      %s19 = ssub.s32 128, 128
      %20 = vsyncadd [#allocation5], %s19
      %s22 = sshll.u32 [#allocation4], 4
      %s23 = int_to_ptr.vmem [resolvable:$true] %s22
      %25 = dma.hbm_to_vmem [thread:$0]  %s0, 128, %s23, [#allocation5]
    $region5: #{tpu_custom_call.1} parent=1 // pred_fallthru
      _
    // Predicated region
    $region6: #{tpu_custom_call.1} parent=1 // pred_check
      _
    $region7: #{tpu_custom_call.1} parent=1 // pred_check_branch
      %27 = sbr.rel (0) target = $region9
    $region8: #{tpu_custom_call.1} parent=1 // pred_region
      %s29 = ssub.s32 1536, 1536
      %30 = vsyncadd [#allocation8], %s29
      %s31 = sshll.u32 [#allocation7], 4
      %s32 = int_to_ptr.vmem [resolvable:$true] %s31
      %37 = dma.hbm_to_vmem [thread:$0]  %s4, 1536, %s32, [#allocation8], 512, 512, 32
    $region9: #{tpu_custom_call.1} parent=1 // pred_fallthru
      _
    // Predicated region
    $region10: #{tpu_custom_call.1} parent=1 // pred_check
      _
    $region11: #{tpu_custom_call.1} parent=1 // pred_check_branch
      %39 = sbr.rel (0) target = $region13
    $region12: #{tpu_custom_call.1} parent=1 // pred_region
      %40 = dma.done [#allocation5], 128
    $region13: #{tpu_custom_call.1} parent=1 // pred_fallthru
      _
    // Predicated region
    $region14: #{tpu_custom_call.1} parent=1 // pred_check
      _
    $region15: #{tpu_custom_call.1} parent=1 // pred_check_branch
      %42 = sbr.rel (0) target = $region17
    $region16: #{tpu_custom_call.1} parent=1 // pred_region
      %43 = dma.done [#allocation8], 1536
    $region17: #{tpu_custom_call.1} parent=1 // pred_fallthru
      _
    // Predicated region
    $region18: #{tpu_custom_call.1} parent=1 // pred_check
      _
    $region19: #{tpu_custom_call.1} parent=1 // pred_check_branch
      %46 = sbr.rel target = $region21
    $region20: #{tpu_custom_call.1} parent=1 // pred_region
      %47 = sst [smem:[#allocation14]] [#allocation13]
      %48 = sst [smem:[#allocation15]] [#allocation12]
    $region21: #{tpu_custom_call.1} parent=1 // pred_fallthru
      _
    %50 = shalt.err (0)
    %s52 = sshll.u32 [#allocation2], 4
    %s53 = int_to_ptr.vmem [resolvable:$true] %s52
    %55 = dma.hbm_to_vmem [thread:$0]  %s3, 4096, %s53, [#allocation3]
    %v56 = vld [vmem:[#allocation4] sm:$0xff]
    %s57 = smul.u32 4, 16
    %s58 = smul.u32 %s57, 4
    %s59 = sshll.u32 %s58, 4
    %60 = dma.done [#allocation3], %s59
    %s61 = scalar_lea.vmem [#allocation2], 1024
    %s62 = scalar_lea.sflag [#allocation3], 1
    %s64 = sshll.u32 %s61, 4
    %s65 = int_to_ptr.vmem [resolvable:$true] %s64
    %67 = dma.hbm_to_vmem [thread:$0]  %s2, 8192, %s65, %s62, 128, 256, 8
    %v68 = vld [vmem:[#allocation2] sm:$0xff]
    %v69 = vld [vmem:[#allocation2 + $0x8] sm:$0xff]
    %v70 = vld [vmem:[#allocation2 + $0x10] sm:$0xff]
    %v71 = vld [vmem:[#allocation2 + $0x18] sm:$0xff]
    %v72 = vld [vmem:[#allocation2 + $0x20] sm:$0xff]
    %v73 = vld [vmem:[#allocation2 + $0x28] sm:$0xff]
    %v74 = vld [vmem:[#allocation2 + $0x30] sm:$0xff]
    %v75 = vld [vmem:[#allocation2 + $0x38] sm:$0xff]
    %v76 = vld [vmem:[#allocation2 + $0x40] sm:$0xff]
    %v77 = vld [vmem:[#allocation2 + $0x48] sm:$0xff]
    %v78 = vld [vmem:[#allocation2 + $0x50] sm:$0xff]
    %v79 = vld [vmem:[#allocation2 + $0x58] sm:$0xff]
    %v80 = vld [vmem:[#allocation2 + $0x60] sm:$0xff]
    %v81 = vld [vmem:[#allocation2 + $0x68] sm:$0xff]
    %v82 = vld [vmem:[#allocation2 + $0x70] sm:$0xff]
    %v83 = vld [vmem:[#allocation2 + $0x78] sm:$0xff]
    %v84 = vld [vmem:[#allocation2 + $0x80] sm:$0xff]
    %v85 = vld [vmem:[#allocation2 + $0x88] sm:$0xff]
    %v86 = vld [vmem:[#allocation2 + $0x90] sm:$0xff]
    %v87 = vld [vmem:[#allocation2 + $0x98] sm:$0xff]
    %v88 = vld [vmem:[#allocation2 + $0xa0] sm:$0xff]
    %v89 = vld [vmem:[#allocation2 + $0xa8] sm:$0xff]
    %v90 = vld [vmem:[#allocation2 + $0xb0] sm:$0xff]
    %v91 = vld [vmem:[#allocation2 + $0xb8] sm:$0xff]
    %v92 = vld [vmem:[#allocation2 + $0xc0] sm:$0xff]
    %v93 = vld [vmem:[#allocation2 + $0xc8] sm:$0xff]
    %v94 = vld [vmem:[#allocation2 + $0xd0] sm:$0xff]
    %v95 = vld [vmem:[#allocation2 + $0xd8] sm:$0xff]
    %v96 = vld [vmem:[#allocation2 + $0xe0] sm:$0xff]
    %v97 = vld [vmem:[#allocation2 + $0xe8] sm:$0xff]
    %v98 = vld [vmem:[#allocation2 + $0xf0] sm:$0xff]
    %v99 = vld [vmem:[#allocation2 + $0xf8] sm:$0xff]
    %v100 = vpack.c.bf16 %v56, %v56
    %v133 = vunpack.c.l.b16 %v68
    %v134 = vunpack.c.h.b16 %v68
    %v135 = vunpack.c.l.b16 %v69
    %v136 = vunpack.c.h.b16 %v69
    %v137 = vunpack.c.l.b16 %v70
    %v138 = vunpack.c.h.b16 %v70
    %v139 = vunpack.c.l.b16 %v71
    %v140 = vunpack.c.h.b16 %v71
    %v141 = vunpack.c.l.b16 %v72
    %v142 = vunpack.c.h.b16 %v72
    %v143 = vunpack.c.l.b16 %v73
    %v144 = vunpack.c.h.b16 %v73
    %v145 = vunpack.c.l.b16 %v74
    %v146 = vunpack.c.h.b16 %v74
    %v147 = vunpack.c.l.b16 %v75
    %v148 = vunpack.c.h.b16 %v75
    %v149 = vunpack.c.l.b16 %v76
    %v150 = vunpack.c.h.b16 %v76
    %v151 = vunpack.c.l.b16 %v77
    %v152 = vunpack.c.h.b16 %v77
    %v153 = vunpack.c.l.b16 %v78
    %v154 = vunpack.c.h.b16 %v78
    %v155 = vunpack.c.l.b16 %v79
    %v156 = vunpack.c.h.b16 %v79
    %v157 = vunpack.c.l.b16 %v80
    %v158 = vunpack.c.h.b16 %v80
    %v159 = vunpack.c.l.b16 %v81
    %v160 = vunpack.c.h.b16 %v81
    %v161 = vunpack.c.l.b16 %v82
    %v162 = vunpack.c.h.b16 %v82
    %v163 = vunpack.c.l.b16 %v83
    %v164 = vunpack.c.h.b16 %v83
    %v165 = vunpack.c.l.b16 %v84
    %v166 = vunpack.c.h.b16 %v84
    %v167 = vunpack.c.l.b16 %v85
    %v168 = vunpack.c.h.b16 %v85
    %v169 = vunpack.c.l.b16 %v86
    %v170 = vunpack.c.h.b16 %v86
    %v171 = vunpack.c.l.b16 %v87
    %v172 = vunpack.c.h.b16 %v87
    %v173 = vunpack.c.l.b16 %v88
    %v174 = vunpack.c.h.b16 %v88
    %v175 = vunpack.c.l.b16 %v89
    %v176 = vunpack.c.h.b16 %v89
    %v177 = vunpack.c.l.b16 %v90
    %v178 = vunpack.c.h.b16 %v90
    %v179 = vunpack.c.l.b16 %v91
    %v180 = vunpack.c.h.b16 %v91
    %v181 = vunpack.c.l.b16 %v92
    %v182 = vunpack.c.h.b16 %v92
    %v183 = vunpack.c.l.b16 %v93
    %v184 = vunpack.c.h.b16 %v93
    %v185 = vunpack.c.l.b16 %v94
    %v186 = vunpack.c.h.b16 %v94
    %v187 = vunpack.c.l.b16 %v95
    %v188 = vunpack.c.h.b16 %v95
    %v189 = vunpack.c.l.b16 %v96
    %v190 = vunpack.c.h.b16 %v96
    %v191 = vunpack.c.l.b16 %v97
    %v192 = vunpack.c.h.b16 %v97
    %v193 = vunpack.c.l.b16 %v98
    %v194 = vunpack.c.h.b16 %v98
    %v195 = vunpack.c.l.b16 %v99
    %v196 = vunpack.c.h.b16 %v99
    %v197 = vpack.c.b16 %v137, %v133
    %v198 = vpack.c.b16 %v138, %v134
    %v199 = vpack.c.b16 %v139, %v135
    %v200 = vpack.c.b16 %v140, %v136
    %v201 = vpack.c.b16 %v145, %v141
    %v202 = vpack.c.b16 %v146, %v142
    %v203 = vpack.c.b16 %v147, %v143
    %v204 = vpack.c.b16 %v148, %v144
    %v205 = vpack.c.b16 %v153, %v149
    %v206 = vpack.c.b16 %v154, %v150
    %v207 = vpack.c.b16 %v155, %v151
    %v208 = vpack.c.b16 %v156, %v152
    %v209 = vpack.c.b16 %v161, %v157
    %v210 = vpack.c.b16 %v162, %v158
    %v211 = vpack.c.b16 %v163, %v159
    %v212 = vpack.c.b16 %v164, %v160
    %v213 = vpack.c.b16 %v169, %v165
    %v214 = vpack.c.b16 %v170, %v166
    %v215 = vpack.c.b16 %v171, %v167
    %v216 = vpack.c.b16 %v172, %v168
    %v217 = vpack.c.b16 %v177, %v173
    %v218 = vpack.c.b16 %v178, %v174
    %v219 = vpack.c.b16 %v179, %v175
    %v220 = vpack.c.b16 %v180, %v176
    %v221 = vpack.c.b16 %v185, %v181
    %v222 = vpack.c.b16 %v186, %v182
    %v223 = vpack.c.b16 %v187, %v183
    %v224 = vpack.c.b16 %v188, %v184
    %v225 = vpack.c.b16 %v193, %v189
    %v226 = vpack.c.b16 %v194, %v190
    %v227 = vpack.c.b16 %v195, %v191
    %v228 = vpack.c.b16 %v196, %v192
    %261 = vmatprep.subr.bf16.mxu0 %v226
    %262 = vmatpush1.bf16.msra.mxu0 %v225
    %263 = vmatprep.subr.bf16.mxu0 %v222
    %264 = vmatpush1.bf16.msra.mxu0 %v221
    %265 = vmatprep.subr.bf16.mxu0 %v218
    %266 = vmatpush1.bf16.msra.mxu0 %v217
    %267 = vmatprep.subr.bf16.mxu0 %v214
    %268 = vmatpush1.bf16.msra.mxu0 %v213
    %269 = vmatprep.subr.bf16.mxu0 %v210
    %270 = vmatpush1.bf16.msra.mxu0 %v209
    %271 = vmatprep.subr.bf16.mxu0 %v206
    %272 = vmatpush1.bf16.msra.mxu0 %v205
    %273 = vmatprep.subr.bf16.mxu0 %v202
    %274 = vmatpush1.bf16.msra.mxu0 %v201
    %275 = vmatprep.subr.bf16.mxu0 %v198
    %276 = vmatpush1.bf16.msra.mxu0 %v197
    %277 = vmatprep.subr.bf16.mxu0 0
    %278 = vmatpush2.bf16.msra.mxu0 0
    %279 = vmatprep.subr.bf16.mxu0 0
    %280 = vmatpush2.bf16.msra.mxu0 0
    %281 = vmatprep.subr.bf16.mxu0 0
    %282 = vmatpush2.bf16.msra.mxu0 0
    %283 = vmatprep.subr.bf16.mxu0 0
    %284 = vmatpush2.bf16.msra.mxu0 0
    %285 = vmatprep.subr.bf16.mxu0 0
    %286 = vmatpush2.bf16.msra.mxu0 0
    %287 = vmatprep.subr.bf16.mxu0 0
    %288 = vmatpush2.bf16.msra.mxu0 0
    %289 = vmatprep.subr.bf16.mxu0 0
    %290 = vmatpush2.bf16.msra.mxu0 0
    %291 = vmatprep.subr.bf16.mxu0 0
    %292 = vmatpush2.bf16.msra.mxu0 0
    %293 = vmatprep.mubr.bf16.mxu0 0
    %294 = vmatmul.mubr.bf16.gmra.mxu0 %v100
    %v295 = vpop.f32.mrf.mxu0
    %v296 = vadd.f32 0.0, %v295
    %v297 = vpop.f32.mrf.mxu0
    %v298 = vadd.f32 0.0, %v297
    %v299 = vpop.f32.mrf.mxu0
    %v300 = vpop.f32.mrf.mxu0
    %301 = vdwg.mxu0
    %302 = vmatprep.subr.bf16.mxu0 %v228
    %303 = vmatpush1.bf16.msra.mxu0 %v227
    %304 = vmatprep.subr.bf16.mxu0 %v224
    %305 = vmatpush1.bf16.msra.mxu0 %v223
    %306 = vmatprep.subr.bf16.mxu0 %v220
    %307 = vmatpush1.bf16.msra.mxu0 %v219
    %308 = vmatprep.subr.bf16.mxu0 %v216
    %309 = vmatpush1.bf16.msra.mxu0 %v215
    %310 = vmatprep.subr.bf16.mxu0 %v212
    %311 = vmatpush1.bf16.msra.mxu0 %v211
    %312 = vmatprep.subr.bf16.mxu0 %v208
    %313 = vmatpush1.bf16.msra.mxu0 %v207
    %314 = vmatprep.subr.bf16.mxu0 %v204
    %315 = vmatpush1.bf16.msra.mxu0 %v203
    %316 = vmatprep.subr.bf16.mxu0 %v200
    %317 = vmatpush1.bf16.msra.mxu0 %v199
    %318 = vmatprep.subr.bf16.mxu0 0
    %319 = vmatpush2.bf16.msra.mxu0 0
    %320 = vmatprep.subr.bf16.mxu0 0
    %321 = vmatpush2.bf16.msra.mxu0 0
    %322 = vmatprep.subr.bf16.mxu0 0
    %323 = vmatpush2.bf16.msra.mxu0 0
    %324 = vmatprep.subr.bf16.mxu0 0
    %325 = vmatpush2.bf16.msra.mxu0 0
    %326 = vmatprep.subr.bf16.mxu0 0
    %327 = vmatpush2.bf16.msra.mxu0 0
    %328 = vmatprep.subr.bf16.mxu0 0
    %329 = vmatpush2.bf16.msra.mxu0 0
    %330 = vmatprep.subr.bf16.mxu0 0
    %331 = vmatpush2.bf16.msra.mxu0 0
    %332 = vmatprep.subr.bf16.mxu0 0
    %333 = vmatpush2.bf16.msra.mxu0 0
    %334 = vmatprep.mubr.bf16.mxu0 0
    %335 = vmatmul.mubr.bf16.gmra.mxu0 %v100
    %v336 = vpop.f32.mrf.mxu0
    %v337 = vadd.f32 0.0, %v336
    %v338 = vpop.f32.mrf.mxu0
    %v339 = vadd.f32 0.0, %v338
    %v340 = vpop.f32.mrf.mxu0
    %v341 = vpop.f32.mrf.mxu0
    %342 = vdwg.mxu0
    %v343 = vld [vmem:[#allocation7] ss:$8 sm:$0xf]
    %s344 = scalar_lea.vmem [#allocation7], 1
    %v345 = vld [vmem:[%s344] ss:$8 sm:$0xf]
    %v346 = vrot.slane %v296, 4
    %v347 = vadd.f32 %v296, %v346
    %v348 = vrot.slane %v347, 2
    %v349 = vadd.f32 %v347, %v348
    %v350 = vrot.slane %v349, 1
    %v351 = vadd.f32 %v349, %v350
    %v352 = vrot.slane %v298, 4
    %v353 = vadd.f32 %v298, %v352
    %v354 = vrot.slane %v353, 2
    %v355 = vadd.f32 %v353, %v354
    %v356 = vrot.slane %v355, 1
    %v357 = vadd.f32 %v355, %v356
    %v358 = vrot.slane %v337, 4
    %v359 = vadd.f32 %v337, %v358
    %v360 = vrot.slane %v359, 2
    %v361 = vadd.f32 %v359, %v360
    %v362 = vrot.slane %v361, 1
    %v363 = vadd.f32 %v361, %v362
    %v364 = vrot.slane %v339, 4
    %v365 = vadd.f32 %v339, %v364
    %v366 = vrot.slane %v365, 2
    %v367 = vadd.f32 %v365, %v366
    %v368 = vrot.slane %v367, 1
    %v369 = vadd.f32 %v367, %v368
    %v370 = vmul.f32 %v351, 0.125
    %v371 = vmul.f32 %v357, 0.125
    %v372 = vmul.f32 %v363, 0.125
    %v373 = vmul.f32 %v369, 0.125
    %v374 = vmul.f32 %v296, %v296
    %v375 = vmul.f32 %v298, %v298
    %v376 = vmul.f32 %v337, %v337
    %v377 = vmul.f32 %v339, %v339
    %v378 = vrot.slane %v374, 4
    %v379 = vadd.f32 %v374, %v378
    %v380 = vrot.slane %v379, 2
    %v381 = vadd.f32 %v379, %v380
    %v382 = vrot.slane %v381, 1
    %v383 = vadd.f32 %v381, %v382
    %v384 = vrot.slane %v375, 4
    %v385 = vadd.f32 %v375, %v384
    %v386 = vrot.slane %v385, 2
    %v387 = vadd.f32 %v385, %v386
    %v388 = vrot.slane %v387, 1
    %v389 = vadd.f32 %v387, %v388
    %v390 = vrot.slane %v376, 4
    %v391 = vadd.f32 %v376, %v390
    %v392 = vrot.slane %v391, 2
    %v393 = vadd.f32 %v391, %v392
    %v394 = vrot.slane %v393, 1
    %v395 = vadd.f32 %v393, %v394
    %v396 = vrot.slane %v377, 4
    %v397 = vadd.f32 %v377, %v396
    %v398 = vrot.slane %v397, 2
    %v399 = vadd.f32 %v397, %v398
    %v400 = vrot.slane %v399, 1
    %v401 = vadd.f32 %v399, %v400
    %v402 = vmul.f32 %v383, 0.125
    %v403 = vmul.f32 %v389, 0.125
    %v404 = vmul.f32 %v395, 0.125
    %v405 = vmul.f32 %v401, 0.125
    %v406 = vmul.f32 %v370, %v370
    %v407 = vmul.f32 %v371, %v371
    %v408 = vmul.f32 %v372, %v372
    %v409 = vmul.f32 %v373, %v373
    %v410 = vsub.f32 %v402, %v406
    %v411 = vsub.f32 %v403, %v407
    %v412 = vsub.f32 %v404, %v408
    %v413 = vsub.f32 %v405, %v409
    %v414 = vmax.f32 %v410, 0.0
    %v415 = vmax.f32 %v411, 0.0
    %v416 = vmax.f32 %v412, 0.0
    %v417 = vmax.f32 %v413, 0.0
    %v418 = vadd.f32 %v414, 1e-05
    %v419 = vadd.f32 %v415, 1e-05
    %v420 = vadd.f32 %v416, 1e-05
    %v421 = vadd.f32 %v417, 1e-05
    %v422 = vrsqrt.pop %v418
    %v423 = vrsqrt.pop %v419
    %v424 = vrsqrt.pop %v420
    %v425 = vrsqrt.pop %v421
    %v430 = vcombine.low %v422, %v423
    %v431 = vcombine.low %v424, %v425
    %v433 = vunpack.c.l.s4 1966171168
    %v434 = vunpack.c.0.s8 %v433
    %v435 = vlaneseq
    %v436 = vshrl.u32 %v435, 7
    %v437 = vsub.s32 %v434, %v436
    %v438 = vrot.slane %v430, %v437
    %v440 = vunpack.c.l.s4 1966171168
    %v441 = vunpack.c.0.s8 %v440
    %v442 = vlaneseq
    %v443 = vshrl.u32 %v442, 7
    %v444 = vsub.s32 %v441, %v443
    %v445 = vrot.slane %v431, %v444
    %v446 = vcombine.low %v438, %v445
    %v448 = vunpack.c.l.s4 1966171168
    %v449 = vunpack.c.0.s8 %v448
    %v450 = vlaneseq
    %v451 = vshrl.u32 %v450, 7
    %v452 = vsub.s32 %v449, %v451
    %v453 = vrot.slane %v446, %v452
    %v455 = vmul.f32 %v343, %v453
    %v457 = vlaneseq
    %v458 = vshrl.u32 %v457, 7
    %v459 = vsub.s32 0, %v458
    %v460 = vrot.slane %v455, %v459
    %v461 = vlaneseq
    %v462 = vshrl.u32 %v461, 7
    %v463 = vsub.s32 1, %v462
    %v464 = vrot.slane %v455, %v463
    %v465 = vlaneseq
    %v466 = vshrl.u32 %v465, 7
    %v467 = vsub.s32 2, %v466
    %v468 = vrot.slane %v455, %v467
    %v469 = vlaneseq
    %v470 = vshrl.u32 %v469, 7
    %v471 = vsub.s32 3, %v470
    %v472 = vrot.slane %v455, %v471
    %v477 = vmul.f32 %v370, %v460
    %v478 = vmul.f32 %v371, %v464
    %v479 = vmul.f32 %v372, %v468
    %v480 = vmul.f32 %v373, %v472
    %v485 = vcombine.low %v477, %v478
    %v486 = vcombine.low %v479, %v480
    %v488 = vunpack.c.l.s4 1966171168
    %v489 = vunpack.c.0.s8 %v488
    %v490 = vlaneseq
    %v491 = vshrl.u32 %v490, 7
    %v492 = vsub.s32 %v489, %v491
    %v493 = vrot.slane %v485, %v492
    %v495 = vunpack.c.l.s4 1966171168
    %v496 = vunpack.c.0.s8 %v495
    %v497 = vlaneseq
    %v498 = vshrl.u32 %v497, 7
    %v499 = vsub.s32 %v496, %v498
    %v500 = vrot.slane %v486, %v499
    %v501 = vcombine.low %v493, %v500
    %v503 = vunpack.c.l.s4 1966171168
    %v504 = vunpack.c.0.s8 %v503
    %v505 = vlaneseq
    %v506 = vshrl.u32 %v505, 7
    %v507 = vsub.s32 %v504, %v506
    %v508 = vrot.slane %v501, %v507
    %v510 = vsub.f32 %v345, %v508
    %v511 = vmul.f32 %v296, %v460
    %v512 = vmul.f32 %v298, %v464
    %v513 = vmul.f32 %v337, %v468
    %v514 = vmul.f32 %v339, %v472
    %v516 = vlaneseq
    %v517 = vshrl.u32 %v516, 7
    %v518 = vsub.s32 0, %v517
    %v519 = vrot.slane %v510, %v518
    %v520 = vlaneseq
    %v521 = vshrl.u32 %v520, 7
    %v522 = vsub.s32 1, %v521
    %v523 = vrot.slane %v510, %v522
    %v524 = vlaneseq
    %v525 = vshrl.u32 %v524, 7
    %v526 = vsub.s32 2, %v525
    %v527 = vrot.slane %v510, %v526
    %v528 = vlaneseq
    %v529 = vshrl.u32 %v528, 7
    %v530 = vsub.s32 3, %v529
    %v531 = vrot.slane %v510, %v530
    %v536 = vadd.f32 %v511, %v519
    %v537 = vadd.f32 %v512, %v523
    %v538 = vadd.f32 %v513, %v527
    %v539 = vadd.f32 %v514, %v531
    %v540 = vtanh.pop %v536
    %v541 = vtanh.pop %v537
    %v542 = vtanh.pop %v538
    %v543 = vtanh.pop %v539
    %s544 = smul.u32 4, 64
    %s545 = smul.u32 %s544, 2
    %s546 = sshll.u32 %s545, 4
    %547 = dma.done %s62, %s546
    %s549 = sshll.u32 [#allocation2], 4
    %s550 = int_to_ptr.vmem [resolvable:$true] %s549
    %552 = dma.hbm_to_vmem [thread:$0]  %s1, 2048, %s550, [#allocation3], 64, 256, 4
    %v553 = vld [vmem:[%s61] sm:$0xff]
    %v554 = vld [vmem:[%s61 + $0x10] sm:$0xff]
    %v555 = vld [vmem:[%s61 + $0x20] sm:$0xff]
    %v556 = vld [vmem:[%s61 + $0x30] sm:$0xff]
    %v557 = vld [vmem:[%s61 + $0x40] sm:$0xff]
    %v558 = vld [vmem:[%s61 + $0x50] sm:$0xff]
    %v559 = vld [vmem:[%s61 + $0x60] sm:$0xff]
    %v560 = vld [vmem:[%s61 + $0x70] sm:$0xff]
    %v561 = vld [vmem:[%s61 + $0x80] sm:$0xff]
    %v562 = vld [vmem:[%s61 + $0x90] sm:$0xff]
    %v563 = vld [vmem:[%s61 + $0xa0] sm:$0xff]
    %v564 = vld [vmem:[%s61 + $0xb0] sm:$0xff]
    %v565 = vld [vmem:[%s61 + $0xc0] sm:$0xff]
    %v566 = vld [vmem:[%s61 + $0xd0] sm:$0xff]
    %v567 = vld [vmem:[%s61 + $0xe0] sm:$0xff]
    %v568 = vld [vmem:[%s61 + $0xf0] sm:$0xff]
    %v569 = vld [vmem:[%s61 + $0x100] sm:$0xff]
    %v570 = vld [vmem:[%s61 + $0x110] sm:$0xff]
    %v571 = vld [vmem:[%s61 + $0x120] sm:$0xff]
    %v572 = vld [vmem:[%s61 + $0x130] sm:$0xff]
    %v573 = vld [vmem:[%s61 + $0x140] sm:$0xff]
    %v574 = vld [vmem:[%s61 + $0x150] sm:$0xff]
    %v575 = vld [vmem:[%s61 + $0x160] sm:$0xff]
    %v576 = vld [vmem:[%s61 + $0x170] sm:$0xff]
    %v577 = vld [vmem:[%s61 + $0x180] sm:$0xff]
    %v578 = vld [vmem:[%s61 + $0x190] sm:$0xff]
    %v579 = vld [vmem:[%s61 + $0x1a0] sm:$0xff]
    %v580 = vld [vmem:[%s61 + $0x1b0] sm:$0xff]
    %v581 = vld [vmem:[%s61 + $0x1c0] sm:$0xff]
    %v582 = vld [vmem:[%s61 + $0x1d0] sm:$0xff]
    %v583 = vld [vmem:[%s61 + $0x1e0] sm:$0xff]
    %v584 = vld [vmem:[%s61 + $0x1f0] sm:$0xff]
    %v585 = vld [vmem:[%s61 + $0x200] sm:$0xff]
    %v586 = vld [vmem:[%s61 + $0x210] sm:$0xff]
    %v587 = vld [vmem:[%s61 + $0x220] sm:$0xff]
    %v588 = vld [vmem:[%s61 + $0x230] sm:$0xff]
    %v589 = vld [vmem:[%s61 + $0x240] sm:$0xff]
    %v590 = vld [vmem:[%s61 + $0x250] sm:$0xff]
    %v591 = vld [vmem:[%s61 + $0x260] sm:$0xff]
    %v592 = vld [vmem:[%s61 + $0x270] sm:$0xff]
    %v593 = vld [vmem:[%s61 + $0x280] sm:$0xff]
    %v594 = vld [vmem:[%s61 + $0x290] sm:$0xff]
    %v595 = vld [vmem:[%s61 + $0x2a0] sm:$0xff]
    %v596 = vld [vmem:[%s61 + $0x2b0] sm:$0xff]
    %v597 = vld [vmem:[%s61 + $0x2c0] sm:$0xff]
    %v598 = vld [vmem:[%s61 + $0x2d0] sm:$0xff]
    %v599 = vld [vmem:[%s61 + $0x2e0] sm:$0xff]
    %v600 = vld [vmem:[%s61 + $0x2f0] sm:$0xff]
    %v601 = vld [vmem:[%s61 + $0x300] sm:$0xff]
    %v602 = vld [vmem:[%s61 + $0x310] sm:$0xff]
    %v603 = vld [vmem:[%s61 + $0x320] sm:$0xff]
    %v604 = vld [vmem:[%s61 + $0x330] sm:$0xff]
    %v605 = vld [vmem:[%s61 + $0x340] sm:$0xff]
    %v606 = vld [vmem:[%s61 + $0x350] sm:$0xff]
    %v607 = vld [vmem:[%s61 + $0x360] sm:$0xff]
    %v608 = vld [vmem:[%s61 + $0x370] sm:$0xff]
    %v609 = vld [vmem:[%s61 + $0x380] sm:$0xff]
    %v610 = vld [vmem:[%s61 + $0x390] sm:$0xff]
    %v611 = vld [vmem:[%s61 + $0x3a0] sm:$0xff]
    %v612 = vld [vmem:[%s61 + $0x3b0] sm:$0xff]
    %v613 = vld [vmem:[%s61 + $0x3c0] sm:$0xff]
    %v614 = vld [vmem:[%s61 + $0x3d0] sm:$0xff]
    %v615 = vld [vmem:[%s61 + $0x3e0] sm:$0xff]
    %v616 = vld [vmem:[%s61 + $0x3f0] sm:$0xff]
    %v617 = vpack.c.bf16 %v540, %v540
    %v618 = vpack.c.bf16 %v541, %v541
    %v619 = vpack.c.bf16 %v542, %v542
    %v620 = vpack.c.bf16 %v543, %v543
    %v685 = vunpack.c.l.b16 %v553
    %v686 = vunpack.c.h.b16 %v553
    %v687 = vunpack.c.l.b16 %v554
    %v688 = vunpack.c.h.b16 %v554
    %v689 = vunpack.c.l.b16 %v555
    %v690 = vunpack.c.h.b16 %v555
    %v691 = vunpack.c.l.b16 %v556
    %v692 = vunpack.c.h.b16 %v556
    %v693 = vunpack.c.l.b16 %v557
    %v694 = vunpack.c.h.b16 %v557
    %v695 = vunpack.c.l.b16 %v558
    %v696 = vunpack.c.h.b16 %v558
    %v697 = vunpack.c.l.b16 %v559
    %v698 = vunpack.c.h.b16 %v559
    %v699 = vunpack.c.l.b16 %v560
    %v700 = vunpack.c.h.b16 %v560
    %v701 = vunpack.c.l.b16 %v561
    %v702 = vunpack.c.h.b16 %v561
    %v703 = vunpack.c.l.b16 %v562
    %v704 = vunpack.c.h.b16 %v562
    %v705 = vunpack.c.l.b16 %v563
    %v706 = vunpack.c.h.b16 %v563
    %v707 = vunpack.c.l.b16 %v564
    %v708 = vunpack.c.h.b16 %v564
    %v709 = vunpack.c.l.b16 %v565
    %v710 = vunpack.c.h.b16 %v565
    %v711 = vunpack.c.l.b16 %v566
    %v712 = vunpack.c.h.b16 %v566
    %v713 = vunpack.c.l.b16 %v567
    %v714 = vunpack.c.h.b16 %v567
    %v715 = vunpack.c.l.b16 %v568
    %v716 = vunpack.c.h.b16 %v568
    %v717 = vunpack.c.l.b16 %v569
    %v718 = vunpack.c.h.b16 %v569
    %v719 = vunpack.c.l.b16 %v570
    %v720 = vunpack.c.h.b16 %v570
    %v721 = vunpack.c.l.b16 %v571
    %v722 = vunpack.c.h.b16 %v571
    %v723 = vunpack.c.l.b16 %v572
    %v724 = vunpack.c.h.b16 %v572
    %v725 = vunpack.c.l.b16 %v573
    %v726 = vunpack.c.h.b16 %v573
    %v727 = vunpack.c.l.b16 %v574
    %v728 = vunpack.c.h.b16 %v574
    %v729 = vunpack.c.l.b16 %v575
    %v730 = vunpack.c.h.b16 %v575
    %v731 = vunpack.c.l.b16 %v576
    %v732 = vunpack.c.h.b16 %v576
    %v733 = vunpack.c.l.b16 %v577
    %v734 = vunpack.c.h.b16 %v577
    %v735 = vunpack.c.l.b16 %v578
    %v736 = vunpack.c.h.b16 %v578
    %v737 = vunpack.c.l.b16 %v579
    %v738 = vunpack.c.h.b16 %v579
    %v739 = vunpack.c.l.b16 %v580
    %v740 = vunpack.c.h.b16 %v580
    %v741 = vunpack.c.l.b16 %v581
    %v742 = vunpack.c.h.b16 %v581
    %v743 = vunpack.c.l.b16 %v582
    %v744 = vunpack.c.h.b16 %v582
    %v745 = vunpack.c.l.b16 %v583
    %v746 = vunpack.c.h.b16 %v583
    %v747 = vunpack.c.l.b16 %v584
    %v748 = vunpack.c.h.b16 %v584
    %v749 = vunpack.c.l.b16 %v585
    %v750 = vunpack.c.h.b16 %v585
    %v751 = vunpack.c.l.b16 %v586
    %v752 = vunpack.c.h.b16 %v586
    %v753 = vunpack.c.l.b16 %v587
    %v754 = vunpack.c.h.b16 %v587
    %v755 = vunpack.c.l.b16 %v588
    %v756 = vunpack.c.h.b16 %v588
    %v757 = vunpack.c.l.b16 %v589
    %v758 = vunpack.c.h.b16 %v589
    %v759 = vunpack.c.l.b16 %v590
    %v760 = vunpack.c.h.b16 %v590
    %v761 = vunpack.c.l.b16 %v591
    %v762 = vunpack.c.h.b16 %v591
    %v763 = vunpack.c.l.b16 %v592
    %v764 = vunpack.c.h.b16 %v592
    %v765 = vunpack.c.l.b16 %v593
    %v766 = vunpack.c.h.b16 %v593
    %v767 = vunpack.c.l.b16 %v594
    %v768 = vunpack.c.h.b16 %v594
    %v769 = vunpack.c.l.b16 %v595
    %v770 = vunpack.c.h.b16 %v595
    %v771 = vunpack.c.l.b16 %v596
    %v772 = vunpack.c.h.b16 %v596
    %v773 = vunpack.c.l.b16 %v597
    %v774 = vunpack.c.h.b16 %v597
    %v775 = vunpack.c.l.b16 %v598
    %v776 = vunpack.c.h.b16 %v598
    %v777 = vunpack.c.l.b16 %v599
    %v778 = vunpack.c.h.b16 %v599
    %v779 = vunpack.c.l.b16 %v600
    %v780 = vunpack.c.h.b16 %v600
    %v781 = vunpack.c.l.b16 %v601
    %v782 = vunpack.c.h.b16 %v601
    %v783 = vunpack.c.l.b16 %v602
    %v784 = vunpack.c.h.b16 %v602
    %v785 = vunpack.c.l.b16 %v603
    %v786 = vunpack.c.h.b16 %v603
    %v787 = vunpack.c.l.b16 %v604
    %v788 = vunpack.c.h.b16 %v604
    %v789 = vunpack.c.l.b16 %v605
    %v790 = vunpack.c.h.b16 %v605
    %v791 = vunpack.c.l.b16 %v606
    %v792 = vunpack.c.h.b16 %v606
    %v793 = vunpack.c.l.b16 %v607
    %v794 = vunpack.c.h.b16 %v607
    %v795 = vunpack.c.l.b16 %v608
    %v796 = vunpack.c.h.b16 %v608
    %v797 = vunpack.c.l.b16 %v609
    %v798 = vunpack.c.h.b16 %v609
    %v799 = vunpack.c.l.b16 %v610
    %v800 = vunpack.c.h.b16 %v610
    %v801 = vunpack.c.l.b16 %v611
    %v802 = vunpack.c.h.b16 %v611
    %v803 = vunpack.c.l.b16 %v612
    %v804 = vunpack.c.h.b16 %v612
    %v805 = vunpack.c.l.b16 %v613
    %v806 = vunpack.c.h.b16 %v613
    %v807 = vunpack.c.l.b16 %v614
    %v808 = vunpack.c.h.b16 %v614
    %v809 = vunpack.c.l.b16 %v615
    %v810 = vunpack.c.h.b16 %v615
    %v811 = vunpack.c.l.b16 %v616
    %v812 = vunpack.c.h.b16 %v616
    %v813 = vpack.c.b16 %v687, %v685
    %v814 = vpack.c.b16 %v688, %v686
    %v815 = vpack.c.b16 %v691, %v689
    %v816 = vpack.c.b16 %v692, %v690
    %v817 = vpack.c.b16 %v695, %v693
    %v818 = vpack.c.b16 %v696, %v694
    %v819 = vpack.c.b16 %v699, %v697
    %v820 = vpack.c.b16 %v700, %v698
    %v821 = vpack.c.b16 %v703, %v701
    %v822 = vpack.c.b16 %v704, %v702
    %v823 = vpack.c.b16 %v707, %v705
    %v824 = vpack.c.b16 %v708, %v706
    %v825 = vpack.c.b16 %v711, %v709
    %v826 = vpack.c.b16 %v712, %v710
    %v827 = vpack.c.b16 %v715, %v713
    %v828 = vpack.c.b16 %v716, %v714
    %v829 = vpack.c.b16 %v719, %v717
    %v830 = vpack.c.b16 %v720, %v718
    %v831 = vpack.c.b16 %v723, %v721
    %v832 = vpack.c.b16 %v724, %v722
    %v833 = vpack.c.b16 %v727, %v725
    %v834 = vpack.c.b16 %v728, %v726
    %v835 = vpack.c.b16 %v731, %v729
    %v836 = vpack.c.b16 %v732, %v730
    %v837 = vpack.c.b16 %v735, %v733
    %v838 = vpack.c.b16 %v736, %v734
    %v839 = vpack.c.b16 %v739, %v737
    %v840 = vpack.c.b16 %v740, %v738
    %v841 = vpack.c.b16 %v743, %v741
    %v842 = vpack.c.b16 %v744, %v742
    %v843 = vpack.c.b16 %v747, %v745
    %v844 = vpack.c.b16 %v748, %v746
    %v845 = vpack.c.b16 %v751, %v749
    %v846 = vpack.c.b16 %v752, %v750
    %v847 = vpack.c.b16 %v755, %v753
    %v848 = vpack.c.b16 %v756, %v754
    %v849 = vpack.c.b16 %v759, %v757
    %v850 = vpack.c.b16 %v760, %v758
    %v851 = vpack.c.b16 %v763, %v761
    %v852 = vpack.c.b16 %v764, %v762
    %v853 = vpack.c.b16 %v767, %v765
    %v854 = vpack.c.b16 %v768, %v766
    %v855 = vpack.c.b16 %v771, %v769
    %v856 = vpack.c.b16 %v772, %v770
    %v857 = vpack.c.b16 %v775, %v773
    %v858 = vpack.c.b16 %v776, %v774
    %v859 = vpack.c.b16 %v779, %v777
    %v860 = vpack.c.b16 %v780, %v778
    %v861 = vpack.c.b16 %v783, %v781
    %v862 = vpack.c.b16 %v784, %v782
    %v863 = vpack.c.b16 %v787, %v785
    %v864 = vpack.c.b16 %v788, %v786
    %v865 = vpack.c.b16 %v791, %v789
    %v866 = vpack.c.b16 %v792, %v790
    %v867 = vpack.c.b16 %v795, %v793
    %v868 = vpack.c.b16 %v796, %v794
    %v869 = vpack.c.b16 %v799, %v797
    %v870 = vpack.c.b16 %v800, %v798
    %v871 = vpack.c.b16 %v803, %v801
    %v872 = vpack.c.b16 %v804, %v802
    %v873 = vpack.c.b16 %v807, %v805
    %v874 = vpack.c.b16 %v808, %v806
    %v875 = vpack.c.b16 %v811, %v809
    %v876 = vpack.c.b16 %v812, %v810
    %941 = vmatprep.subr.bf16.mxu0 %v828
    %942 = vmatpush1.bf16.msra.mxu0 %v827
    %943 = vmatprep.subr.bf16.mxu0 %v826
    %944 = vmatpush1.bf16.msra.mxu0 %v825
    %945 = vmatprep.subr.bf16.mxu0 %v824
    %946 = vmatpush1.bf16.msra.mxu0 %v823
    %947 = vmatprep.subr.bf16.mxu0 %v822
    %948 = vmatpush1.bf16.msra.mxu0 %v821
    %949 = vmatprep.subr.bf16.mxu0 %v820
    %950 = vmatpush1.bf16.msra.mxu0 %v819
    %951 = vmatprep.subr.bf16.mxu0 %v818
    %952 = vmatpush1.bf16.msra.mxu0 %v817
    %953 = vmatprep.subr.bf16.mxu0 %v816
    %954 = vmatpush1.bf16.msra.mxu0 %v815
    %955 = vmatprep.subr.bf16.mxu0 %v814
    %956 = vmatpush1.bf16.msra.mxu0 %v813
    %957 = vmatprep.subr.bf16.mxu0 %v844
    %958 = vmatpush2.bf16.msra.mxu0 %v843
    %959 = vmatprep.subr.bf16.mxu0 %v842
    %960 = vmatpush2.bf16.msra.mxu0 %v841
    %961 = vmatprep.subr.bf16.mxu0 %v840
    %962 = vmatpush2.bf16.msra.mxu0 %v839
    %963 = vmatprep.subr.bf16.mxu0 %v838
    %964 = vmatpush2.bf16.msra.mxu0 %v837
    %965 = vmatprep.subr.bf16.mxu0 %v836
    %966 = vmatpush2.bf16.msra.mxu0 %v835
    %967 = vmatprep.subr.bf16.mxu0 %v834
    %968 = vmatpush2.bf16.msra.mxu0 %v833
    %969 = vmatprep.subr.bf16.mxu0 %v832
    %970 = vmatpush2.bf16.msra.mxu0 %v831
    %971 = vmatprep.subr.bf16.mxu0 %v830
    %972 = vmatpush2.bf16.msra.mxu0 %v829
    %973 = vmatprep.mubr.bf16.mxu0 %v618
    %974 = vmatmul.mubr.bf16.gmra.mxu0 %v617
    %v975 = vpop.f32.mrf.mxu0
    %v976 = vadd.f32 0.0, %v975
    %v977 = vpop.f32.mrf.mxu0
    %v978 = vadd.f32 0.0, %v977
    %v979 = vpop.f32.mrf.mxu0
    %v980 = vpop.f32.mrf.mxu0
    %981 = vdwg.mxu0
    %982 = vmatprep.subr.bf16.mxu0 %v860
    %983 = vmatpush1.bf16.msra.mxu0 %v859
    %984 = vmatprep.subr.bf16.mxu0 %v858
    %985 = vmatpush1.bf16.msra.mxu0 %v857
    %986 = vmatprep.subr.bf16.mxu0 %v856
    %987 = vmatpush1.bf16.msra.mxu0 %v855
    %988 = vmatprep.subr.bf16.mxu0 %v854
    %989 = vmatpush1.bf16.msra.mxu0 %v853
    %990 = vmatprep.subr.bf16.mxu0 %v852
    %991 = vmatpush1.bf16.msra.mxu0 %v851
    %992 = vmatprep.subr.bf16.mxu0 %v850
    %993 = vmatpush1.bf16.msra.mxu0 %v849
    %994 = vmatprep.subr.bf16.mxu0 %v848
    %995 = vmatpush1.bf16.msra.mxu0 %v847
    %996 = vmatprep.subr.bf16.mxu0 %v846
    %997 = vmatpush1.bf16.msra.mxu0 %v845
    %998 = vmatprep.subr.bf16.mxu0 %v876
    %999 = vmatpush2.bf16.msra.mxu0 %v875
    %1000 = vmatprep.subr.bf16.mxu0 %v874
    %1001 = vmatpush2.bf16.msra.mxu0 %v873
    %1002 = vmatprep.subr.bf16.mxu0 %v872
    %1003 = vmatpush2.bf16.msra.mxu0 %v871
    %1004 = vmatprep.subr.bf16.mxu0 %v870
    %1005 = vmatpush2.bf16.msra.mxu0 %v869
    %1006 = vmatprep.subr.bf16.mxu0 %v868
    %1007 = vmatpush2.bf16.msra.mxu0 %v867
    %1008 = vmatprep.subr.bf16.mxu0 %v866
    %1009 = vmatpush2.bf16.msra.mxu0 %v865
    %1010 = vmatprep.subr.bf16.mxu0 %v864
    %1011 = vmatpush2.bf16.msra.mxu0 %v863
    %1012 = vmatprep.subr.bf16.mxu0 %v862
    %1013 = vmatpush2.bf16.msra.mxu0 %v861
    %1014 = vmatprep.mubr.bf16.mxu0 %v620
    %1015 = vmatmul.mubr.bf16.gmra.mxu0 %v619
    %v1016 = vpop.f32.mrf.mxu0
    %v1017 = vadd.f32 %v976, %v1016
    %v1018 = vpop.f32.mrf.mxu0
    %v1019 = vadd.f32 %v978, %v1018
    %v1020 = vpop.f32.mrf.mxu0
    %v1021 = vpop.f32.mrf.mxu0
    %1022 = vdwg.mxu0
    %s1023 = scalar_lea.vmem [#allocation7], 2
    %v1024 = vld [vmem:[%s1023] ss:$8 sm:$0x3]
    %s1025 = scalar_lea.vmem [#allocation7], 3
    %v1026 = vld [vmem:[%s1025] ss:$8 sm:$0x3]
    %v1027 = vrot.slane %v1017, 4
    %v1028 = vadd.f32 %v1017, %v1027
    %v1029 = vrot.slane %v1028, 2
    %v1030 = vadd.f32 %v1028, %v1029
    %v1031 = vrot.slane %v1030, 1
    %v1032 = vadd.f32 %v1030, %v1031
    %v1033 = vrot.slane %v1019, 4
    %v1034 = vadd.f32 %v1019, %v1033
    %v1035 = vrot.slane %v1034, 2
    %v1036 = vadd.f32 %v1034, %v1035
    %v1037 = vrot.slane %v1036, 1
    %v1038 = vadd.f32 %v1036, %v1037
    %v1039 = vmul.f32 %v1032, 0.125
    %v1040 = vmul.f32 %v1038, 0.125
    %v1041 = vmul.f32 %v1017, %v1017
    %v1042 = vmul.f32 %v1019, %v1019
    %v1043 = vrot.slane %v1041, 4
    %v1044 = vadd.f32 %v1041, %v1043
    %v1045 = vrot.slane %v1044, 2
    %v1046 = vadd.f32 %v1044, %v1045
    %v1047 = vrot.slane %v1046, 1
    %v1048 = vadd.f32 %v1046, %v1047
    %v1049 = vrot.slane %v1042, 4
    %v1050 = vadd.f32 %v1042, %v1049
    %v1051 = vrot.slane %v1050, 2
    %v1052 = vadd.f32 %v1050, %v1051
    %v1053 = vrot.slane %v1052, 1
    %v1054 = vadd.f32 %v1052, %v1053
    %v1055 = vmul.f32 %v1048, 0.125
    %v1056 = vmul.f32 %v1054, 0.125
    %v1057 = vmul.f32 %v1039, %v1039
    %v1058 = vmul.f32 %v1040, %v1040
    %v1059 = vsub.f32 %v1055, %v1057
    %v1060 = vsub.f32 %v1056, %v1058
    %v1061 = vmax.f32 %v1059, 0.0
    %v1062 = vmax.f32 %v1060, 0.0
    %v1063 = vadd.f32 %v1061, 1e-05
    %v1064 = vadd.f32 %v1062, 1e-05
    %v1065 = vrsqrt.pop %v1063
    %v1066 = vrsqrt.pop %v1064
    %v1069 = vcombine.low %v1065, %v1066
    %v1071 = vunpack.c.l.s4 1966171168
    %v1072 = vunpack.c.0.s8 %v1071
    %v1073 = vlaneseq
    %v1074 = vshrl.u32 %v1073, 7
    %v1075 = vsub.s32 %v1072, %v1074
    %v1076 = vrot.slane %v1069, %v1075
    %v1078 = vunpack.c.l.s4 1966171168
    %v1079 = vunpack.c.0.s8 %v1078
    %v1080 = vlaneseq
    %v1081 = vshrl.u32 %v1080, 7
    %v1082 = vsub.s32 %v1079, %v1081
    %v1083 = vrot.slane %v1076, %v1082
    %v1085 = vmul.f32 %v1024, %v1083
    %v1087 = vlaneseq
    %v1088 = vshrl.u32 %v1087, 7
    %v1089 = vsub.s32 0, %v1088
    %v1090 = vrot.slane %v1085, %v1089
    %v1091 = vlaneseq
    %v1092 = vshrl.u32 %v1091, 7
    %v1093 = vsub.s32 1, %v1092
    %v1094 = vrot.slane %v1085, %v1093
    %v1097 = vmul.f32 %v1039, %v1090
    %v1098 = vmul.f32 %v1040, %v1094
    %v1101 = vcombine.low %v1097, %v1098
    %v1103 = vunpack.c.l.s4 1966171168
    %v1104 = vunpack.c.0.s8 %v1103
    %v1105 = vlaneseq
    %v1106 = vshrl.u32 %v1105, 7
    %v1107 = vsub.s32 %v1104, %v1106
    %v1108 = vrot.slane %v1101, %v1107
    %v1110 = vunpack.c.l.s4 1966171168
    %v1111 = vunpack.c.0.s8 %v1110
    %v1112 = vlaneseq
    %v1113 = vshrl.u32 %v1112, 7
    %v1114 = vsub.s32 %v1111, %v1113
    %v1115 = vrot.slane %v1108, %v1114
    %v1117 = vsub.f32 %v1026, %v1115
    %v1118 = vmul.f32 %v1017, %v1090
    %v1119 = vmul.f32 %v1019, %v1094
    %v1121 = vlaneseq
    %v1122 = vshrl.u32 %v1121, 7
    %v1123 = vsub.s32 0, %v1122
    %v1124 = vrot.slane %v1117, %v1123
    %v1125 = vlaneseq
    %v1126 = vshrl.u32 %v1125, 7
    %v1127 = vsub.s32 1, %v1126
    %v1128 = vrot.slane %v1117, %v1127
    %v1131 = vadd.f32 %v1118, %v1124
    %v1132 = vadd.f32 %v1119, %v1128
    %v1133 = vtanh.pop %v1131
    %v1134 = vtanh.pop %v1132
    %s1135 = smul.u32 4, 32
    %s1136 = smul.u32 %s1135, 1
    %s1137 = sshll.u32 %s1136, 4
    %1138 = dma.done [#allocation3], %s1137
    %s1139 = scalar_lea.hbm %s1, 2048
    %s1141 = sshll.u32 %s61, 4
    %s1142 = int_to_ptr.vmem [resolvable:$true] %s1141
    %1144 = dma.hbm_to_vmem [thread:$0]  %s1139, 1024, %s1142, %s62, 64, 256, 4
    %v1145 = vld [vmem:[#allocation2] sm:$0xf]
    %v1146 = vld [vmem:[#allocation2 + $0x10] sm:$0xf]
    %v1147 = vld [vmem:[#allocation2 + $0x20] sm:$0xf]
    %v1148 = vld [vmem:[#allocation2 + $0x30] sm:$0xf]
    %v1149 = vld [vmem:[#allocation2 + $0x40] sm:$0xf]
    %v1150 = vld [vmem:[#allocation2 + $0x50] sm:$0xf]
    %v1151 = vld [vmem:[#allocation2 + $0x60] sm:$0xf]
    %v1152 = vld [vmem:[#allocation2 + $0x70] sm:$0xf]
    %v1153 = vld [vmem:[#allocation2 + $0x80] sm:$0xf]
    %v1154 = vld [vmem:[#allocation2 + $0x90] sm:$0xf]
    %v1155 = vld [vmem:[#allocation2 + $0xa0] sm:$0xf]
    %v1156 = vld [vmem:[#allocation2 + $0xb0] sm:$0xf]
    %v1157 = vld [vmem:[#allocation2 + $0xc0] sm:$0xf]
    %v1158 = vld [vmem:[#allocation2 + $0xd0] sm:$0xf]
    %v1159 = vld [vmem:[#allocation2 + $0xe0] sm:$0xf]
    %v1160 = vld [vmem:[#allocation2 + $0xf0] sm:$0xf]
    %v1161 = vld [vmem:[#allocation2 + $0x100] sm:$0xf]
    %v1162 = vld [vmem:[#allocation2 + $0x110] sm:$0xf]
    %v1163 = vld [vmem:[#allocation2 + $0x120] sm:$0xf]
    %v1164 = vld [vmem:[#allocation2 + $0x130] sm:$0xf]
    %v1165 = vld [vmem:[#allocation2 + $0x140] sm:$0xf]
    %v1166 = vld [vmem:[#allocation2 + $0x150] sm:$0xf]
    %v1167 = vld [vmem:[#allocation2 + $0x160] sm:$0xf]
    %v1168 = vld [vmem:[#allocation2 + $0x170] sm:$0xf]
    %v1169 = vld [vmem:[#allocation2 + $0x180] sm:$0xf]
    %v1170 = vld [vmem:[#allocation2 + $0x190] sm:$0xf]
    %v1171 = vld [vmem:[#allocation2 + $0x1a0] sm:$0xf]
    %v1172 = vld [vmem:[#allocation2 + $0x1b0] sm:$0xf]
    %v1173 = vld [vmem:[#allocation2 + $0x1c0] sm:$0xf]
    %v1174 = vld [vmem:[#allocation2 + $0x1d0] sm:$0xf]
    %v1175 = vld [vmem:[#allocation2 + $0x1e0] sm:$0xf]
    %v1176 = vld [vmem:[#allocation2 + $0x1f0] sm:$0xf]
    %v1177 = vpack.c.bf16 %v1133, %v1133
    %v1178 = vpack.c.bf16 %v1134, %v1134
    %v1211 = vunpack.c.l.b16 %v1145
    %v1212 = vunpack.c.l.b16 %v1146
    %v1213 = vunpack.c.l.b16 %v1147
    %v1214 = vunpack.c.l.b16 %v1148
    %v1215 = vunpack.c.l.b16 %v1149
    %v1216 = vunpack.c.l.b16 %v1150
    %v1217 = vunpack.c.l.b16 %v1151
    %v1218 = vunpack.c.l.b16 %v1152
    %v1219 = vunpack.c.l.b16 %v1153
    %v1220 = vunpack.c.l.b16 %v1154
    %v1221 = vunpack.c.l.b16 %v1155
    %v1222 = vunpack.c.l.b16 %v1156
    %v1223 = vunpack.c.l.b16 %v1157
    %v1224 = vunpack.c.l.b16 %v1158
    %v1225 = vunpack.c.l.b16 %v1159
    %v1226 = vunpack.c.l.b16 %v1160
    %v1227 = vunpack.c.l.b16 %v1161
    %v1228 = vunpack.c.l.b16 %v1162
    %v1229 = vunpack.c.l.b16 %v1163
    %v1230 = vunpack.c.l.b16 %v1164
    %v1231 = vunpack.c.l.b16 %v1165
    %v1232 = vunpack.c.l.b16 %v1166
    %v1233 = vunpack.c.l.b16 %v1167
    %v1234 = vunpack.c.l.b16 %v1168
    %v1235 = vunpack.c.l.b16 %v1169
    %v1236 = vunpack.c.l.b16 %v1170
    %v1237 = vunpack.c.l.b16 %v1171
    %v1238 = vunpack.c.l.b16 %v1172
    %v1239 = vunpack.c.l.b16 %v1173
    %v1240 = vunpack.c.l.b16 %v1174
    %v1241 = vunpack.c.l.b16 %v1175
    %v1242 = vunpack.c.l.b16 %v1176
    %v1243 = vpack.c.b16 %v1212, %v1211
    %v1244 = vpack.c.b16 %v1214, %v1213
    %v1245 = vpack.c.b16 %v1216, %v1215
    %v1246 = vpack.c.b16 %v1218, %v1217
    %v1247 = vpack.c.b16 %v1220, %v1219
    %v1248 = vpack.c.b16 %v1222, %v1221
    %v1249 = vpack.c.b16 %v1224, %v1223
    %v1250 = vpack.c.b16 %v1226, %v1225
    %v1251 = vpack.c.b16 %v1228, %v1227
    %v1252 = vpack.c.b16 %v1230, %v1229
    %v1253 = vpack.c.b16 %v1232, %v1231
    %v1254 = vpack.c.b16 %v1234, %v1233
    %v1255 = vpack.c.b16 %v1236, %v1235
    %v1256 = vpack.c.b16 %v1238, %v1237
    %v1257 = vpack.c.b16 %v1240, %v1239
    %v1258 = vpack.c.b16 %v1242, %v1241
    %1275 = vmatprep.subr.bf16.mxu0 0
    %1276 = vmatpush1.bf16.msra.mxu0 %v1250
    %1277 = vmatprep.subr.bf16.mxu0 0
    %1278 = vmatpush1.bf16.msra.mxu0 %v1249
    %1279 = vmatprep.subr.bf16.mxu0 0
    %1280 = vmatpush1.bf16.msra.mxu0 %v1248
    %1281 = vmatprep.subr.bf16.mxu0 0
    %1282 = vmatpush1.bf16.msra.mxu0 %v1247
    %1283 = vmatprep.subr.bf16.mxu0 0
    %1284 = vmatpush1.bf16.msra.mxu0 %v1246
    %1285 = vmatprep.subr.bf16.mxu0 0
    %1286 = vmatpush1.bf16.msra.mxu0 %v1245
    %1287 = vmatprep.subr.bf16.mxu0 0
    %1288 = vmatpush1.bf16.msra.mxu0 %v1244
    %1289 = vmatprep.subr.bf16.mxu0 0
    %1290 = vmatpush1.bf16.msra.mxu0 %v1243
    %1291 = vmatprep.subr.bf16.mxu0 0
    %1292 = vmatpush2.bf16.msra.mxu0 %v1258
    %1293 = vmatprep.subr.bf16.mxu0 0
    %1294 = vmatpush2.bf16.msra.mxu0 %v1257
    %1295 = vmatprep.subr.bf16.mxu0 0
    %1296 = vmatpush2.bf16.msra.mxu0 %v1256
    %1297 = vmatprep.subr.bf16.mxu0 0
    %1298 = vmatpush2.bf16.msra.mxu0 %v1255
    %1299 = vmatprep.subr.bf16.mxu0 0
    %1300 = vmatpush2.bf16.msra.mxu0 %v1254
    %1301 = vmatprep.subr.bf16.mxu0 0
    %1302 = vmatpush2.bf16.msra.mxu0 %v1253
    %1303 = vmatprep.subr.bf16.mxu0 0
    %1304 = vmatpush2.bf16.msra.mxu0 %v1252
    %1305 = vmatprep.subr.bf16.mxu0 0
    %1306 = vmatpush2.bf16.msra.mxu0 %v1251
    %1307 = vmatprep.mubr.bf16.mxu0 %v1178
    %1308 = vmatmul.mubr.bf16.gmra.mxu0 %v1177
    %v1309 = vpop.f32.mrf.mxu0
    %v1310 = vadd.f32 0.0, %v1309
    %v1311 = vpop.f32.mrf.mxu0
    %v1312 = vpop.f32.mrf.mxu0
    %v1313 = vpop.f32.mrf.mxu0
    %1314 = vdwg.mxu0
    %v1315 = vld [vmem:[#allocation7 + $0x4] ss:$0 sm:$0xff]
    %v1316 = vld [vmem:[#allocation7 + $0x5] ss:$0 sm:$0xff]
    %v1317 = vrot.slane %v1310, 4
    %v1318 = vadd.f32 %v1310, %v1317
    %v1319 = vrot.slane %v1318, 2
    %v1320 = vadd.f32 %v1318, %v1319
    %v1321 = vrot.slane %v1320, 1
    %v1322 = vadd.f32 %v1320, %v1321
    %v1323 = vmul.f32 %v1322, 0.125
    %v1324 = vmul.f32 %v1310, %v1310
    %v1325 = vrot.slane %v1324, 4
    %v1326 = vadd.f32 %v1324, %v1325
    %v1327 = vrot.slane %v1326, 2
    %v1328 = vadd.f32 %v1326, %v1327
    %v1329 = vrot.slane %v1328, 1
    %v1330 = vadd.f32 %v1328, %v1329
    %v1331 = vmul.f32 %v1330, 0.125
    %v1332 = vmul.f32 %v1323, %v1323
    %v1333 = vsub.f32 %v1331, %v1332
    %v1334 = vmax.f32 %v1333, 0.0
    %v1335 = vadd.f32 %v1334, 1e-05
    %v1336 = vrsqrt.pop %v1335
    %v1337 = vmul.f32 %v1315, %v1336
    %v1338 = vmul.f32 %v1323, %v1337
    %v1339 = vsub.f32 %v1316, %v1338
    %v1340 = vmul.f32 %v1310, %v1337
    %v1341 = vadd.f32 %v1340, %v1339
    %v1342 = vtanh.pop %v1341
    %s1343 = smul.u32 %s57, 1
    %s1344 = sshll.u32 %s1343, 4
    %1345 = dma.done %s62, %s1344
    %s1346 = scalar_lea.hbm %s1, 3072
    %s1348 = sshll.u32 [#allocation2], 4
    %s1349 = int_to_ptr.vmem [resolvable:$true] %s1348
    %1351 = dma.hbm_to_vmem [thread:$0]  %s1346, 1024, %s1349, [#allocation3], 64, 256, 4
    %v1352 = vld [vmem:[%s61] sm:$0xf]
    %v1353 = vld [vmem:[%s61 + $0x10] sm:$0xf]
    %v1354 = vld [vmem:[%s61 + $0x20] sm:$0xf]
    %v1355 = vld [vmem:[%s61 + $0x30] sm:$0xf]
    %v1356 = vld [vmem:[%s61 + $0x40] sm:$0xf]
    %v1357 = vld [vmem:[%s61 + $0x50] sm:$0xf]
    %v1358 = vld [vmem:[%s61 + $0x60] sm:$0xf]
    %v1359 = vld [vmem:[%s61 + $0x70] sm:$0xf]
    %v1360 = vld [vmem:[%s61 + $0x80] sm:$0xf]
    %v1361 = vld [vmem:[%s61 + $0x90] sm:$0xf]
    %v1362 = vld [vmem:[%s61 + $0xa0] sm:$0xf]
    %v1363 = vld [vmem:[%s61 + $0xb0] sm:$0xf]
    %v1364 = vld [vmem:[%s61 + $0xc0] sm:$0xf]
    %v1365 = vld [vmem:[%s61 + $0xd0] sm:$0xf]
    %v1366 = vld [vmem:[%s61 + $0xe0] sm:$0xf]
    %v1367 = vld [vmem:[%s61 + $0xf0] sm:$0xf]
    %v1368 = vpack.c.bf16 %v1342, %v1342
    %v1385 = vunpack.c.l.b16 %v1352
    %v1386 = vunpack.c.l.b16 %v1353
    %v1387 = vunpack.c.l.b16 %v1354
    %v1388 = vunpack.c.l.b16 %v1355
    %v1389 = vunpack.c.l.b16 %v1356
    %v1390 = vunpack.c.l.b16 %v1357
    %v1391 = vunpack.c.l.b16 %v1358
    %v1392 = vunpack.c.l.b16 %v1359
    %v1393 = vunpack.c.l.b16 %v1360
    %v1394 = vunpack.c.l.b16 %v1361
    %v1395 = vunpack.c.l.b16 %v1362
    %v1396 = vunpack.c.l.b16 %v1363
    %v1397 = vunpack.c.l.b16 %v1364
    %v1398 = vunpack.c.l.b16 %v1365
    %v1399 = vunpack.c.l.b16 %v1366
    %v1400 = vunpack.c.l.b16 %v1367
    %v1401 = vpack.c.b16 %v1386, %v1385
    %v1402 = vpack.c.b16 %v1388, %v1387
    %v1403 = vpack.c.b16 %v1390, %v1389
    %v1404 = vpack.c.b16 %v1392, %v1391
    %v1405 = vpack.c.b16 %v1394, %v1393
    %v1406 = vpack.c.b16 %v1396, %v1395
    %v1407 = vpack.c.b16 %v1398, %v1397
    %v1408 = vpack.c.b16 %v1400, %v1399
    %1417 = vmatprep.subr.bf16.mxu0 0
    %1418 = vmatpush1.bf16.msra.mxu0 %v1408
    %1419 = vmatprep.subr.bf16.mxu0 0
    %1420 = vmatpush1.bf16.msra.mxu0 %v1407
    %1421 = vmatprep.subr.bf16.mxu0 0
    %1422 = vmatpush1.bf16.msra.mxu0 %v1406
    %1423 = vmatprep.subr.bf16.mxu0 0
    %1424 = vmatpush1.bf16.msra.mxu0 %v1405
    %1425 = vmatprep.subr.bf16.mxu0 0
    %1426 = vmatpush1.bf16.msra.mxu0 %v1404
    %1427 = vmatprep.subr.bf16.mxu0 0
    %1428 = vmatpush1.bf16.msra.mxu0 %v1403
    %1429 = vmatprep.subr.bf16.mxu0 0
    %1430 = vmatpush1.bf16.msra.mxu0 %v1402
    %1431 = vmatprep.subr.bf16.mxu0 0
    %1432 = vmatpush1.bf16.msra.mxu0 %v1401
    %1433 = vmatprep.subr.bf16.mxu0 0
    %1434 = vmatpush2.bf16.msra.mxu0 0
    %1435 = vmatprep.subr.bf16.mxu0 0
    %1436 = vmatpush2.bf16.msra.mxu0 0
    %1437 = vmatprep.subr.bf16.mxu0 0
    %1438 = vmatpush2.bf16.msra.mxu0 0
    %1439 = vmatprep.subr.bf16.mxu0 0
    %1440 = vmatpush2.bf16.msra.mxu0 0
    %1441 = vmatprep.subr.bf16.mxu0 0
    %1442 = vmatpush2.bf16.msra.mxu0 0
    %1443 = vmatprep.subr.bf16.mxu0 0
    %1444 = vmatpush2.bf16.msra.mxu0 0
    %1445 = vmatprep.subr.bf16.mxu0 0
    %1446 = vmatpush2.bf16.msra.mxu0 0
    %1447 = vmatprep.subr.bf16.mxu0 0
    %1448 = vmatpush2.bf16.msra.mxu0 0
    %1449 = vmatprep.mubr.bf16.mxu0 0
    %1450 = vmatmul.mubr.bf16.gmra.mxu0 %v1368
    %v1451 = vpop.f32.mrf.mxu0
    %v1452 = vadd.f32 0.0, %v1451
    %v1453 = vpop.f32.mrf.mxu0
    %v1454 = vpop.f32.mrf.mxu0
    %v1455 = vpop.f32.mrf.mxu0
    %1456 = vdwg.mxu0
    %v1457 = vld [vmem:[#allocation7 + $0x6] ss:$0 sm:$0xff]
    %v1458 = vld [vmem:[#allocation7 + $0x7] ss:$0 sm:$0xff]
    %v1459 = vrot.slane %v1452, 4
    %v1460 = vadd.f32 %v1452, %v1459
    %v1461 = vrot.slane %v1460, 2
    %v1462 = vadd.f32 %v1460, %v1461
    %v1463 = vrot.slane %v1462, 1
    %v1464 = vadd.f32 %v1462, %v1463
    %v1465 = vmul.f32 %v1464, 0.125
    %v1466 = vmul.f32 %v1452, %v1452
    %v1467 = vrot.slane %v1466, 4
    %v1468 = vadd.f32 %v1466, %v1467
    %v1469 = vrot.slane %v1468, 2
    %v1470 = vadd.f32 %v1468, %v1469
    %v1471 = vrot.slane %v1470, 1
    %v1472 = vadd.f32 %v1470, %v1471
    %v1473 = vmul.f32 %v1472, 0.125
    %v1474 = vmul.f32 %v1465, %v1465
    %v1475 = vsub.f32 %v1473, %v1474
    %v1476 = vmax.f32 %v1475, 0.0
    %v1477 = vadd.f32 %v1476, 1e-05
    %v1478 = vrsqrt.pop %v1477
    %v1479 = vmul.f32 %v1457, %v1478
    %v1480 = vmul.f32 %v1465, %v1479
    %v1481 = vsub.f32 %v1458, %v1480
    %v1482 = vmul.f32 %v1452, %v1479
    %v1483 = vadd.f32 %v1482, %v1481
    %v1484 = vtanh.pop %v1483
    %s1485 = sshll.u32 %s1343, 4
    %1486 = dma.done [#allocation3], %s1485
    %s1487 = scalar_lea.hbm %s1, 4096
    %s1489 = sshll.u32 %s61, 4
    %s1490 = int_to_ptr.vmem [resolvable:$true] %s1489
    %1492 = dma.hbm_to_vmem [thread:$0]  %s1487, 1024, %s1490, %s62, 64, 256, 4
    %v1493 = vld [vmem:[#allocation2] sm:$0xf]
    %v1494 = vld [vmem:[#allocation2 + $0x10] sm:$0xf]
    %v1495 = vld [vmem:[#allocation2 + $0x20] sm:$0xf]
    %v1496 = vld [vmem:[#allocation2 + $0x30] sm:$0xf]
    %v1497 = vld [vmem:[#allocation2 + $0x40] sm:$0xf]
    %v1498 = vld [vmem:[#allocation2 + $0x50] sm:$0xf]
    %v1499 = vld [vmem:[#allocation2 + $0x60] sm:$0xf]
    %v1500 = vld [vmem:[#allocation2 + $0x70] sm:$0xf]
    %v1501 = vld [vmem:[#allocation2 + $0x80] sm:$0xf]
    %v1502 = vld [vmem:[#allocation2 + $0x90] sm:$0xf]
    %v1503 = vld [vmem:[#allocation2 + $0xa0] sm:$0xf]
    %v1504 = vld [vmem:[#allocation2 + $0xb0] sm:$0xf]
    %v1505 = vld [vmem:[#allocation2 + $0xc0] sm:$0xf]
    %v1506 = vld [vmem:[#allocation2 + $0xd0] sm:$0xf]
    %v1507 = vld [vmem:[#allocation2 + $0xe0] sm:$0xf]
    %v1508 = vld [vmem:[#allocation2 + $0xf0] sm:$0xf]
    %v1509 = vpack.c.bf16 %v1484, %v1484
    %v1526 = vunpack.c.l.b16 %v1493
    %v1527 = vunpack.c.l.b16 %v1494
    %v1528 = vunpack.c.l.b16 %v1495
    %v1529 = vunpack.c.l.b16 %v1496
    %v1530 = vunpack.c.l.b16 %v1497
    %v1531 = vunpack.c.l.b16 %v1498
    %v1532 = vunpack.c.l.b16 %v1499
    %v1533 = vunpack.c.l.b16 %v1500
    %v1534 = vunpack.c.l.b16 %v1501
    %v1535 = vunpack.c.l.b16 %v1502
    %v1536 = vunpack.c.l.b16 %v1503
    %v1537 = vunpack.c.l.b16 %v1504
    %v1538 = vunpack.c.l.b16 %v1505
    %v1539 = vunpack.c.l.b16 %v1506
    %v1540 = vunpack.c.l.b16 %v1507
    %v1541 = vunpack.c.l.b16 %v1508
    %v1542 = vpack.c.b16 %v1527, %v1526
    %v1543 = vpack.c.b16 %v1529, %v1528
    %v1544 = vpack.c.b16 %v1531, %v1530
    %v1545 = vpack.c.b16 %v1533, %v1532
    %v1546 = vpack.c.b16 %v1535, %v1534
    %v1547 = vpack.c.b16 %v1537, %v1536
    %v1548 = vpack.c.b16 %v1539, %v1538
    %v1549 = vpack.c.b16 %v1541, %v1540
    %1558 = vmatprep.subr.bf16.mxu0 0
    %1559 = vmatpush1.bf16.msra.mxu0 %v1549
    %1560 = vmatprep.subr.bf16.mxu0 0
    %1561 = vmatpush1.bf16.msra.mxu0 %v1548
    %1562 = vmatprep.subr.bf16.mxu0 0
    %1563 = vmatpush1.bf16.msra.mxu0 %v1547
    %1564 = vmatprep.subr.bf16.mxu0 0
    %1565 = vmatpush1.bf16.msra.mxu0 %v1546
    %1566 = vmatprep.subr.bf16.mxu0 0
    %1567 = vmatpush1.bf16.msra.mxu0 %v1545
    %1568 = vmatprep.subr.bf16.mxu0 0
    %1569 = vmatpush1.bf16.msra.mxu0 %v1544
    %1570 = vmatprep.subr.bf16.mxu0 0
    %1571 = vmatpush1.bf16.msra.mxu0 %v1543
    %1572 = vmatprep.subr.bf16.mxu0 0
    %1573 = vmatpush1.bf16.msra.mxu0 %v1542
    %1574 = vmatprep.subr.bf16.mxu0 0
    %1575 = vmatpush2.bf16.msra.mxu0 0
    %1576 = vmatprep.subr.bf16.mxu0 0
    %1577 = vmatpush2.bf16.msra.mxu0 0
    %1578 = vmatprep.subr.bf16.mxu0 0
    %1579 = vmatpush2.bf16.msra.mxu0 0
    %1580 = vmatprep.subr.bf16.mxu0 0
    %1581 = vmatpush2.bf16.msra.mxu0 0
    %1582 = vmatprep.subr.bf16.mxu0 0
    %1583 = vmatpush2.bf16.msra.mxu0 0
    %1584 = vmatprep.subr.bf16.mxu0 0
    %1585 = vmatpush2.bf16.msra.mxu0 0
    %1586 = vmatprep.subr.bf16.mxu0 0
    %1587 = vmatpush2.bf16.msra.mxu0 0
    %1588 = vmatprep.subr.bf16.mxu0 0
    %1589 = vmatpush2.bf16.msra.mxu0 0
    %1590 = vmatprep.mubr.bf16.mxu0 0
    %1591 = vmatmul.mubr.bf16.gmra.mxu0 %v1509
    %v1592 = vpop.f32.mrf.mxu0
    %v1593 = vadd.f32 0.0, %v1592
    %v1594 = vpop.f32.mrf.mxu0
    %v1595 = vpop.f32.mrf.mxu0
    %v1596 = vpop.f32.mrf.mxu0
    %1597 = vdwg.mxu0
    %v1598 = vld [vmem:[#allocation7 + $0x20] ss:$0 sm:$0xff]
    %v1599 = vld [vmem:[#allocation7 + $0x21] ss:$0 sm:$0xff]
    %v1600 = vrot.slane %v1593, 4
    %v1601 = vadd.f32 %v1593, %v1600
    %v1602 = vrot.slane %v1601, 2
    %v1603 = vadd.f32 %v1601, %v1602
    %v1604 = vrot.slane %v1603, 1
    %v1605 = vadd.f32 %v1603, %v1604
    %v1606 = vmul.f32 %v1605, 0.125
    %v1607 = vmul.f32 %v1593, %v1593
    %v1608 = vrot.slane %v1607, 4
    %v1609 = vadd.f32 %v1607, %v1608
    %v1610 = vrot.slane %v1609, 2
    %v1611 = vadd.f32 %v1609, %v1610
    %v1612 = vrot.slane %v1611, 1
    %v1613 = vadd.f32 %v1611, %v1612
    %v1614 = vmul.f32 %v1613, 0.125
    %v1615 = vmul.f32 %v1606, %v1606
    %v1616 = vsub.f32 %v1614, %v1615
    %v1617 = vmax.f32 %v1616, 0.0
    %v1618 = vadd.f32 %v1617, 1e-05
    %v1619 = vrsqrt.pop %v1618
    %v1620 = vmul.f32 %v1598, %v1619
    %v1621 = vmul.f32 %v1606, %v1620
    %v1622 = vsub.f32 %v1599, %v1621
    %v1623 = vmul.f32 %v1593, %v1620
    %v1624 = vadd.f32 %v1623, %v1622
    %v1625 = vtanh.pop %v1624
    %s1626 = sshll.u32 %s1343, 4
    %1627 = dma.done %s62, %s1626
    %s1628 = scalar_lea.hbm %s1, 5120
    %s1630 = sshll.u32 [#allocation2], 4
    %s1631 = int_to_ptr.vmem [resolvable:$true] %s1630
    %1633 = dma.hbm_to_vmem [thread:$0]  %s1628, 1024, %s1631, [#allocation3], 64, 256, 4
    %v1634 = vld [vmem:[%s61] sm:$0xf]
    %v1635 = vld [vmem:[%s61 + $0x10] sm:$0xf]
    %v1636 = vld [vmem:[%s61 + $0x20] sm:$0xf]
    %v1637 = vld [vmem:[%s61 + $0x30] sm:$0xf]
    %v1638 = vld [vmem:[%s61 + $0x40] sm:$0xf]
    %v1639 = vld [vmem:[%s61 + $0x50] sm:$0xf]
    %v1640 = vld [vmem:[%s61 + $0x60] sm:$0xf]
    %v1641 = vld [vmem:[%s61 + $0x70] sm:$0xf]
    %v1642 = vld [vmem:[%s61 + $0x80] sm:$0xf]
    %v1643 = vld [vmem:[%s61 + $0x90] sm:$0xf]
    %v1644 = vld [vmem:[%s61 + $0xa0] sm:$0xf]
    %v1645 = vld [vmem:[%s61 + $0xb0] sm:$0xf]
    %v1646 = vld [vmem:[%s61 + $0xc0] sm:$0xf]
    %v1647 = vld [vmem:[%s61 + $0xd0] sm:$0xf]
    %v1648 = vld [vmem:[%s61 + $0xe0] sm:$0xf]
    %v1649 = vld [vmem:[%s61 + $0xf0] sm:$0xf]
    %v1650 = vpack.c.bf16 %v1625, %v1625
    %v1651 = vld [vmem:[#allocation7 + $0x22] ss:$0 sm:$0xff]
    %v1668 = vunpack.c.l.b16 %v1634
    %v1669 = vunpack.c.l.b16 %v1635
    %v1670 = vunpack.c.l.b16 %v1636
    %v1671 = vunpack.c.l.b16 %v1637
    %v1672 = vunpack.c.l.b16 %v1638
    %v1673 = vunpack.c.l.b16 %v1639
    %v1674 = vunpack.c.l.b16 %v1640
    %v1675 = vunpack.c.l.b16 %v1641
    %v1676 = vunpack.c.l.b16 %v1642
    %v1677 = vunpack.c.l.b16 %v1643
    %v1678 = vunpack.c.l.b16 %v1644
    %v1679 = vunpack.c.l.b16 %v1645
    %v1680 = vunpack.c.l.b16 %v1646
    %v1681 = vunpack.c.l.b16 %v1647
    %v1682 = vunpack.c.l.b16 %v1648
    %v1683 = vunpack.c.l.b16 %v1649
    %v1684 = vpack.c.b16 %v1669, %v1668
    %v1685 = vpack.c.b16 %v1671, %v1670
    %v1686 = vpack.c.b16 %v1673, %v1672
    %v1687 = vpack.c.b16 %v1675, %v1674
    %v1688 = vpack.c.b16 %v1677, %v1676
    %v1689 = vpack.c.b16 %v1679, %v1678
    %v1690 = vpack.c.b16 %v1681, %v1680
    %v1691 = vpack.c.b16 %v1683, %v1682
    %1700 = vmatprep.subr.bf16.mxu0 0
    %1701 = vmatpush1.bf16.msra.mxu0 %v1691
    %1702 = vmatprep.subr.bf16.mxu0 0
    %1703 = vmatpush1.bf16.msra.mxu0 %v1690
    %1704 = vmatprep.subr.bf16.mxu0 0
    %1705 = vmatpush1.bf16.msra.mxu0 %v1689
    %1706 = vmatprep.subr.bf16.mxu0 0
    %1707 = vmatpush1.bf16.msra.mxu0 %v1688
    %1708 = vmatprep.subr.bf16.mxu0 0
    %1709 = vmatpush1.bf16.msra.mxu0 %v1687
    %1710 = vmatprep.subr.bf16.mxu0 0
    %1711 = vmatpush1.bf16.msra.mxu0 %v1686
    %1712 = vmatprep.subr.bf16.mxu0 0
    %1713 = vmatpush1.bf16.msra.mxu0 %v1685
    %1714 = vmatprep.subr.bf16.mxu0 0
    %1715 = vmatpush1.bf16.msra.mxu0 %v1684
    %1716 = vmatprep.subr.bf16.mxu0 0
    %1717 = vmatpush2.bf16.msra.mxu0 0
    %1718 = vmatprep.subr.bf16.mxu0 0
    %1719 = vmatpush2.bf16.msra.mxu0 0
    %1720 = vmatprep.subr.bf16.mxu0 0
    %1721 = vmatpush2.bf16.msra.mxu0 0
    %1722 = vmatprep.subr.bf16.mxu0 0
    %1723 = vmatpush2.bf16.msra.mxu0 0
    %1724 = vmatprep.subr.bf16.mxu0 0
    %1725 = vmatpush2.bf16.msra.mxu0 0
    %1726 = vmatprep.subr.bf16.mxu0 0
    %1727 = vmatpush2.bf16.msra.mxu0 0
    %1728 = vmatprep.subr.bf16.mxu0 0
    %1729 = vmatpush2.bf16.msra.mxu0 0
    %1730 = vmatprep.subr.bf16.mxu0 0
    %1731 = vmatpush2.bf16.msra.mxu0 0
    %1732 = vmatprep.mubr.bf16.mxu0 0
    %1733 = vmatmul.mubr.bf16.gmra.mxu0 %v1650
    %v1734 = vpop.f32.mrf.mxu0
    %v1735 = vadd.f32 %v1651, %v1734
    %v1736 = vpop.f32.mrf.mxu0
    %v1737 = vpop.f32.mrf.mxu0
    %v1738 = vpop.f32.mrf.mxu0
    %1739 = vdwg.mxu0
    %1740 = vst [vmem:[#allocation10] sm:$0xff] %v1735
    %s1741 = sshll.u32 %s1343, 4
    %1742 = dma.done [#allocation3], %s1741
    %s1743 = scalar_lea.hbm %s1, 6144
    %s1745 = sshll.u32 %s61, 4
    %s1746 = int_to_ptr.vmem [resolvable:$true] %s1745
    %1748 = dma.hbm_to_vmem [thread:$0]  %s1743, 1024, %s1746, %s62, 64, 256, 4
    %v1749 = vld [vmem:[#allocation2] sm:$0xf]
    %v1750 = vld [vmem:[#allocation2 + $0x10] sm:$0xf]
    %v1751 = vld [vmem:[#allocation2 + $0x20] sm:$0xf]
    %v1752 = vld [vmem:[#allocation2 + $0x30] sm:$0xf]
    %v1753 = vld [vmem:[#allocation2 + $0x40] sm:$0xf]
    %v1754 = vld [vmem:[#allocation2 + $0x50] sm:$0xf]
    %v1755 = vld [vmem:[#allocation2 + $0x60] sm:$0xf]
    %v1756 = vld [vmem:[#allocation2 + $0x70] sm:$0xf]
    %v1757 = vld [vmem:[#allocation2 + $0x80] sm:$0xf]
    %v1758 = vld [vmem:[#allocation2 + $0x90] sm:$0xf]
    %v1759 = vld [vmem:[#allocation2 + $0xa0] sm:$0xf]
    %v1760 = vld [vmem:[#allocation2 + $0xb0] sm:$0xf]
    %v1761 = vld [vmem:[#allocation2 + $0xc0] sm:$0xf]
    %v1762 = vld [vmem:[#allocation2 + $0xd0] sm:$0xf]
    %v1763 = vld [vmem:[#allocation2 + $0xe0] sm:$0xf]
    %v1764 = vld [vmem:[#allocation2 + $0xf0] sm:$0xf]
    %v1765 = vpack.c.bf16 %v1735, %v1735
    %v1782 = vunpack.c.l.b16 %v1749
    %v1783 = vunpack.c.l.b16 %v1750
    %v1784 = vunpack.c.l.b16 %v1751
    %v1785 = vunpack.c.l.b16 %v1752
    %v1786 = vunpack.c.l.b16 %v1753
    %v1787 = vunpack.c.l.b16 %v1754
    %v1788 = vunpack.c.l.b16 %v1755
    %v1789 = vunpack.c.l.b16 %v1756
    %v1790 = vunpack.c.l.b16 %v1757
    %v1791 = vunpack.c.l.b16 %v1758
    %v1792 = vunpack.c.l.b16 %v1759
    %v1793 = vunpack.c.l.b16 %v1760
    %v1794 = vunpack.c.l.b16 %v1761
    %v1795 = vunpack.c.l.b16 %v1762
    %v1796 = vunpack.c.l.b16 %v1763
    %v1797 = vunpack.c.l.b16 %v1764
    %v1798 = vpack.c.b16 %v1783, %v1782
    %v1799 = vpack.c.b16 %v1785, %v1784
    %v1800 = vpack.c.b16 %v1787, %v1786
    %v1801 = vpack.c.b16 %v1789, %v1788
    %v1802 = vpack.c.b16 %v1791, %v1790
    %v1803 = vpack.c.b16 %v1793, %v1792
    %v1804 = vpack.c.b16 %v1795, %v1794
    %v1805 = vpack.c.b16 %v1797, %v1796
    %1814 = vmatprep.subr.bf16.mxu0 0
    %1815 = vmatpush1.bf16.msra.mxu0 %v1805
    %1816 = vmatprep.subr.bf16.mxu0 0
    %1817 = vmatpush1.bf16.msra.mxu0 %v1804
    %1818 = vmatprep.subr.bf16.mxu0 0
    %1819 = vmatpush1.bf16.msra.mxu0 %v1803
    %1820 = vmatprep.subr.bf16.mxu0 0
    %1821 = vmatpush1.bf16.msra.mxu0 %v1802
    %1822 = vmatprep.subr.bf16.mxu0 0
    %1823 = vmatpush1.bf16.msra.mxu0 %v1801
    %1824 = vmatprep.subr.bf16.mxu0 0
    %1825 = vmatpush1.bf16.msra.mxu0 %v1800
    %1826 = vmatprep.subr.bf16.mxu0 0
    %1827 = vmatpush1.bf16.msra.mxu0 %v1799
    %1828 = vmatprep.subr.bf16.mxu0 0
    %1829 = vmatpush1.bf16.msra.mxu0 %v1798
    %1830 = vmatprep.subr.bf16.mxu0 0
    %1831 = vmatpush2.bf16.msra.mxu0 0
    %1832 = vmatprep.subr.bf16.mxu0 0
    %1833 = vmatpush2.bf16.msra.mxu0 0
    %1834 = vmatprep.subr.bf16.mxu0 0
    %1835 = vmatpush2.bf16.msra.mxu0 0
    %1836 = vmatprep.subr.bf16.mxu0 0
    %1837 = vmatpush2.bf16.msra.mxu0 0
    %1838 = vmatprep.subr.bf16.mxu0 0
    %1839 = vmatpush2.bf16.msra.mxu0 0
    %1840 = vmatprep.subr.bf16.mxu0 0
    %1841 = vmatpush2.bf16.msra.mxu0 0
    %1842 = vmatprep.subr.bf16.mxu0 0
    %1843 = vmatpush2.bf16.msra.mxu0 0
    %1844 = vmatprep.subr.bf16.mxu0 0
    %1845 = vmatpush2.bf16.msra.mxu0 0
    %1846 = vmatprep.mubr.bf16.mxu0 0
    %1847 = vmatmul.mubr.bf16.gmra.mxu0 %v1765
    %v1848 = vpop.f32.mrf.mxu0
    %v1849 = vadd.f32 0.0, %v1848
    %v1850 = vpop.f32.mrf.mxu0
    %v1851 = vpop.f32.mrf.mxu0
    %v1852 = vpop.f32.mrf.mxu0
    %1853 = vdwg.mxu0
    %v1854 = vld [vmem:[#allocation7 + $0x23] ss:$0 sm:$0xff]
    %v1855 = vld [vmem:[#allocation7 + $0x24] ss:$0 sm:$0xff]
    %v1856 = vrot.slane %v1849, 4
    %v1857 = vadd.f32 %v1849, %v1856
    %v1858 = vrot.slane %v1857, 2
    %v1859 = vadd.f32 %v1857, %v1858
    %v1860 = vrot.slane %v1859, 1
    %v1861 = vadd.f32 %v1859, %v1860
    %v1862 = vmul.f32 %v1861, 0.125
    %v1863 = vmul.f32 %v1849, %v1849
    %v1864 = vrot.slane %v1863, 4
    %v1865 = vadd.f32 %v1863, %v1864
    %v1866 = vrot.slane %v1865, 2
    %v1867 = vadd.f32 %v1865, %v1866
    %v1868 = vrot.slane %v1867, 1
    %v1869 = vadd.f32 %v1867, %v1868
    %v1870 = vmul.f32 %v1869, 0.125
    %v1871 = vmul.f32 %v1862, %v1862
    %v1872 = vsub.f32 %v1870, %v1871
    %v1873 = vmax.f32 %v1872, 0.0
    %v1874 = vadd.f32 %v1873, 1e-05
    %v1875 = vrsqrt.pop %v1874
    %v1876 = vmul.f32 %v1854, %v1875
    %v1877 = vmul.f32 %v1862, %v1876
    %v1878 = vsub.f32 %v1855, %v1877
    %v1879 = vmul.f32 %v1849, %v1876
    %v1880 = vadd.f32 %v1879, %v1878
    %v1881 = vtanh.pop %v1880
    %s1882 = sshll.u32 %s1343, 4
    %1883 = dma.done %s62, %s1882
    %s1884 = scalar_lea.hbm %s1, 7168
    %s1886 = sshll.u32 [#allocation2], 4
    %s1887 = int_to_ptr.vmem [resolvable:$true] %s1886
    %1889 = dma.hbm_to_vmem [thread:$0]  %s1884, 1024, %s1887, [#allocation3], 64, 256, 4
    %v1890 = vld [vmem:[%s61] sm:$0xf]
    %v1891 = vld [vmem:[%s61 + $0x10] sm:$0xf]
    %v1892 = vld [vmem:[%s61 + $0x20] sm:$0xf]
    %v1893 = vld [vmem:[%s61 + $0x30] sm:$0xf]
    %v1894 = vld [vmem:[%s61 + $0x40] sm:$0xf]
    %v1895 = vld [vmem:[%s61 + $0x50] sm:$0xf]
    %v1896 = vld [vmem:[%s61 + $0x60] sm:$0xf]
    %v1897 = vld [vmem:[%s61 + $0x70] sm:$0xf]
    %v1898 = vld [vmem:[%s61 + $0x80] sm:$0xf]
    %v1899 = vld [vmem:[%s61 + $0x90] sm:$0xf]
    %v1900 = vld [vmem:[%s61 + $0xa0] sm:$0xf]
    %v1901 = vld [vmem:[%s61 + $0xb0] sm:$0xf]
    %v1902 = vld [vmem:[%s61 + $0xc0] sm:$0xf]
    %v1903 = vld [vmem:[%s61 + $0xd0] sm:$0xf]
    %v1904 = vld [vmem:[%s61 + $0xe0] sm:$0xf]
    %v1905 = vld [vmem:[%s61 + $0xf0] sm:$0xf]
    %v1906 = vpack.c.bf16 %v1881, %v1881
    %v1923 = vunpack.c.l.b16 %v1890
    %v1924 = vunpack.c.l.b16 %v1891
    %v1925 = vunpack.c.l.b16 %v1892
    %v1926 = vunpack.c.l.b16 %v1893
    %v1927 = vunpack.c.l.b16 %v1894
    %v1928 = vunpack.c.l.b16 %v1895
    %v1929 = vunpack.c.l.b16 %v1896
    %v1930 = vunpack.c.l.b16 %v1897
    %v1931 = vunpack.c.l.b16 %v1898
    %v1932 = vunpack.c.l.b16 %v1899
    %v1933 = vunpack.c.l.b16 %v1900
    %v1934 = vunpack.c.l.b16 %v1901
    %v1935 = vunpack.c.l.b16 %v1902
    %v1936 = vunpack.c.l.b16 %v1903
    %v1937 = vunpack.c.l.b16 %v1904
    %v1938 = vunpack.c.l.b16 %v1905
    %v1939 = vpack.c.b16 %v1924, %v1923
    %v1940 = vpack.c.b16 %v1926, %v1925
    %v1941 = vpack.c.b16 %v1928, %v1927
    %v1942 = vpack.c.b16 %v1930, %v1929
    %v1943 = vpack.c.b16 %v1932, %v1931
    %v1944 = vpack.c.b16 %v1934, %v1933
    %v1945 = vpack.c.b16 %v1936, %v1935
    %v1946 = vpack.c.b16 %v1938, %v1937
    %1955 = vmatprep.subr.bf16.mxu0 0
    %1956 = vmatpush1.bf16.msra.mxu0 %v1946
    %1957 = vmatprep.subr.bf16.mxu0 0
    %1958 = vmatpush1.bf16.msra.mxu0 %v1945
    %1959 = vmatprep.subr.bf16.mxu0 0
    %1960 = vmatpush1.bf16.msra.mxu0 %v1944
    %1961 = vmatprep.subr.bf16.mxu0 0
    %1962 = vmatpush1.bf16.msra.mxu0 %v1943
    %1963 = vmatprep.subr.bf16.mxu0 0
    %1964 = vmatpush1.bf16.msra.mxu0 %v1942
    %1965 = vmatprep.subr.bf16.mxu0 0
    %1966 = vmatpush1.bf16.msra.mxu0 %v1941
    %1967 = vmatprep.subr.bf16.mxu0 0
    %1968 = vmatpush1.bf16.msra.mxu0 %v1940
    %1969 = vmatprep.subr.bf16.mxu0 0
    %1970 = vmatpush1.bf16.msra.mxu0 %v1939
    %1971 = vmatprep.subr.bf16.mxu0 0
    %1972 = vmatpush2.bf16.msra.mxu0 0
    %1973 = vmatprep.subr.bf16.mxu0 0
    %1974 = vmatpush2.bf16.msra.mxu0 0
    %1975 = vmatprep.subr.bf16.mxu0 0
    %1976 = vmatpush2.bf16.msra.mxu0 0
    %1977 = vmatprep.subr.bf16.mxu0 0
    %1978 = vmatpush2.bf16.msra.mxu0 0
    %1979 = vmatprep.subr.bf16.mxu0 0
    %1980 = vmatpush2.bf16.msra.mxu0 0
    %1981 = vmatprep.subr.bf16.mxu0 0
    %1982 = vmatpush2.bf16.msra.mxu0 0
    %1983 = vmatprep.subr.bf16.mxu0 0
    %1984 = vmatpush2.bf16.msra.mxu0 0
    %1985 = vmatprep.subr.bf16.mxu0 0
    %1986 = vmatpush2.bf16.msra.mxu0 0
    %1987 = vmatprep.mubr.bf16.mxu0 0
    %1988 = vmatmul.mubr.bf16.gmra.mxu0 %v1906
    %v1989 = vpop.f32.mrf.mxu0
    %v1990 = vadd.f32 0.0, %v1989
    %v1991 = vpop.f32.mrf.mxu0
    %v1992 = vpop.f32.mrf.mxu0
    %v1993 = vpop.f32.mrf.mxu0
    %1994 = vdwg.mxu0
    %v1995 = vld [vmem:[#allocation7 + $0x25] ss:$0 sm:$0xff]
    %v1996 = vld [vmem:[#allocation7 + $0x26] ss:$0 sm:$0xff]
    %v1997 = vrot.slane %v1990, 4
    %v1998 = vadd.f32 %v1990, %v1997
    %v1999 = vrot.slane %v1998, 2
    %v2000 = vadd.f32 %v1998, %v1999
    %v2001 = vrot.slane %v2000, 1
    %v2002 = vadd.f32 %v2000, %v2001
    %v2003 = vmul.f32 %v2002, 0.125
    %v2004 = vmul.f32 %v1990, %v1990
    %v2005 = vrot.slane %v2004, 4
    %v2006 = vadd.f32 %v2004, %v2005
    %v2007 = vrot.slane %v2006, 2
    %v2008 = vadd.f32 %v2006, %v2007
    %v2009 = vrot.slane %v2008, 1
    %v2010 = vadd.f32 %v2008, %v2009
    %v2011 = vmul.f32 %v2010, 0.125
    %v2012 = vmul.f32 %v2003, %v2003
    %v2013 = vsub.f32 %v2011, %v2012
    %v2014 = vmax.f32 %v2013, 0.0
    %v2015 = vadd.f32 %v2014, 1e-05
    %v2016 = vrsqrt.pop %v2015
    %v2017 = vmul.f32 %v1995, %v2016
    %v2018 = vmul.f32 %v2003, %v2017
    %v2019 = vsub.f32 %v1996, %v2018
    %v2020 = vmul.f32 %v1990, %v2017
    %v2021 = vadd.f32 %v2020, %v2019
    %v2022 = vtanh.pop %v2021
    %s2023 = sshll.u32 %s1343, 4
    %2024 = dma.done [#allocation3], %s2023
    %s2025 = scalar_lea.hbm %s2, 8192
    %s2027 = sshll.u32 %s61, 4
    %s2028 = int_to_ptr.vmem [resolvable:$true] %s2027
    %2030 = dma.hbm_to_vmem [thread:$0]  %s2025, 2048, %s2028, %s62, 128, 256, 8
    %v2031 = vld [vmem:[#allocation2] sm:$0xf]
    %v2032 = vld [vmem:[#allocation2 + $0x10] sm:$0xf]
    %v2033 = vld [vmem:[#allocation2 + $0x20] sm:$0xf]
    %v2034 = vld [vmem:[#allocation2 + $0x30] sm:$0xf]
    %v2035 = vld [vmem:[#allocation2 + $0x40] sm:$0xf]
    %v2036 = vld [vmem:[#allocation2 + $0x50] sm:$0xf]
    %v2037 = vld [vmem:[#allocation2 + $0x60] sm:$0xf]
    %v2038 = vld [vmem:[#allocation2 + $0x70] sm:$0xf]
    %v2039 = vld [vmem:[#allocation2 + $0x80] sm:$0xf]
    %v2040 = vld [vmem:[#allocation2 + $0x90] sm:$0xf]
    %v2041 = vld [vmem:[#allocation2 + $0xa0] sm:$0xf]
    %v2042 = vld [vmem:[#allocation2 + $0xb0] sm:$0xf]
    %v2043 = vld [vmem:[#allocation2 + $0xc0] sm:$0xf]
    %v2044 = vld [vmem:[#allocation2 + $0xd0] sm:$0xf]
    %v2045 = vld [vmem:[#allocation2 + $0xe0] sm:$0xf]
    %v2046 = vld [vmem:[#allocation2 + $0xf0] sm:$0xf]
    %v2047 = vpack.c.bf16 %v2022, %v2022
    %v2064 = vunpack.c.l.b16 %v2031
    %v2065 = vunpack.c.l.b16 %v2032
    %v2066 = vunpack.c.l.b16 %v2033
    %v2067 = vunpack.c.l.b16 %v2034
    %v2068 = vunpack.c.l.b16 %v2035
    %v2069 = vunpack.c.l.b16 %v2036
    %v2070 = vunpack.c.l.b16 %v2037
    %v2071 = vunpack.c.l.b16 %v2038
    %v2072 = vunpack.c.l.b16 %v2039
    %v2073 = vunpack.c.l.b16 %v2040
    %v2074 = vunpack.c.l.b16 %v2041
    %v2075 = vunpack.c.l.b16 %v2042
    %v2076 = vunpack.c.l.b16 %v2043
    %v2077 = vunpack.c.l.b16 %v2044
    %v2078 = vunpack.c.l.b16 %v2045
    %v2079 = vunpack.c.l.b16 %v2046
    %v2080 = vpack.c.b16 %v2065, %v2064
    %v2081 = vpack.c.b16 %v2067, %v2066
    %v2082 = vpack.c.b16 %v2069, %v2068
    %v2083 = vpack.c.b16 %v2071, %v2070
    %v2084 = vpack.c.b16 %v2073, %v2072
    %v2085 = vpack.c.b16 %v2075, %v2074
    %v2086 = vpack.c.b16 %v2077, %v2076
    %v2087 = vpack.c.b16 %v2079, %v2078
    %2096 = vmatprep.subr.bf16.mxu0 0
    %2097 = vmatpush1.bf16.msra.mxu0 %v2087
    %2098 = vmatprep.subr.bf16.mxu0 0
    %2099 = vmatpush1.bf16.msra.mxu0 %v2086
    %2100 = vmatprep.subr.bf16.mxu0 0
    %2101 = vmatpush1.bf16.msra.mxu0 %v2085
    %2102 = vmatprep.subr.bf16.mxu0 0
    %2103 = vmatpush1.bf16.msra.mxu0 %v2084
    %2104 = vmatprep.subr.bf16.mxu0 0
    %2105 = vmatpush1.bf16.msra.mxu0 %v2083
    %2106 = vmatprep.subr.bf16.mxu0 0
    %2107 = vmatpush1.bf16.msra.mxu0 %v2082
    %2108 = vmatprep.subr.bf16.mxu0 0
    %2109 = vmatpush1.bf16.msra.mxu0 %v2081
    %2110 = vmatprep.subr.bf16.mxu0 0
    %2111 = vmatpush1.bf16.msra.mxu0 %v2080
    %2112 = vmatprep.subr.bf16.mxu0 0
    %2113 = vmatpush2.bf16.msra.mxu0 0
    %2114 = vmatprep.subr.bf16.mxu0 0
    %2115 = vmatpush2.bf16.msra.mxu0 0
    %2116 = vmatprep.subr.bf16.mxu0 0
    %2117 = vmatpush2.bf16.msra.mxu0 0
    %2118 = vmatprep.subr.bf16.mxu0 0
    %2119 = vmatpush2.bf16.msra.mxu0 0
    %2120 = vmatprep.subr.bf16.mxu0 0
    %2121 = vmatpush2.bf16.msra.mxu0 0
    %2122 = vmatprep.subr.bf16.mxu0 0
    %2123 = vmatpush2.bf16.msra.mxu0 0
    %2124 = vmatprep.subr.bf16.mxu0 0
    %2125 = vmatpush2.bf16.msra.mxu0 0
    %2126 = vmatprep.subr.bf16.mxu0 0
    %2127 = vmatpush2.bf16.msra.mxu0 0
    %2128 = vmatprep.mubr.bf16.mxu0 0
    %2129 = vmatmul.mubr.bf16.gmra.mxu0 %v2047
    %v2130 = vpop.f32.mrf.mxu0
    %v2131 = vadd.f32 0.0, %v2130
    %v2132 = vpop.f32.mrf.mxu0
    %v2133 = vpop.f32.mrf.mxu0
    %v2134 = vpop.f32.mrf.mxu0
    %2135 = vdwg.mxu0
    %v2136 = vld [vmem:[#allocation7 + $0x27] ss:$0 sm:$0xff]
    %v2137 = vld [vmem:[#allocation7 + $0x40] ss:$0 sm:$0xff]
    %v2138 = vrot.slane %v2131, 4
    %v2139 = vadd.f32 %v2131, %v2138
    %v2140 = vrot.slane %v2139, 2
    %v2141 = vadd.f32 %v2139, %v2140
    %v2142 = vrot.slane %v2141, 1
    %v2143 = vadd.f32 %v2141, %v2142
    %v2144 = vmul.f32 %v2143, 0.125
    %v2145 = vmul.f32 %v2131, %v2131
    %v2146 = vrot.slane %v2145, 4
    %v2147 = vadd.f32 %v2145, %v2146
    %v2148 = vrot.slane %v2147, 2
    %v2149 = vadd.f32 %v2147, %v2148
    %v2150 = vrot.slane %v2149, 1
    %v2151 = vadd.f32 %v2149, %v2150
    %v2152 = vmul.f32 %v2151, 0.125
    %v2153 = vmul.f32 %v2144, %v2144
    %v2154 = vsub.f32 %v2152, %v2153
    %v2155 = vmax.f32 %v2154, 0.0
    %v2156 = vadd.f32 %v2155, 1e-05
    %v2157 = vrsqrt.pop %v2156
    %v2158 = vmul.f32 %v2136, %v2157
    %v2159 = vmul.f32 %v2144, %v2158
    %v2160 = vsub.f32 %v2137, %v2159
    %v2161 = vmul.f32 %v2131, %v2158
    %v2162 = vadd.f32 %v2161, %v2160
    %v2163 = vtanh.pop %v2162
    %s2164 = smul.u32 %s57, 2
    %s2165 = sshll.u32 %s2164, 4
    %2166 = dma.done %s62, %s2165
    %s2167 = scalar_lea.hbm %s3, 4096
    // Predicated region
    $region22: #{tpu_custom_call.1} parent=1 // pred_check
      _
    $region23: #{tpu_custom_call.1} parent=1 // pred_check_branch
      %2169 = sbr.rel target = $region25
    $region24: #{tpu_custom_call.1} parent=1 // pred_region
      %2170 = sst [smem:[#allocation14]] [#allocation26]
      %2171 = sst [smem:[#allocation15]] [#allocation25]
    $region25: #{tpu_custom_call.1} parent=1 // pred_fallthru
      _
    %2173 = shalt.err (0)
    %s2175 = sshll.u32 [#allocation2], 4
    %s2176 = int_to_ptr.vmem [resolvable:$true] %s2175
    %2178 = dma.hbm_to_vmem [thread:$0]  %s2167, 8192, %s2176, [#allocation3]
    %v2179 = vld [vmem:[%s61] sm:$0xff]
    %v2180 = vld [vmem:[%s61 + $0x10] sm:$0xff]
    %v2181 = vld [vmem:[%s61 + $0x20] sm:$0xff]
    %v2182 = vld [vmem:[%s61 + $0x30] sm:$0xff]
    %v2183 = vld [vmem:[%s61 + $0x40] sm:$0xff]
    %v2184 = vld [vmem:[%s61 + $0x50] sm:$0xff]
    %v2185 = vld [vmem:[%s61 + $0x60] sm:$0xff]
    %v2186 = vld [vmem:[%s61 + $0x70] sm:$0xff]
    %v2187 = vld [vmem:[%s61 + $0x80] sm:$0xff]
    %v2188 = vld [vmem:[%s61 + $0x90] sm:$0xff]
    %v2189 = vld [vmem:[%s61 + $0xa0] sm:$0xff]
    %v2190 = vld [vmem:[%s61 + $0xb0] sm:$0xff]
    %v2191 = vld [vmem:[%s61 + $0xc0] sm:$0xff]
    %v2192 = vld [vmem:[%s61 + $0xd0] sm:$0xff]
    %v2193 = vld [vmem:[%s61 + $0xe0] sm:$0xff]
    %v2194 = vld [vmem:[%s61 + $0xf0] sm:$0xff]
    %v2195 = vpack.c.bf16 %v2163, %v2163
    %v2212 = vunpack.c.l.b16 %v2179
    %v2213 = vunpack.c.h.b16 %v2179
    %v2214 = vunpack.c.l.b16 %v2180
    %v2215 = vunpack.c.h.b16 %v2180
    %v2216 = vunpack.c.l.b16 %v2181
    %v2217 = vunpack.c.h.b16 %v2181
    %v2218 = vunpack.c.l.b16 %v2182
    %v2219 = vunpack.c.h.b16 %v2182
    %v2220 = vunpack.c.l.b16 %v2183
    %v2221 = vunpack.c.h.b16 %v2183
    %v2222 = vunpack.c.l.b16 %v2184
    %v2223 = vunpack.c.h.b16 %v2184
    %v2224 = vunpack.c.l.b16 %v2185
    %v2225 = vunpack.c.h.b16 %v2185
    %v2226 = vunpack.c.l.b16 %v2186
    %v2227 = vunpack.c.h.b16 %v2186
    %v2228 = vunpack.c.l.b16 %v2187
    %v2229 = vunpack.c.h.b16 %v2187
    %v2230 = vunpack.c.l.b16 %v2188
    %v2231 = vunpack.c.h.b16 %v2188
    %v2232 = vunpack.c.l.b16 %v2189
    %v2233 = vunpack.c.h.b16 %v2189
    %v2234 = vunpack.c.l.b16 %v2190
    %v2235 = vunpack.c.h.b16 %v2190
    %v2236 = vunpack.c.l.b16 %v2191
    %v2237 = vunpack.c.h.b16 %v2191
    %v2238 = vunpack.c.l.b16 %v2192
    %v2239 = vunpack.c.h.b16 %v2192
    %v2240 = vunpack.c.l.b16 %v2193
    %v2241 = vunpack.c.h.b16 %v2193
    %v2242 = vunpack.c.l.b16 %v2194
    %v2243 = vunpack.c.h.b16 %v2194
    %v2244 = vpack.c.b16 %v2214, %v2212
    %v2245 = vpack.c.b16 %v2215, %v2213
    %v2246 = vpack.c.b16 %v2218, %v2216
    %v2247 = vpack.c.b16 %v2219, %v2217
    %v2248 = vpack.c.b16 %v2222, %v2220
    %v2249 = vpack.c.b16 %v2223, %v2221
    %v2250 = vpack.c.b16 %v2226, %v2224
    %v2251 = vpack.c.b16 %v2227, %v2225
    %v2252 = vpack.c.b16 %v2230, %v2228
    %v2253 = vpack.c.b16 %v2231, %v2229
    %v2254 = vpack.c.b16 %v2234, %v2232
    %v2255 = vpack.c.b16 %v2235, %v2233
    %v2256 = vpack.c.b16 %v2238, %v2236
    %v2257 = vpack.c.b16 %v2239, %v2237
    %v2258 = vpack.c.b16 %v2242, %v2240
    %v2259 = vpack.c.b16 %v2243, %v2241
    %2276 = vmatprep.subr.bf16.mxu0 %v2259
    %2277 = vmatpush1.bf16.msra.mxu0 %v2258
    %2278 = vmatprep.subr.bf16.mxu0 %v2257
    %2279 = vmatpush1.bf16.msra.mxu0 %v2256
    %2280 = vmatprep.subr.bf16.mxu0 %v2255
    %2281 = vmatpush1.bf16.msra.mxu0 %v2254
    %2282 = vmatprep.subr.bf16.mxu0 %v2253
    %2283 = vmatpush1.bf16.msra.mxu0 %v2252
    %2284 = vmatprep.subr.bf16.mxu0 %v2251
    %2285 = vmatpush1.bf16.msra.mxu0 %v2250
    %2286 = vmatprep.subr.bf16.mxu0 %v2249
    %2287 = vmatpush1.bf16.msra.mxu0 %v2248
    %2288 = vmatprep.subr.bf16.mxu0 %v2247
    %2289 = vmatpush1.bf16.msra.mxu0 %v2246
    %2290 = vmatprep.subr.bf16.mxu0 %v2245
    %2291 = vmatpush1.bf16.msra.mxu0 %v2244
    %2292 = vmatprep.subr.bf16.mxu0 0
    %2293 = vmatpush2.bf16.msra.mxu0 0
    %2294 = vmatprep.subr.bf16.mxu0 0
    %2295 = vmatpush2.bf16.msra.mxu0 0
    %2296 = vmatprep.subr.bf16.mxu0 0
    %2297 = vmatpush2.bf16.msra.mxu0 0
    %2298 = vmatprep.subr.bf16.mxu0 0
    %2299 = vmatpush2.bf16.msra.mxu0 0
    %2300 = vmatprep.subr.bf16.mxu0 0
    %2301 = vmatpush2.bf16.msra.mxu0 0
    %2302 = vmatprep.subr.bf16.mxu0 0
    %2303 = vmatpush2.bf16.msra.mxu0 0
    %2304 = vmatprep.subr.bf16.mxu0 0
    %2305 = vmatpush2.bf16.msra.mxu0 0
    %2306 = vmatprep.subr.bf16.mxu0 0
    %2307 = vmatpush2.bf16.msra.mxu0 0
    %2308 = vmatprep.mubr.bf16.mxu0 0
    %2309 = vmatmul.mubr.bf16.gmra.mxu0 %v2195
    %v2310 = vpop.f32.mrf.mxu0
    %v2311 = vadd.f32 0.0, %v2310
    %v2312 = vpop.f32.mrf.mxu0
    %v2313 = vadd.f32 0.0, %v2312
    %v2314 = vpop.f32.mrf.mxu0
    %v2315 = vpop.f32.mrf.mxu0
    %2316 = vdwg.mxu0
    %s2317 = scalar_lea.vmem [#allocation7], 65
    %v2318 = vld [vmem:[%s2317] ss:$8 sm:$0x3]
    %s2319 = scalar_lea.vmem [#allocation7], 66
    %v2320 = vld [vmem:[%s2319] ss:$8 sm:$0x3]
    %v2321 = vrot.slane %v2311, 4
    %v2322 = vadd.f32 %v2311, %v2321
    %v2323 = vrot.slane %v2322, 2
    %v2324 = vadd.f32 %v2322, %v2323
    %v2325 = vrot.slane %v2324, 1
    %v2326 = vadd.f32 %v2324, %v2325
    %v2327 = vrot.slane %v2313, 4
    %v2328 = vadd.f32 %v2313, %v2327
    %v2329 = vrot.slane %v2328, 2
    %v2330 = vadd.f32 %v2328, %v2329
    %v2331 = vrot.slane %v2330, 1
    %v2332 = vadd.f32 %v2330, %v2331
    %v2333 = vmul.f32 %v2326, 0.125
    %v2334 = vmul.f32 %v2332, 0.125
    %v2335 = vmul.f32 %v2311, %v2311
    %v2336 = vmul.f32 %v2313, %v2313
    %v2337 = vrot.slane %v2335, 4
    %v2338 = vadd.f32 %v2335, %v2337
    %v2339 = vrot.slane %v2338, 2
    %v2340 = vadd.f32 %v2338, %v2339
    %v2341 = vrot.slane %v2340, 1
    %v2342 = vadd.f32 %v2340, %v2341
    %v2343 = vrot.slane %v2336, 4
    %v2344 = vadd.f32 %v2336, %v2343
    %v2345 = vrot.slane %v2344, 2
    %v2346 = vadd.f32 %v2344, %v2345
    %v2347 = vrot.slane %v2346, 1
    %v2348 = vadd.f32 %v2346, %v2347
    %v2349 = vmul.f32 %v2342, 0.125
    %v2350 = vmul.f32 %v2348, 0.125
    %v2351 = vmul.f32 %v2333, %v2333
    %v2352 = vmul.f32 %v2334, %v2334
    %v2353 = vsub.f32 %v2349, %v2351
    %v2354 = vsub.f32 %v2350, %v2352
    %v2355 = vmax.f32 %v2353, 0.0
    %v2356 = vmax.f32 %v2354, 0.0
    %v2357 = vadd.f32 %v2355, 1e-05
    %v2358 = vadd.f32 %v2356, 1e-05
    %v2359 = vrsqrt.pop %v2357
    %v2360 = vrsqrt.pop %v2358
    %v2363 = vcombine.low %v2359, %v2360
    %v2365 = vunpack.c.l.s4 1966171168
    %v2366 = vunpack.c.0.s8 %v2365
    %v2367 = vlaneseq
    %v2368 = vshrl.u32 %v2367, 7
    %v2369 = vsub.s32 %v2366, %v2368
    %v2370 = vrot.slane %v2363, %v2369
    %v2372 = vunpack.c.l.s4 1966171168
    %v2373 = vunpack.c.0.s8 %v2372
    %v2374 = vlaneseq
    %v2375 = vshrl.u32 %v2374, 7
    %v2376 = vsub.s32 %v2373, %v2375
    %v2377 = vrot.slane %v2370, %v2376
    %v2379 = vmul.f32 %v2318, %v2377
    %v2381 = vlaneseq
    %v2382 = vshrl.u32 %v2381, 7
    %v2383 = vsub.s32 0, %v2382
    %v2384 = vrot.slane %v2379, %v2383
    %v2385 = vlaneseq
    %v2386 = vshrl.u32 %v2385, 7
    %v2387 = vsub.s32 1, %v2386
    %v2388 = vrot.slane %v2379, %v2387
    %v2391 = vmul.f32 %v2333, %v2384
    %v2392 = vmul.f32 %v2334, %v2388
    %v2395 = vcombine.low %v2391, %v2392
    %v2397 = vunpack.c.l.s4 1966171168
    %v2398 = vunpack.c.0.s8 %v2397
    %v2399 = vlaneseq
    %v2400 = vshrl.u32 %v2399, 7
    %v2401 = vsub.s32 %v2398, %v2400
    %v2402 = vrot.slane %v2395, %v2401
    %v2404 = vunpack.c.l.s4 1966171168
    %v2405 = vunpack.c.0.s8 %v2404
    %v2406 = vlaneseq
    %v2407 = vshrl.u32 %v2406, 7
    %v2408 = vsub.s32 %v2405, %v2407
    %v2409 = vrot.slane %v2402, %v2408
    %v2411 = vsub.f32 %v2320, %v2409
    %v2412 = vmul.f32 %v2311, %v2384
    %v2413 = vmul.f32 %v2313, %v2388
    %v2415 = vlaneseq
    %v2416 = vshrl.u32 %v2415, 7
    %v2417 = vsub.s32 0, %v2416
    %v2418 = vrot.slane %v2411, %v2417
    %v2419 = vlaneseq
    %v2420 = vshrl.u32 %v2419, 7
    %v2421 = vsub.s32 1, %v2420
    %v2422 = vrot.slane %v2411, %v2421
    %v2425 = vadd.f32 %v2412, %v2418
    %v2426 = vadd.f32 %v2413, %v2422
    %v2427 = vtanh.pop %v2425
    %v2428 = vtanh.pop %v2426
    %s2429 = smul.u32 %s1135, 4
    %s2430 = sshll.u32 %s2429, 4
    %2431 = dma.done [#allocation3], %s2430
    %s2432 = scalar_lea.hbm %s1, 8192
    %s2434 = sshll.u32 %s61, 4
    %s2435 = int_to_ptr.vmem [resolvable:$true] %s2434
    %2437 = dma.hbm_to_vmem [thread:$0]  %s2432, 4096, %s2435, %s62, 64, 256, 4
    %v2438 = vld [vmem:[#allocation2] sm:$0xff]
    %v2439 = vld [vmem:[#allocation2 + $0x8] sm:$0xff]
    %v2440 = vld [vmem:[#allocation2 + $0x10] sm:$0xff]
    %v2441 = vld [vmem:[#allocation2 + $0x18] sm:$0xff]
    %v2442 = vld [vmem:[#allocation2 + $0x20] sm:$0xff]
    %v2443 = vld [vmem:[#allocation2 + $0x28] sm:$0xff]
    %v2444 = vld [vmem:[#allocation2 + $0x30] sm:$0xff]
    %v2445 = vld [vmem:[#allocation2 + $0x38] sm:$0xff]
    %v2446 = vld [vmem:[#allocation2 + $0x40] sm:$0xff]
    %v2447 = vld [vmem:[#allocation2 + $0x48] sm:$0xff]
    %v2448 = vld [vmem:[#allocation2 + $0x50] sm:$0xff]
    %v2449 = vld [vmem:[#allocation2 + $0x58] sm:$0xff]
    %v2450 = vld [vmem:[#allocation2 + $0x60] sm:$0xff]
    %v2451 = vld [vmem:[#allocation2 + $0x68] sm:$0xff]
    %v2452 = vld [vmem:[#allocation2 + $0x70] sm:$0xff]
    %v2453 = vld [vmem:[#allocation2 + $0x78] sm:$0xff]
    %v2454 = vld [vmem:[#allocation2 + $0x80] sm:$0xff]
    %v2455 = vld [vmem:[#allocation2 + $0x88] sm:$0xff]
    %v2456 = vld [vmem:[#allocation2 + $0x90] sm:$0xff]
    %v2457 = vld [vmem:[#allocation2 + $0x98] sm:$0xff]
    %v2458 = vld [vmem:[#allocation2 + $0xa0] sm:$0xff]
    %v2459 = vld [vmem:[#allocation2 + $0xa8] sm:$0xff]
    %v2460 = vld [vmem:[#allocation2 + $0xb0] sm:$0xff]
    %v2461 = vld [vmem:[#allocation2 + $0xb8] sm:$0xff]
    %v2462 = vld [vmem:[#allocation2 + $0xc0] sm:$0xff]
    %v2463 = vld [vmem:[#allocation2 + $0xc8] sm:$0xff]
    %v2464 = vld [vmem:[#allocation2 + $0xd0] sm:$0xff]
    %v2465 = vld [vmem:[#allocation2 + $0xd8] sm:$0xff]
    %v2466 = vld [vmem:[#allocation2 + $0xe0] sm:$0xff]
    %v2467 = vld [vmem:[#allocation2 + $0xe8] sm:$0xff]
    %v2468 = vld [vmem:[#allocation2 + $0xf0] sm:$0xff]
    %v2469 = vld [vmem:[#allocation2 + $0xf8] sm:$0xff]
    %v2470 = vld [vmem:[#allocation2 + $0x100] sm:$0xff]
    %v2471 = vld [vmem:[#allocation2 + $0x108] sm:$0xff]
    %v2472 = vld [vmem:[#allocation2 + $0x110] sm:$0xff]
    %v2473 = vld [vmem:[#allocation2 + $0x118] sm:$0xff]
    %v2474 = vld [vmem:[#allocation2 + $0x120] sm:$0xff]
    %v2475 = vld [vmem:[#allocation2 + $0x128] sm:$0xff]
    %v2476 = vld [vmem:[#allocation2 + $0x130] sm:$0xff]
    %v2477 = vld [vmem:[#allocation2 + $0x138] sm:$0xff]
    %v2478 = vld [vmem:[#allocation2 + $0x140] sm:$0xff]
    %v2479 = vld [vmem:[#allocation2 + $0x148] sm:$0xff]
    %v2480 = vld [vmem:[#allocation2 + $0x150] sm:$0xff]
    %v2481 = vld [vmem:[#allocation2 + $0x158] sm:$0xff]
    %v2482 = vld [vmem:[#allocation2 + $0x160] sm:$0xff]
    %v2483 = vld [vmem:[#allocation2 + $0x168] sm:$0xff]
    %v2484 = vld [vmem:[#allocation2 + $0x170] sm:$0xff]
    %v2485 = vld [vmem:[#allocation2 + $0x178] sm:$0xff]
    %v2486 = vld [vmem:[#allocation2 + $0x180] sm:$0xff]
    %v2487 = vld [vmem:[#allocation2 + $0x188] sm:$0xff]
    %v2488 = vld [vmem:[#allocation2 + $0x190] sm:$0xff]
    %v2489 = vld [vmem:[#allocation2 + $0x198] sm:$0xff]
    %v2490 = vld [vmem:[#allocation2 + $0x1a0] sm:$0xff]
    %v2491 = vld [vmem:[#allocation2 + $0x1a8] sm:$0xff]
    %v2492 = vld [vmem:[#allocation2 + $0x1b0] sm:$0xff]
    %v2493 = vld [vmem:[#allocation2 + $0x1b8] sm:$0xff]
    %v2494 = vld [vmem:[#allocation2 + $0x1c0] sm:$0xff]
    %v2495 = vld [vmem:[#allocation2 + $0x1c8] sm:$0xff]
    %v2496 = vld [vmem:[#allocation2 + $0x1d0] sm:$0xff]
    %v2497 = vld [vmem:[#allocation2 + $0x1d8] sm:$0xff]
    %v2498 = vld [vmem:[#allocation2 + $0x1e0] sm:$0xff]
    %v2499 = vld [vmem:[#allocation2 + $0x1e8] sm:$0xff]
    %v2500 = vld [vmem:[#allocation2 + $0x1f0] sm:$0xff]
    %v2501 = vld [vmem:[#allocation2 + $0x1f8] sm:$0xff]
    %v2502 = vpack.c.bf16 %v2427, %v2427
    %v2503 = vpack.c.bf16 %v2428, %v2428
    %v2568 = vunpack.c.l.b16 %v2438
    %v2569 = vunpack.c.h.b16 %v2438
    %v2570 = vunpack.c.l.b16 %v2439
    %v2571 = vunpack.c.h.b16 %v2439
    %v2572 = vunpack.c.l.b16 %v2440
    %v2573 = vunpack.c.h.b16 %v2440
    %v2574 = vunpack.c.l.b16 %v2441
    %v2575 = vunpack.c.h.b16 %v2441
    %v2576 = vunpack.c.l.b16 %v2442
    %v2577 = vunpack.c.h.b16 %v2442
    %v2578 = vunpack.c.l.b16 %v2443
    %v2579 = vunpack.c.h.b16 %v2443
    %v2580 = vunpack.c.l.b16 %v2444
    %v2581 = vunpack.c.h.b16 %v2444
    %v2582 = vunpack.c.l.b16 %v2445
    %v2583 = vunpack.c.h.b16 %v2445
    %v2584 = vunpack.c.l.b16 %v2446
    %v2585 = vunpack.c.h.b16 %v2446
    %v2586 = vunpack.c.l.b16 %v2447
    %v2587 = vunpack.c.h.b16 %v2447
    %v2588 = vunpack.c.l.b16 %v2448
    %v2589 = vunpack.c.h.b16 %v2448
    %v2590 = vunpack.c.l.b16 %v2449
    %v2591 = vunpack.c.h.b16 %v2449
    %v2592 = vunpack.c.l.b16 %v2450
    %v2593 = vunpack.c.h.b16 %v2450
    %v2594 = vunpack.c.l.b16 %v2451
    %v2595 = vunpack.c.h.b16 %v2451
    %v2596 = vunpack.c.l.b16 %v2452
    %v2597 = vunpack.c.h.b16 %v2452
    %v2598 = vunpack.c.l.b16 %v2453
    %v2599 = vunpack.c.h.b16 %v2453
    %v2600 = vunpack.c.l.b16 %v2454
    %v2601 = vunpack.c.h.b16 %v2454
    %v2602 = vunpack.c.l.b16 %v2455
    %v2603 = vunpack.c.h.b16 %v2455
    %v2604 = vunpack.c.l.b16 %v2456
    %v2605 = vunpack.c.h.b16 %v2456
    %v2606 = vunpack.c.l.b16 %v2457
    %v2607 = vunpack.c.h.b16 %v2457
    %v2608 = vunpack.c.l.b16 %v2458
    %v2609 = vunpack.c.h.b16 %v2458
    %v2610 = vunpack.c.l.b16 %v2459
    %v2611 = vunpack.c.h.b16 %v2459
    %v2612 = vunpack.c.l.b16 %v2460
    %v2613 = vunpack.c.h.b16 %v2460
    %v2614 = vunpack.c.l.b16 %v2461
    %v2615 = vunpack.c.h.b16 %v2461
    %v2616 = vunpack.c.l.b16 %v2462
    %v2617 = vunpack.c.h.b16 %v2462
    %v2618 = vunpack.c.l.b16 %v2463
    %v2619 = vunpack.c.h.b16 %v2463
    %v2620 = vunpack.c.l.b16 %v2464
    %v2621 = vunpack.c.h.b16 %v2464
    %v2622 = vunpack.c.l.b16 %v2465
    %v2623 = vunpack.c.h.b16 %v2465
    %v2624 = vunpack.c.l.b16 %v2466
    %v2625 = vunpack.c.h.b16 %v2466
    %v2626 = vunpack.c.l.b16 %v2467
    %v2627 = vunpack.c.h.b16 %v2467
    %v2628 = vunpack.c.l.b16 %v2468
    %v2629 = vunpack.c.h.b16 %v2468
    %v2630 = vunpack.c.l.b16 %v2469
    %v2631 = vunpack.c.h.b16 %v2469
    %v2632 = vunpack.c.l.b16 %v2470
    %v2633 = vunpack.c.h.b16 %v2470
    %v2634 = vunpack.c.l.b16 %v2471
    %v2635 = vunpack.c.h.b16 %v2471
    %v2636 = vunpack.c.l.b16 %v2472
    %v2637 = vunpack.c.h.b16 %v2472
    %v2638 = vunpack.c.l.b16 %v2473
    %v2639 = vunpack.c.h.b16 %v2473
    %v2640 = vunpack.c.l.b16 %v2474
    %v2641 = vunpack.c.h.b16 %v2474
    %v2642 = vunpack.c.l.b16 %v2475
    %v2643 = vunpack.c.h.b16 %v2475
    %v2644 = vunpack.c.l.b16 %v2476
    %v2645 = vunpack.c.h.b16 %v2476
    %v2646 = vunpack.c.l.b16 %v2477
    %v2647 = vunpack.c.h.b16 %v2477
    %v2648 = vunpack.c.l.b16 %v2478
    %v2649 = vunpack.c.h.b16 %v2478
    %v2650 = vunpack.c.l.b16 %v2479
    %v2651 = vunpack.c.h.b16 %v2479
    %v2652 = vunpack.c.l.b16 %v2480
    %v2653 = vunpack.c.h.b16 %v2480
    %v2654 = vunpack.c.l.b16 %v2481
    %v2655 = vunpack.c.h.b16 %v2481
    %v2656 = vunpack.c.l.b16 %v2482
    %v2657 = vunpack.c.h.b16 %v2482
    %v2658 = vunpack.c.l.b16 %v2483
    %v2659 = vunpack.c.h.b16 %v2483
    %v2660 = vunpack.c.l.b16 %v2484
    %v2661 = vunpack.c.h.b16 %v2484
    %v2662 = vunpack.c.l.b16 %v2485
    %v2663 = vunpack.c.h.b16 %v2485
    %v2664 = vunpack.c.l.b16 %v2486
    %v2665 = vunpack.c.h.b16 %v2486
    %v2666 = vunpack.c.l.b16 %v2487
    %v2667 = vunpack.c.h.b16 %v2487
    %v2668 = vunpack.c.l.b16 %v2488
    %v2669 = vunpack.c.h.b16 %v2488
    %v2670 = vunpack.c.l.b16 %v2489
    %v2671 = vunpack.c.h.b16 %v2489
    %v2672 = vunpack.c.l.b16 %v2490
    %v2673 = vunpack.c.h.b16 %v2490
    %v2674 = vunpack.c.l.b16 %v2491
    %v2675 = vunpack.c.h.b16 %v2491
    %v2676 = vunpack.c.l.b16 %v2492
    %v2677 = vunpack.c.h.b16 %v2492
    %v2678 = vunpack.c.l.b16 %v2493
    %v2679 = vunpack.c.h.b16 %v2493
    %v2680 = vunpack.c.l.b16 %v2494
    %v2681 = vunpack.c.h.b16 %v2494
    %v2682 = vunpack.c.l.b16 %v2495
    %v2683 = vunpack.c.h.b16 %v2495
    %v2684 = vunpack.c.l.b16 %v2496
    %v2685 = vunpack.c.h.b16 %v2496
    %v2686 = vunpack.c.l.b16 %v2497
    %v2687 = vunpack.c.h.b16 %v2497
    %v2688 = vunpack.c.l.b16 %v2498
    %v2689 = vunpack.c.h.b16 %v2498
    %v2690 = vunpack.c.l.b16 %v2499
    %v2691 = vunpack.c.h.b16 %v2499
    %v2692 = vunpack.c.l.b16 %v2500
    %v2693 = vunpack.c.h.b16 %v2500
    %v2694 = vunpack.c.l.b16 %v2501
    %v2695 = vunpack.c.h.b16 %v2501
    %v2696 = vpack.c.b16 %v2572, %v2568
    %v2697 = vpack.c.b16 %v2573, %v2569
    %v2698 = vpack.c.b16 %v2574, %v2570
    %v2699 = vpack.c.b16 %v2575, %v2571
    %v2700 = vpack.c.b16 %v2580, %v2576
    %v2701 = vpack.c.b16 %v2581, %v2577
    %v2702 = vpack.c.b16 %v2582, %v2578
    %v2703 = vpack.c.b16 %v2583, %v2579
    %v2704 = vpack.c.b16 %v2588, %v2584
    %v2705 = vpack.c.b16 %v2589, %v2585
    %v2706 = vpack.c.b16 %v2590, %v2586
    %v2707 = vpack.c.b16 %v2591, %v2587
    %v2708 = vpack.c.b16 %v2596, %v2592
    %v2709 = vpack.c.b16 %v2597, %v2593
    %v2710 = vpack.c.b16 %v2598, %v2594
    %v2711 = vpack.c.b16 %v2599, %v2595
    %v2712 = vpack.c.b16 %v2604, %v2600
    %v2713 = vpack.c.b16 %v2605, %v2601
    %v2714 = vpack.c.b16 %v2606, %v2602
    %v2715 = vpack.c.b16 %v2607, %v2603
    %v2716 = vpack.c.b16 %v2612, %v2608
    %v2717 = vpack.c.b16 %v2613, %v2609
    %v2718 = vpack.c.b16 %v2614, %v2610
    %v2719 = vpack.c.b16 %v2615, %v2611
    %v2720 = vpack.c.b16 %v2620, %v2616
    %v2721 = vpack.c.b16 %v2621, %v2617
    %v2722 = vpack.c.b16 %v2622, %v2618
    %v2723 = vpack.c.b16 %v2623, %v2619
    %v2724 = vpack.c.b16 %v2628, %v2624
    %v2725 = vpack.c.b16 %v2629, %v2625
    %v2726 = vpack.c.b16 %v2630, %v2626
    %v2727 = vpack.c.b16 %v2631, %v2627
    %v2728 = vpack.c.b16 %v2636, %v2632
    %v2729 = vpack.c.b16 %v2637, %v2633
    %v2730 = vpack.c.b16 %v2638, %v2634
    %v2731 = vpack.c.b16 %v2639, %v2635
    %v2732 = vpack.c.b16 %v2644, %v2640
    %v2733 = vpack.c.b16 %v2645, %v2641
    %v2734 = vpack.c.b16 %v2646, %v2642
    %v2735 = vpack.c.b16 %v2647, %v2643
    %v2736 = vpack.c.b16 %v2652, %v2648
    %v2737 = vpack.c.b16 %v2653, %v2649
    %v2738 = vpack.c.b16 %v2654, %v2650
    %v2739 = vpack.c.b16 %v2655, %v2651
    %v2740 = vpack.c.b16 %v2660, %v2656
    %v2741 = vpack.c.b16 %v2661, %v2657
    %v2742 = vpack.c.b16 %v2662, %v2658
    %v2743 = vpack.c.b16 %v2663, %v2659
    %v2744 = vpack.c.b16 %v2668, %v2664
    %v2745 = vpack.c.b16 %v2669, %v2665
    %v2746 = vpack.c.b16 %v2670, %v2666
    %v2747 = vpack.c.b16 %v2671, %v2667
    %v2748 = vpack.c.b16 %v2676, %v2672
    %v2749 = vpack.c.b16 %v2677, %v2673
    %v2750 = vpack.c.b16 %v2678, %v2674
    %v2751 = vpack.c.b16 %v2679, %v2675
    %v2752 = vpack.c.b16 %v2684, %v2680
    %v2753 = vpack.c.b16 %v2685, %v2681
    %v2754 = vpack.c.b16 %v2686, %v2682
    %v2755 = vpack.c.b16 %v2687, %v2683
    %v2756 = vpack.c.b16 %v2692, %v2688
    %v2757 = vpack.c.b16 %v2693, %v2689
    %v2758 = vpack.c.b16 %v2694, %v2690
    %v2759 = vpack.c.b16 %v2695, %v2691
    %2824 = vmatprep.subr.bf16.mxu0 %v2725
    %2825 = vmatpush1.bf16.msra.mxu0 %v2724
    %2826 = vmatprep.subr.bf16.mxu0 %v2721
    %2827 = vmatpush1.bf16.msra.mxu0 %v2720
    %2828 = vmatprep.subr.bf16.mxu0 %v2717
    %2829 = vmatpush1.bf16.msra.mxu0 %v2716
    %2830 = vmatprep.subr.bf16.mxu0 %v2713
    %2831 = vmatpush1.bf16.msra.mxu0 %v2712
    %2832 = vmatprep.subr.bf16.mxu0 %v2709
    %2833 = vmatpush1.bf16.msra.mxu0 %v2708
    %2834 = vmatprep.subr.bf16.mxu0 %v2705
    %2835 = vmatpush1.bf16.msra.mxu0 %v2704
    %2836 = vmatprep.subr.bf16.mxu0 %v2701
    %2837 = vmatpush1.bf16.msra.mxu0 %v2700
    %2838 = vmatprep.subr.bf16.mxu0 %v2697
    %2839 = vmatpush1.bf16.msra.mxu0 %v2696
    %2840 = vmatprep.subr.bf16.mxu0 %v2757
    %2841 = vmatpush2.bf16.msra.mxu0 %v2756
    %2842 = vmatprep.subr.bf16.mxu0 %v2753
    %2843 = vmatpush2.bf16.msra.mxu0 %v2752
    %2844 = vmatprep.subr.bf16.mxu0 %v2749
    %2845 = vmatpush2.bf16.msra.mxu0 %v2748
    %2846 = vmatprep.subr.bf16.mxu0 %v2745
    %2847 = vmatpush2.bf16.msra.mxu0 %v2744
    %2848 = vmatprep.subr.bf16.mxu0 %v2741
    %2849 = vmatpush2.bf16.msra.mxu0 %v2740
    %2850 = vmatprep.subr.bf16.mxu0 %v2737
    %2851 = vmatpush2.bf16.msra.mxu0 %v2736
    %2852 = vmatprep.subr.bf16.mxu0 %v2733
    %2853 = vmatpush2.bf16.msra.mxu0 %v2732
    %2854 = vmatprep.subr.bf16.mxu0 %v2729
    %2855 = vmatpush2.bf16.msra.mxu0 %v2728
    %2856 = vmatprep.mubr.bf16.mxu0 %v2503
    %2857 = vmatmul.mubr.bf16.gmra.mxu0 %v2502
    %v2858 = vpop.f32.mrf.mxu0
    %v2859 = vadd.f32 0.0, %v2858
    %v2860 = vpop.f32.mrf.mxu0
    %v2861 = vadd.f32 0.0, %v2860
    %v2862 = vpop.f32.mrf.mxu0
    %v2863 = vpop.f32.mrf.mxu0
    %2864 = vdwg.mxu0
    %2865 = vmatprep.subr.bf16.mxu0 %v2727
    %2866 = vmatpush1.bf16.msra.mxu0 %v2726
    %2867 = vmatprep.subr.bf16.mxu0 %v2723
    %2868 = vmatpush1.bf16.msra.mxu0 %v2722
    %2869 = vmatprep.subr.bf16.mxu0 %v2719
    %2870 = vmatpush1.bf16.msra.mxu0 %v2718
    %2871 = vmatprep.subr.bf16.mxu0 %v2715
    %2872 = vmatpush1.bf16.msra.mxu0 %v2714
    %2873 = vmatprep.subr.bf16.mxu0 %v2711
    %2874 = vmatpush1.bf16.msra.mxu0 %v2710
    %2875 = vmatprep.subr.bf16.mxu0 %v2707
    %2876 = vmatpush1.bf16.msra.mxu0 %v2706
    %2877 = vmatprep.subr.bf16.mxu0 %v2703
    %2878 = vmatpush1.bf16.msra.mxu0 %v2702
    %2879 = vmatprep.subr.bf16.mxu0 %v2699
    %2880 = vmatpush1.bf16.msra.mxu0 %v2698
    %2881 = vmatprep.subr.bf16.mxu0 %v2759
    %2882 = vmatpush2.bf16.msra.mxu0 %v2758
    %2883 = vmatprep.subr.bf16.mxu0 %v2755
    %2884 = vmatpush2.bf16.msra.mxu0 %v2754
    %2885 = vmatprep.subr.bf16.mxu0 %v2751
    %2886 = vmatpush2.bf16.msra.mxu0 %v2750
    %2887 = vmatprep.subr.bf16.mxu0 %v2747
    %2888 = vmatpush2.bf16.msra.mxu0 %v2746
    %2889 = vmatprep.subr.bf16.mxu0 %v2743
    %2890 = vmatpush2.bf16.msra.mxu0 %v2742
    %2891 = vmatprep.subr.bf16.mxu0 %v2739
    %2892 = vmatpush2.bf16.msra.mxu0 %v2738
    %2893 = vmatprep.subr.bf16.mxu0 %v2735
    %2894 = vmatpush2.bf16.msra.mxu0 %v2734
    %2895 = vmatprep.subr.bf16.mxu0 %v2731
    %2896 = vmatpush2.bf16.msra.mxu0 %v2730
    %2897 = vmatprep.mubr.bf16.mxu0 %v2503
    %2898 = vmatmul.mubr.bf16.gmra.mxu0 %v2502
    %v2899 = vpop.f32.mrf.mxu0
    %v2900 = vadd.f32 0.0, %v2899
    %v2901 = vpop.f32.mrf.mxu0
    %v2902 = vadd.f32 0.0, %v2901
    %v2903 = vpop.f32.mrf.mxu0
    %v2904 = vpop.f32.mrf.mxu0
    %2905 = vdwg.mxu0
    %s2906 = scalar_lea.vmem [#allocation7], 67
    %v2907 = vld [vmem:[%s2906] ss:$8 sm:$0xf]
    %s2908 = scalar_lea.vmem [#allocation7], 68
    %v2909 = vld [vmem:[%s2908] ss:$8 sm:$0xf]
    %v2910 = vrot.slane %v2859, 4
    %v2911 = vadd.f32 %v2859, %v2910
    %v2912 = vrot.slane %v2911, 2
    %v2913 = vadd.f32 %v2911, %v2912
    %v2914 = vrot.slane %v2913, 1
    %v2915 = vadd.f32 %v2913, %v2914
    %v2916 = vrot.slane %v2861, 4
    %v2917 = vadd.f32 %v2861, %v2916
    %v2918 = vrot.slane %v2917, 2
    %v2919 = vadd.f32 %v2917, %v2918
    %v2920 = vrot.slane %v2919, 1
    %v2921 = vadd.f32 %v2919, %v2920
    %v2922 = vrot.slane %v2900, 4
    %v2923 = vadd.f32 %v2900, %v2922
    %v2924 = vrot.slane %v2923, 2
    %v2925 = vadd.f32 %v2923, %v2924
    %v2926 = vrot.slane %v2925, 1
    %v2927 = vadd.f32 %v2925, %v2926
    %v2928 = vrot.slane %v2902, 4
    %v2929 = vadd.f32 %v2902, %v2928
    %v2930 = vrot.slane %v2929, 2
    %v2931 = vadd.f32 %v2929, %v2930
    %v2932 = vrot.slane %v2931, 1
    %v2933 = vadd.f32 %v2931, %v2932
    %v2934 = vmul.f32 %v2915, 0.125
    %v2935 = vmul.f32 %v2921, 0.125
    %v2936 = vmul.f32 %v2927, 0.125
    %v2937 = vmul.f32 %v2933, 0.125
    %v2938 = vmul.f32 %v2859, %v2859
    %v2939 = vmul.f32 %v2861, %v2861
    %v2940 = vmul.f32 %v2900, %v2900
    %v2941 = vmul.f32 %v2902, %v2902
    %v2942 = vrot.slane %v2938, 4
    %v2943 = vadd.f32 %v2938, %v2942
    %v2944 = vrot.slane %v2943, 2
    %v2945 = vadd.f32 %v2943, %v2944
    %v2946 = vrot.slane %v2945, 1
    %v2947 = vadd.f32 %v2945, %v2946
    %v2948 = vrot.slane %v2939, 4
    %v2949 = vadd.f32 %v2939, %v2948
    %v2950 = vrot.slane %v2949, 2
    %v2951 = vadd.f32 %v2949, %v2950
    %v2952 = vrot.slane %v2951, 1
    %v2953 = vadd.f32 %v2951, %v2952
    %v2954 = vrot.slane %v2940, 4
    %v2955 = vadd.f32 %v2940, %v2954
    %v2956 = vrot.slane %v2955, 2
    %v2957 = vadd.f32 %v2955, %v2956
    %v2958 = vrot.slane %v2957, 1
    %v2959 = vadd.f32 %v2957, %v2958
    %v2960 = vrot.slane %v2941, 4
    %v2961 = vadd.f32 %v2941, %v2960
    %v2962 = vrot.slane %v2961, 2
    %v2963 = vadd.f32 %v2961, %v2962
    %v2964 = vrot.slane %v2963, 1
    %v2965 = vadd.f32 %v2963, %v2964
    %v2966 = vmul.f32 %v2947, 0.125
    %v2967 = vmul.f32 %v2953, 0.125
    %v2968 = vmul.f32 %v2959, 0.125
    %v2969 = vmul.f32 %v2965, 0.125
    %v2970 = vmul.f32 %v2934, %v2934
    %v2971 = vmul.f32 %v2935, %v2935
    %v2972 = vmul.f32 %v2936, %v2936
    %v2973 = vmul.f32 %v2937, %v2937
    %v2974 = vsub.f32 %v2966, %v2970
    %v2975 = vsub.f32 %v2967, %v2971
    %v2976 = vsub.f32 %v2968, %v2972
    %v2977 = vsub.f32 %v2969, %v2973
    %v2978 = vmax.f32 %v2974, 0.0
    %v2979 = vmax.f32 %v2975, 0.0
    %v2980 = vmax.f32 %v2976, 0.0
    %v2981 = vmax.f32 %v2977, 0.0
    %v2982 = vadd.f32 %v2978, 1e-05
    %v2983 = vadd.f32 %v2979, 1e-05
    %v2984 = vadd.f32 %v2980, 1e-05
    %v2985 = vadd.f32 %v2981, 1e-05
    %v2986 = vrsqrt.pop %v2982
    %v2987 = vrsqrt.pop %v2983
    %v2988 = vrsqrt.pop %v2984
    %v2989 = vrsqrt.pop %v2985
    %v2994 = vcombine.low %v2986, %v2987
    %v2995 = vcombine.low %v2988, %v2989
    %v2997 = vunpack.c.l.s4 1966171168
    %v2998 = vunpack.c.0.s8 %v2997
    %v2999 = vlaneseq
    %v3000 = vshrl.u32 %v2999, 7
    %v3001 = vsub.s32 %v2998, %v3000
    %v3002 = vrot.slane %v2994, %v3001
    %v3004 = vunpack.c.l.s4 1966171168
    %v3005 = vunpack.c.0.s8 %v3004
    %v3006 = vlaneseq
    %v3007 = vshrl.u32 %v3006, 7
    %v3008 = vsub.s32 %v3005, %v3007
    %v3009 = vrot.slane %v2995, %v3008
    %v3010 = vcombine.low %v3002, %v3009
    %v3012 = vunpack.c.l.s4 1966171168
    %v3013 = vunpack.c.0.s8 %v3012
    %v3014 = vlaneseq
    %v3015 = vshrl.u32 %v3014, 7
    %v3016 = vsub.s32 %v3013, %v3015
    %v3017 = vrot.slane %v3010, %v3016
    %v3019 = vmul.f32 %v2907, %v3017
    %v3021 = vlaneseq
    %v3022 = vshrl.u32 %v3021, 7
    %v3023 = vsub.s32 0, %v3022
    %v3024 = vrot.slane %v3019, %v3023
    %v3025 = vlaneseq
    %v3026 = vshrl.u32 %v3025, 7
    %v3027 = vsub.s32 1, %v3026
    %v3028 = vrot.slane %v3019, %v3027
    %v3029 = vlaneseq
    %v3030 = vshrl.u32 %v3029, 7
    %v3031 = vsub.s32 2, %v3030
    %v3032 = vrot.slane %v3019, %v3031
    %v3033 = vlaneseq
    %v3034 = vshrl.u32 %v3033, 7
    %v3035 = vsub.s32 3, %v3034
    %v3036 = vrot.slane %v3019, %v3035
    %v3041 = vmul.f32 %v2934, %v3024
    %v3042 = vmul.f32 %v2935, %v3028
    %v3043 = vmul.f32 %v2936, %v3032
    %v3044 = vmul.f32 %v2937, %v3036
    %v3049 = vcombine.low %v3041, %v3042
    %v3050 = vcombine.low %v3043, %v3044
    %v3052 = vunpack.c.l.s4 1966171168
    %v3053 = vunpack.c.0.s8 %v3052
    %v3054 = vlaneseq
    %v3055 = vshrl.u32 %v3054, 7
    %v3056 = vsub.s32 %v3053, %v3055
    %v3057 = vrot.slane %v3049, %v3056
    %v3059 = vunpack.c.l.s4 1966171168
    %v3060 = vunpack.c.0.s8 %v3059
    %v3061 = vlaneseq
    %v3062 = vshrl.u32 %v3061, 7
    %v3063 = vsub.s32 %v3060, %v3062
    %v3064 = vrot.slane %v3050, %v3063
    %v3065 = vcombine.low %v3057, %v3064
    %v3067 = vunpack.c.l.s4 1966171168
    %v3068 = vunpack.c.0.s8 %v3067
    %v3069 = vlaneseq
    %v3070 = vshrl.u32 %v3069, 7
    %v3071 = vsub.s32 %v3068, %v3070
    %v3072 = vrot.slane %v3065, %v3071
    %v3074 = vsub.f32 %v2909, %v3072
    %v3075 = vmul.f32 %v2859, %v3024
    %v3076 = vmul.f32 %v2861, %v3028
    %v3077 = vmul.f32 %v2900, %v3032
    %v3078 = vmul.f32 %v2902, %v3036
    %v3080 = vlaneseq
    %v3081 = vshrl.u32 %v3080, 7
    %v3082 = vsub.s32 0, %v3081
    %v3083 = vrot.slane %v3074, %v3082
    %v3084 = vlaneseq
    %v3085 = vshrl.u32 %v3084, 7
    %v3086 = vsub.s32 1, %v3085
    %v3087 = vrot.slane %v3074, %v3086
    %v3088 = vlaneseq
    %v3089 = vshrl.u32 %v3088, 7
    %v3090 = vsub.s32 2, %v3089
    %v3091 = vrot.slane %v3074, %v3090
    %v3092 = vlaneseq
    %v3093 = vshrl.u32 %v3092, 7
    %v3094 = vsub.s32 3, %v3093
    %v3095 = vrot.slane %v3074, %v3094
    %v3100 = vadd.f32 %v3075, %v3083
    %v3101 = vadd.f32 %v3076, %v3087
    %v3102 = vadd.f32 %v3077, %v3091
    %v3103 = vadd.f32 %v3078, %v3095
    %v3104 = vtanh.pop %v3100
    %v3105 = vtanh.pop %v3101
    %v3106 = vtanh.pop %v3102
    %v3107 = vtanh.pop %v3103
    %s3108 = smul.u32 %s544, 1
    %s3109 = sshll.u32 %s3108, 4
    %3110 = dma.done %s62, %s3109
    %v3111 = vld [vmem:[%s61] sm:$0xf]
    %v3112 = vld [vmem:[%s61 + $0x10] sm:$0xf]
    %v3113 = vld [vmem:[%s61 + $0x20] sm:$0xf]
    %v3114 = vld [vmem:[%s61 + $0x30] sm:$0xf]
    %v3115 = vld [vmem:[%s61 + $0x40] sm:$0xf]
    %v3116 = vld [vmem:[%s61 + $0x50] sm:$0xf]
    %v3117 = vld [vmem:[%s61 + $0x60] sm:$0xf]
    %v3118 = vld [vmem:[%s61 + $0x70] sm:$0xf]
    %v3119 = vld [vmem:[%s61 + $0x80] sm:$0xf]
    %v3120 = vld [vmem:[%s61 + $0x90] sm:$0xf]
    %v3121 = vld [vmem:[%s61 + $0xa0] sm:$0xf]
    %v3122 = vld [vmem:[%s61 + $0xb0] sm:$0xf]
    %v3123 = vld [vmem:[%s61 + $0xc0] sm:$0xf]
    %v3124 = vld [vmem:[%s61 + $0xd0] sm:$0xf]
    %v3125 = vld [vmem:[%s61 + $0xe0] sm:$0xf]
    %v3126 = vld [vmem:[%s61 + $0xf0] sm:$0xf]
    %v3127 = vld [vmem:[%s61 + $0x100] sm:$0xf]
    %v3128 = vld [vmem:[%s61 + $0x110] sm:$0xf]
    %v3129 = vld [vmem:[%s61 + $0x120] sm:$0xf]
    %v3130 = vld [vmem:[%s61 + $0x130] sm:$0xf]
    %v3131 = vld [vmem:[%s61 + $0x140] sm:$0xf]
    %v3132 = vld [vmem:[%s61 + $0x150] sm:$0xf]
    %v3133 = vld [vmem:[%s61 + $0x160] sm:$0xf]
    %v3134 = vld [vmem:[%s61 + $0x170] sm:$0xf]
    %v3135 = vld [vmem:[%s61 + $0x180] sm:$0xf]
    %v3136 = vld [vmem:[%s61 + $0x190] sm:$0xf]
    %v3137 = vld [vmem:[%s61 + $0x1a0] sm:$0xf]
    %v3138 = vld [vmem:[%s61 + $0x1b0] sm:$0xf]
    %v3139 = vld [vmem:[%s61 + $0x1c0] sm:$0xf]
    %v3140 = vld [vmem:[%s61 + $0x1d0] sm:$0xf]
    %v3141 = vld [vmem:[%s61 + $0x1e0] sm:$0xf]
    %v3142 = vld [vmem:[%s61 + $0x1f0] sm:$0xf]
    %v3143 = vld [vmem:[%s61 + $0x200] sm:$0xf]
    %v3144 = vld [vmem:[%s61 + $0x210] sm:$0xf]
    %v3145 = vld [vmem:[%s61 + $0x220] sm:$0xf]
    %v3146 = vld [vmem:[%s61 + $0x230] sm:$0xf]
    %v3147 = vld [vmem:[%s61 + $0x240] sm:$0xf]
    %v3148 = vld [vmem:[%s61 + $0x250] sm:$0xf]
    %v3149 = vld [vmem:[%s61 + $0x260] sm:$0xf]
    %v3150 = vld [vmem:[%s61 + $0x270] sm:$0xf]
    %v3151 = vld [vmem:[%s61 + $0x280] sm:$0xf]
    %v3152 = vld [vmem:[%s61 + $0x290] sm:$0xf]
    %v3153 = vld [vmem:[%s61 + $0x2a0] sm:$0xf]
    %v3154 = vld [vmem:[%s61 + $0x2b0] sm:$0xf]
    %v3155 = vld [vmem:[%s61 + $0x2c0] sm:$0xf]
    %v3156 = vld [vmem:[%s61 + $0x2d0] sm:$0xf]
    %v3157 = vld [vmem:[%s61 + $0x2e0] sm:$0xf]
    %v3158 = vld [vmem:[%s61 + $0x2f0] sm:$0xf]
    %v3159 = vld [vmem:[%s61 + $0x300] sm:$0xf]
    %v3160 = vld [vmem:[%s61 + $0x310] sm:$0xf]
    %v3161 = vld [vmem:[%s61 + $0x320] sm:$0xf]
    %v3162 = vld [vmem:[%s61 + $0x330] sm:$0xf]
    %v3163 = vld [vmem:[%s61 + $0x340] sm:$0xf]
    %v3164 = vld [vmem:[%s61 + $0x350] sm:$0xf]
    %v3165 = vld [vmem:[%s61 + $0x360] sm:$0xf]
    %v3166 = vld [vmem:[%s61 + $0x370] sm:$0xf]
    %v3167 = vld [vmem:[%s61 + $0x380] sm:$0xf]
    %v3168 = vld [vmem:[%s61 + $0x390] sm:$0xf]
    %v3169 = vld [vmem:[%s61 + $0x3a0] sm:$0xf]
    %v3170 = vld [vmem:[%s61 + $0x3b0] sm:$0xf]
    %v3171 = vld [vmem:[%s61 + $0x3c0] sm:$0xf]
    %v3172 = vld [vmem:[%s61 + $0x3d0] sm:$0xf]
    %v3173 = vld [vmem:[%s61 + $0x3e0] sm:$0xf]
    %v3174 = vld [vmem:[%s61 + $0x3f0] sm:$0xf]
    %v3175 = vpack.c.bf16 %v3104, %v3104
    %v3176 = vpack.c.bf16 %v3105, %v3105
    %v3177 = vpack.c.bf16 %v3106, %v3106
    %v3178 = vpack.c.bf16 %v3107, %v3107
    %v3179 = vld [vmem:[#allocation7 + $0x45] ss:$0 sm:$0xff]
    %v3244 = vunpack.c.l.b16 %v3111
    %v3245 = vunpack.c.l.b16 %v3112
    %v3246 = vunpack.c.l.b16 %v3113
    %v3247 = vunpack.c.l.b16 %v3114
    %v3248 = vunpack.c.l.b16 %v3115
    %v3249 = vunpack.c.l.b16 %v3116
    %v3250 = vunpack.c.l.b16 %v3117
    %v3251 = vunpack.c.l.b16 %v3118
    %v3252 = vunpack.c.l.b16 %v3119
    %v3253 = vunpack.c.l.b16 %v3120
    %v3254 = vunpack.c.l.b16 %v3121
    %v3255 = vunpack.c.l.b16 %v3122
    %v3256 = vunpack.c.l.b16 %v3123
    %v3257 = vunpack.c.l.b16 %v3124
    %v3258 = vunpack.c.l.b16 %v3125
    %v3259 = vunpack.c.l.b16 %v3126
    %v3260 = vunpack.c.l.b16 %v3127
    %v3261 = vunpack.c.l.b16 %v3128
    %v3262 = vunpack.c.l.b16 %v3129
    %v3263 = vunpack.c.l.b16 %v3130
    %v3264 = vunpack.c.l.b16 %v3131
    %v3265 = vunpack.c.l.b16 %v3132
    %v3266 = vunpack.c.l.b16 %v3133
    %v3267 = vunpack.c.l.b16 %v3134
    %v3268 = vunpack.c.l.b16 %v3135
    %v3269 = vunpack.c.l.b16 %v3136
    %v3270 = vunpack.c.l.b16 %v3137
    %v3271 = vunpack.c.l.b16 %v3138
    %v3272 = vunpack.c.l.b16 %v3139
    %v3273 = vunpack.c.l.b16 %v3140
    %v3274 = vunpack.c.l.b16 %v3141
    %v3275 = vunpack.c.l.b16 %v3142
    %v3276 = vunpack.c.l.b16 %v3143
    %v3277 = vunpack.c.l.b16 %v3144
    %v3278 = vunpack.c.l.b16 %v3145
    %v3279 = vunpack.c.l.b16 %v3146
    %v3280 = vunpack.c.l.b16 %v3147
    %v3281 = vunpack.c.l.b16 %v3148
    %v3282 = vunpack.c.l.b16 %v3149
    %v3283 = vunpack.c.l.b16 %v3150
    %v3284 = vunpack.c.l.b16 %v3151
    %v3285 = vunpack.c.l.b16 %v3152
    %v3286 = vunpack.c.l.b16 %v3153
    %v3287 = vunpack.c.l.b16 %v3154
    %v3288 = vunpack.c.l.b16 %v3155
    %v3289 = vunpack.c.l.b16 %v3156
    %v3290 = vunpack.c.l.b16 %v3157
    %v3291 = vunpack.c.l.b16 %v3158
    %v3292 = vunpack.c.l.b16 %v3159
    %v3293 = vunpack.c.l.b16 %v3160
    %v3294 = vunpack.c.l.b16 %v3161
    %v3295 = vunpack.c.l.b16 %v3162
    %v3296 = vunpack.c.l.b16 %v3163
    %v3297 = vunpack.c.l.b16 %v3164
    %v3298 = vunpack.c.l.b16 %v3165
    %v3299 = vunpack.c.l.b16 %v3166
    %v3300 = vunpack.c.l.b16 %v3167
    %v3301 = vunpack.c.l.b16 %v3168
    %v3302 = vunpack.c.l.b16 %v3169
    %v3303 = vunpack.c.l.b16 %v3170
    %v3304 = vunpack.c.l.b16 %v3171
    %v3305 = vunpack.c.l.b16 %v3172
    %v3306 = vunpack.c.l.b16 %v3173
    %v3307 = vunpack.c.l.b16 %v3174
    %v3308 = vpack.c.b16 %v3245, %v3244
    %v3309 = vpack.c.b16 %v3247, %v3246
    %v3310 = vpack.c.b16 %v3249, %v3248
    %v3311 = vpack.c.b16 %v3251, %v3250
    %v3312 = vpack.c.b16 %v3253, %v3252
    %v3313 = vpack.c.b16 %v3255, %v3254
    %v3314 = vpack.c.b16 %v3257, %v3256
    %v3315 = vpack.c.b16 %v3259, %v3258
    %v3316 = vpack.c.b16 %v3261, %v3260
    %v3317 = vpack.c.b16 %v3263, %v3262
    %v3318 = vpack.c.b16 %v3265, %v3264
    %v3319 = vpack.c.b16 %v3267, %v3266
    %v3320 = vpack.c.b16 %v3269, %v3268
    %v3321 = vpack.c.b16 %v3271, %v3270
    %v3322 = vpack.c.b16 %v3273, %v3272
    %v3323 = vpack.c.b16 %v3275, %v3274
    %v3324 = vpack.c.b16 %v3277, %v3276
    %v3325 = vpack.c.b16 %v3279, %v3278
    %v3326 = vpack.c.b16 %v3281, %v3280
    %v3327 = vpack.c.b16 %v3283, %v3282
    %v3328 = vpack.c.b16 %v3285, %v3284
    %v3329 = vpack.c.b16 %v3287, %v3286
    %v3330 = vpack.c.b16 %v3289, %v3288
    %v3331 = vpack.c.b16 %v3291, %v3290
    %v3332 = vpack.c.b16 %v3293, %v3292
    %v3333 = vpack.c.b16 %v3295, %v3294
    %v3334 = vpack.c.b16 %v3297, %v3296
    %v3335 = vpack.c.b16 %v3299, %v3298
    %v3336 = vpack.c.b16 %v3301, %v3300
    %v3337 = vpack.c.b16 %v3303, %v3302
    %v3338 = vpack.c.b16 %v3305, %v3304
    %v3339 = vpack.c.b16 %v3307, %v3306
    %3372 = vmatprep.subr.bf16.mxu0 0
    %3373 = vmatpush1.bf16.msra.mxu0 %v3315
    %3374 = vmatprep.subr.bf16.mxu0 0
    %3375 = vmatpush1.bf16.msra.mxu0 %v3314
    %3376 = vmatprep.subr.bf16.mxu0 0
    %3377 = vmatpush1.bf16.msra.mxu0 %v3313
    %3378 = vmatprep.subr.bf16.mxu0 0
    %3379 = vmatpush1.bf16.msra.mxu0 %v3312
    %3380 = vmatprep.subr.bf16.mxu0 0
    %3381 = vmatpush1.bf16.msra.mxu0 %v3311
    %3382 = vmatprep.subr.bf16.mxu0 0
    %3383 = vmatpush1.bf16.msra.mxu0 %v3310
    %3384 = vmatprep.subr.bf16.mxu0 0
    %3385 = vmatpush1.bf16.msra.mxu0 %v3309
    %3386 = vmatprep.subr.bf16.mxu0 0
    %3387 = vmatpush1.bf16.msra.mxu0 %v3308
    %3388 = vmatprep.subr.bf16.mxu0 0
    %3389 = vmatpush2.bf16.msra.mxu0 %v3323
    %3390 = vmatprep.subr.bf16.mxu0 0
    %3391 = vmatpush2.bf16.msra.mxu0 %v3322
    %3392 = vmatprep.subr.bf16.mxu0 0
    %3393 = vmatpush2.bf16.msra.mxu0 %v3321
    %3394 = vmatprep.subr.bf16.mxu0 0
    %3395 = vmatpush2.bf16.msra.mxu0 %v3320
    %3396 = vmatprep.subr.bf16.mxu0 0
    %3397 = vmatpush2.bf16.msra.mxu0 %v3319
    %3398 = vmatprep.subr.bf16.mxu0 0
    %3399 = vmatpush2.bf16.msra.mxu0 %v3318
    %3400 = vmatprep.subr.bf16.mxu0 0
    %3401 = vmatpush2.bf16.msra.mxu0 %v3317
    %3402 = vmatprep.subr.bf16.mxu0 0
    %3403 = vmatpush2.bf16.msra.mxu0 %v3316
    %3404 = vmatprep.mubr.bf16.mxu0 %v3176
    %3405 = vmatmul.mubr.bf16.gmra.mxu0 %v3175
    %v3406 = vpop.f32.mrf.mxu0
    %v3407 = vadd.f32 %v3179, %v3406
    %v3408 = vpop.f32.mrf.mxu0
    %v3409 = vpop.f32.mrf.mxu0
    %v3410 = vpop.f32.mrf.mxu0
    %3411 = vdwg.mxu0
    %3412 = vmatprep.subr.bf16.mxu0 0
    %3413 = vmatpush1.bf16.msra.mxu0 %v3331
    %3414 = vmatprep.subr.bf16.mxu0 0
    %3415 = vmatpush1.bf16.msra.mxu0 %v3330
    %3416 = vmatprep.subr.bf16.mxu0 0
    %3417 = vmatpush1.bf16.msra.mxu0 %v3329
    %3418 = vmatprep.subr.bf16.mxu0 0
    %3419 = vmatpush1.bf16.msra.mxu0 %v3328
    %3420 = vmatprep.subr.bf16.mxu0 0
    %3421 = vmatpush1.bf16.msra.mxu0 %v3327
    %3422 = vmatprep.subr.bf16.mxu0 0
    %3423 = vmatpush1.bf16.msra.mxu0 %v3326
    %3424 = vmatprep.subr.bf16.mxu0 0
    %3425 = vmatpush1.bf16.msra.mxu0 %v3325
    %3426 = vmatprep.subr.bf16.mxu0 0
    %3427 = vmatpush1.bf16.msra.mxu0 %v3324
    %3428 = vmatprep.subr.bf16.mxu0 0
    %3429 = vmatpush2.bf16.msra.mxu0 %v3339
    %3430 = vmatprep.subr.bf16.mxu0 0
    %3431 = vmatpush2.bf16.msra.mxu0 %v3338
    %3432 = vmatprep.subr.bf16.mxu0 0
    %3433 = vmatpush2.bf16.msra.mxu0 %v3337
    %3434 = vmatprep.subr.bf16.mxu0 0
    %3435 = vmatpush2.bf16.msra.mxu0 %v3336
    %3436 = vmatprep.subr.bf16.mxu0 0
    %3437 = vmatpush2.bf16.msra.mxu0 %v3335
    %3438 = vmatprep.subr.bf16.mxu0 0
    %3439 = vmatpush2.bf16.msra.mxu0 %v3334
    %3440 = vmatprep.subr.bf16.mxu0 0
    %3441 = vmatpush2.bf16.msra.mxu0 %v3333
    %3442 = vmatprep.subr.bf16.mxu0 0
    %3443 = vmatpush2.bf16.msra.mxu0 %v3332
    %3444 = vmatprep.mubr.bf16.mxu0 %v3178
    %3445 = vmatmul.mubr.bf16.gmra.mxu0 %v3177
    %v3446 = vpop.f32.mrf.mxu0
    %v3447 = vadd.f32 %v3407, %v3446
    %v3448 = vpop.f32.mrf.mxu0
    %v3449 = vpop.f32.mrf.mxu0
    %v3450 = vpop.f32.mrf.mxu0
    %3451 = vdwg.mxu0
    %v3452 = vtanh.pop %v3447
    %3453 = vst [vmem:[#allocation9] sm:$0xff] %v3452
    // Predicated region
    $region26: #{tpu_custom_call.1} parent=1 // pred_check
      _
    $region27: #{tpu_custom_call.1} parent=1 // pred_check_branch
      %3455 = sbr.rel (0) target = $region29
    $region28: #{tpu_custom_call.1} parent=1 // pred_region
      %s3457 = ssub.s32 128, 128
      %3458 = vsyncadd [#allocation6], %s3457
      %s3460 = sshll.u32 [#allocation9], 4
      %s3461 = int_to_ptr.vmem [resolvable:$true] %s3460
      %3463 = dma.vmem_to_hbm [thread:$0]  %s3461, 128, %s5, [#allocation6]
    $region29: #{tpu_custom_call.1} parent=1 // pred_fallthru
      _
    // Predicated region
    $region30: #{tpu_custom_call.1} parent=1 // pred_check
      _
    $region31: #{tpu_custom_call.1} parent=1 // pred_check_branch
      %3465 = sbr.rel (0) target = $region33
    $region32: #{tpu_custom_call.1} parent=1 // pred_region
      %s3467 = ssub.s32 128, 128
      %3468 = vsyncadd [#allocation11], %s3467
      %s3470 = sshll.u32 [#allocation10], 4
      %s3471 = int_to_ptr.vmem [resolvable:$true] %s3470
      %3473 = dma.vmem_to_hbm [thread:$0]  %s3471, 128, %s6, [#allocation11]
    $region33: #{tpu_custom_call.1} parent=1 // pred_fallthru
      _
    // Predicated region
    $region34: #{tpu_custom_call.1} parent=1 // pred_check
      _
    $region35: #{tpu_custom_call.1} parent=1 // pred_check_branch
      %3475 = sbr.rel (0) target = $region37
    $region36: #{tpu_custom_call.1} parent=1 // pred_region
      %3476 = dma.done [#allocation6], 128
    $region37: #{tpu_custom_call.1} parent=1 // pred_fallthru
      _
    // Predicated region
    $region38: #{tpu_custom_call.1} parent=1 // pred_check
      _
    $region39: #{tpu_custom_call.1} parent=1 // pred_check_branch
      %3478 = sbr.rel (0) target = $region41
    $region40: #{tpu_custom_call.1} parent=1 // pred_region
      %3479 = dma.done [#allocation11], 128
    $region41: #{tpu_custom_call.1} parent=1 // pred_fallthru
      _
    %3480 = vsyncpa [#allocation5], 1
    %3481 = vsyncpa [#allocation8], 1
    %3482 = vsyncpa [#allocation6], 1
    %3483 = vsyncpa [#allocation11], 1
  %3484 = vsyncmov [#allocation3]
  %s3485 = vpop.sfrf %3484
  %p3486 = scmp.eq.s32.totalorder %s3485, 0
  %p3487 = pneg %p3486
  %3489 = shalt.err (%p3487)
  %s3490 = scalar_lea.sflag [#allocation3], 1
  %3491 = vsyncmov %s3490
  %s3492 = vpop.sfrf %3491
  %p3493 = scmp.eq.s32.totalorder %s3492, 0
  %p3494 = pneg %p3493
  %3496 = shalt.err (%p3494)

</llo_original>
